<compile_context>
chip_gen: v7x
topology: tpu7x:2x2x1
jax: 0.10.0
libtpu: 0.0.40
codegen_flags: <defaults>
</compile_context>

<pallas_src>
import numpy as np
import jax
import jax.numpy as jnp
from jax.experimental import pallas as pl
from jax.experimental.pallas import tpu as pltpu

_LN_EPS = 1e-5           # torch.nn.LayerNorm default
_NEG = -1e30             # mask value folded into the bias (representable in bf16)
_EXACT_DIVIDE = False    # flip to True for bit-tighter parity with the PyTorch module


def _layer_norm(x, gamma, beta):
    mu = jnp.mean(x, axis=-1, keepdims=True)
    var = jnp.mean((x - mu) ** 2, axis=-1, keepdims=True)
    return (x - mu) * jax.lax.rsqrt(var + _LN_EPS) * gamma + beta


def _recip(x):
    if _EXACT_DIVIDE:
        return 1.0 / x
    return pl.reciprocal(x, approx=True)


def _erf(x):
    # Abramowitz & Stegun 7.1.26 rational approximation (|err| < 1.5e-7).
    # Needs only exp + reciprocal, both of which land on the EUP.
    a1, a2, a3, a4, a5 = 0.254829592, -0.284496736, 1.421413741, -1.453152027, 1.061405429
    p = 0.3275911
    sgn = jnp.where(x >= 0.0, 1.0, -1.0)
    ax = jnp.abs(x)
    t = _recip(1.0 + p * ax)
    poly = ((((a5 * t + a4) * t + a3) * t + a2) * t + a1) * t
    return sgn * (1.0 - poly * jnp.exp(-ax * ax))


def _gelu_exact(x):
    # PyTorch nn.GELU() default (erf formulation).
    return 0.5 * x * (1.0 + _erf(x * 0.7071067811865476))


def _make_kernel(n_heads, n_hidden):
    """Ref order: x(blk), k(blk), bias(blk), q_all, v_all, head_mask,
       ln2_g, ln2_b, w_res, b_res, w_m1, b_m1, [hidden_w, hidden_b]*n_hidden,
       w_m2, b_m2, out(blk)."""

    def kernel(*refs):
        (x_ref, k_ref, bias_ref, q_ref, v_ref, hmask_ref,
         g2_ref, b2_ref, wres_ref, bres_ref, wm1_ref, bm1_ref) = refs[:12]
        hidden_refs = refs[12:12 + 2 * n_hidden]
        wm2_ref, bm2_ref, out_ref = refs[12 + 2 * n_hidden:]

        tile, d = x_ref.shape
        xb = x_ref[...]                                  # [T, D]  f32 (residual input)
        kb = k_ref[...]                                  # [T, D]  bf16
        q_all = q_ref[...]                               # [N, D]  bf16 (pre-scaled)
        v_all = v_ref[...]                               # [N, D]  bf16

        # Per-head graph attention with full-width masked bf16 matmuls
        # (statically unrolled head loop; no lane slicing / relayouts).
        agg = jnp.zeros((tile, d), jnp.float32)
        for h in range(n_heads):
            mh = hmask_ref[h]                            # [1, D] bf16 lane mask of head h
            # scores[dst, src] = <Q[src, h], K[dst, h]>   (bf16 MXU, f32 accumulate)
            s = jax.lax.dot_general(kb * mh, q_all, (((1,), (1,)), ((), ())),
                                    preferred_element_type=jnp.float32)      # [T, N] f32
            a = s + bias_ref[h].astype(jnp.float32)      # bias already -1e30 at non-edges
            m = jnp.max(a, axis=-1, keepdims=True)
            p = jnp.exp(a - m)                           # masked entries underflow to 0
            denom = jnp.sum(p, axis=-1, keepdims=True)
            # zero-in-degree / padded-row guard: fully masked rows must give exactly 0.
            valid = (m > jnp.float32(_NEG * 0.5)).astype(jnp.float32)
            sa = p * (_recip(denom) * valid)
            agg = agg + jnp.dot(sa.astype(jnp.bfloat16), v_all,
                                preferred_element_type=jnp.float32) * mh.astype(jnp.float32)

        # node_out_layer (Residual): x = x + in_proj(agg); y = LN(x); x = x + MLP(y)
        x1 = xb + jnp.dot(agg, wres_ref[...],
                          preferred_element_type=jnp.float32) + bres_ref[...]
        y = _layer_norm(x1, g2_ref[...], b2_ref[...])
        y = _gelu_exact(jnp.dot(y, wm1_ref[...],
                                preferred_element_type=jnp.float32) + bm1_ref[...])
        for i in range(n_hidden):
            w = hidden_refs[2 * i][...]
            b = hidden_refs[2 * i + 1][...]
            y = _gelu_exact(jnp.dot(y, w, preferred_element_type=jnp.float32) + b)
        y = jnp.dot(y, wm2_ref[...], preferred_element_type=jnp.float32) + bm2_ref[...]
        out_ref[...] = (x1 + y).astype(out_ref.dtype)

    return kernel


def _resident(arr):
    """Full-array block with a constant index map -> stays VMEM resident."""
    zeros = (0,) * arr.ndim
    return pl.BlockSpec(arr.shape, lambda i, z=zeros: z)


def triplet_transformer(triplet_h, adj_mask, attn_bias, params, *, n_heads, tile=128):
    # Note: on v5e/v6e (128 MiB VMEM) tile=256..512 amortizes per-step overhead better;
    # tile=128 is the safe default for v7x's 64 MiB/TC.
    n, d = triplet_h.shape
    assert d % n_heads == 0
    dh = d // n_heads
    scale = float(d) ** (-0.5)

    # Pad N up to a multiple of the dst tile; padded rows are fully masked via the
    # bias so the zero-in-degree guard zeroes their attention, and they are sliced
    # off the output (keeps the tiled/pipelined "parallel" path for any N).
    n_pad = (-n) % tile
    n_tot = n + n_pad
    n_blocks = n_tot // tile

    x = triplet_h.astype(jnp.float32)
    if n_pad:
        x = jnp.pad(x, ((0, n_pad), (0, 0)))

    # Fold the adjacency mask into the bias once (kills the mask HBM stream and the
    # in-kernel compare/select + multiply), then cast the dominant HBM stream to bf16.
    bias = jnp.where(adj_mask[None, :, :] > 0.0, attn_bias, jnp.float32(_NEG))
    if n_pad:
        bias = jnp.pad(bias, ((0, 0), (0, n_pad), (0, n_pad)), constant_values=_NEG)
    bias = bias.astype(jnp.bfloat16)

    # Hoisted LN1 + fused QKV projection (O(N*D^2), cheap as plain XLA matmuls).
    # Q is pre-scaled; all MXU operands fed to the kernel are bf16 (f32 accumulate).
    xn = _layer_norm(x, params["ln1_g"], params["ln1_b"])
    qkv = xn @ params["w_qkv"] + params["b_qkv"]
    q_all = (qkv[:, :d] * scale).astype(jnp.bfloat16)
    k_all = qkv[:, d:2 * d].astype(jnp.bfloat16)
    v_all = qkv[:, 2 * d:].astype(jnp.bfloat16)

    # Per-head lane masks [H, 1, D] for the masked full-width head matmuls.
    lane = np.arange(d)
    head_mask = np.stack(
        [((lane >= h * dh) & (lane < (h + 1) * dh)).astype(np.float32)
         for h in range(n_heads)])[:, None, :]
    head_mask = jnp.asarray(head_mask, dtype=jnp.bfloat16)

    hidden = params["mlp_hidden"]
    n_hidden = len(hidden)

    args = [x, k_all, bias, q_all, v_all, head_mask,
            params["ln2_g"], params["ln2_b"],
            params["w_res"], params["b_res"],
            params["w_m1"], params["b_m1"]]
    for w, b in hidden:
        args += [w, b]
    args += [params["w_m2"], params["b_m2"]]

    in_specs = ([pl.BlockSpec((tile, d), lambda i: (i, 0)),              # x block (residual)
                 pl.BlockSpec((tile, d), lambda i: (i, 0)),              # K block
                 pl.BlockSpec((n_heads, tile, n_tot), lambda i: (0, i, 0))]  # bf16 bias stream
                + [_resident(a) for a in args[3:]])
    out_specs = pl.BlockSpec((tile, d), lambda i: (i, 0))

    out = pl.pallas_call(
        _make_kernel(n_heads, n_hidden),
        out_shape=jax.ShapeDtypeStruct((n_tot, d), triplet_h.dtype),
        grid_spec=pltpu.PrefetchScalarGridSpec(
            num_scalar_prefetch=0,
            grid=(n_blocks,),
            in_specs=in_specs,
            out_specs=out_specs),
        compiler_params=pltpu.CompilerParams(
            dimension_semantics=("parallel",),          # dst blocks independent -> megacore on v7x
            vmem_limit_bytes=40 * 1024 * 1024),         # fits v7x's 64 MiB/TC with headroom
    )(*args)
    return out[:n] if n_pad else out


def reference(triplet_h, adj_mask, attn_bias, params, *, n_heads):
    """Pure-JAX mirror of the PyTorch/DGL forward (dropout p=0 -> identity)."""
    x = triplet_h
    n, d = x.shape
    dh = d // n_heads
    scale = float(d) ** (-0.5)

    def ln(z, g, b):
        mu = z.mean(-1, keepdims=True)
        var = ((z - mu) ** 2).mean(-1, keepdims=True)
        return (z - mu) / jnp.sqrt(var + _LN_EPS) * g + b

    xn = ln(x, params["ln1_g"], params["ln1_b"])
    qkv = (xn @ params["w_qkv"] + params["b_qkv"]).reshape(n, 3, n_heads, dh)
    qkv = qkv.transpose(1, 0, 2, 3)
    q, k, v = qkv[0] * scale, qkv[1], qkv[2]
    scores = jnp.einsum("shd,thd->hts", q, k) + attn_bias      # [H, dst, src]
    scores = jnp.where(adj_mask[None] > 0.0, scores, _NEG)
    sa = jax.nn.softmax(scores, axis=-1) * adj_mask[None]
    agg = jnp.einsum("hts,shd->thd", sa, v).reshape(n, d)
    x1 = x + agg @ params["w_res"] + params["b_res"]
    y = ln(x1, params["ln2_g"], params["ln2_b"])
    y = jax.nn.gelu(y @ params["w_m1"] + params["b_m1"], approximate=False)
    for w, b in params["mlp_hidden"]:
        y = jax.nn.gelu(y @ w + b, approximate=False)
    y = y @ params["w_m2"] + params["b_m2"]
    return x1 + y


if __name__ == "__main__":
    # Module hyper-params: d_feats=32, n_heads=4, n_ffn_dense_layers=3, gelu,
    # feat_drop=attn_drop=0.  N=256 nodes -> grid of 2 dst blocks of 128
    # (even block count -> both v7x TensorCores busy).
    N, D, H = 256, 32, 4
    n_ffn_dense_layers = 3
    d_hidden = 4 * D

    key = jax.random.PRNGKey(0)
    ks = jax.random.split(key, 12)

    triplet_h = jax.random.normal(ks[0], (N, D), jnp.float32)
    # Random graph (edge src->dst iff adj[dst, src]=1) plus self loops; node 0
    # is made zero-in-degree to exercise the empty-row guard.
    adj = (jax.random.uniform(ks[1], (N, N)) < 0.05).astype(jnp.float32)
    adj = jnp.maximum(adj, jnp.eye(N, dtype=jnp.float32))
    adj = adj.at[0, :].set(0.0)
    dist_attn = 0.1 * jax.random.normal(ks[2], (H, N, N), jnp.float32)
    path_attn = 0.1 * jax.random.normal(ks[3], (H, N, N), jnp.float32)
    attn_bias = dist_attn + path_attn

    def lin(k, din, dout):
        k1, k2 = jax.random.split(k)
        bound = 1.0 / np.sqrt(din)
        w = jax.random.uniform(k1, (din, dout), jnp.float32, -bound, bound)
        b = jax.random.uniform(k2, (1, dout), jnp.float32, -bound, bound)
        return w, b

    w_qkv, b_qkv = lin(ks[4], D, 3 * D)
    w_res, b_res = lin(ks[5], D, D)
    w_m1, b_m1 = lin(ks[6], D, d_hidden)
    w_m2, b_m2 = lin(ks[7], d_hidden, D)
    mlp_hidden = [lin(ks[8 + i], d_hidden, d_hidden)
                  for i in range(n_ffn_dense_layers - 2)]

    params = dict(
        ln1_g=jnp.ones((1, D), jnp.float32), ln1_b=jnp.zeros((1, D), jnp.float32),
        ln2_g=jnp.ones((1, D), jnp.float32), ln2_b=jnp.zeros((1, D), jnp.float32),
        w_qkv=w_qkv, b_qkv=b_qkv, w_res=w_res, b_res=b_res,
        w_m1=w_m1, b_m1=b_m1, w_m2=w_m2, b_m2=b_m2, mlp_hidden=mlp_hidden)

    out = triplet_transformer(triplet_h, adj, attn_bias, params, n_heads=H)
    out = jax.block_until_ready(out)

    ref = reference(triplet_h, adj, attn_bias, params, n_heads=H)
    # Tolerance covers the bf16 bias / Q / K / V / prob casts and approx reciprocal.
    np.testing.assert_allclose(np.asarray(out), np.asarray(ref), rtol=4e-3, atol=4e-3)
    print("KERNEL_OK")
</pallas_src>

<mosaic_0001>
module attributes {stable_mosaic.version = 11 : i64} {
  func.func @kernel(%arg0: i32, %arg1: memref<128x32xf32, #tpu.memory_space<vmem>>, %arg2: memref<128x32xbf16, #tpu.memory_space<vmem>>, %arg3: memref<4x128x256xbf16, #tpu.memory_space<vmem>>, %arg4: memref<256x32xbf16, #tpu.memory_space<vmem>>, %arg5: memref<256x32xbf16, #tpu.memory_space<vmem>>, %arg6: memref<4x1x32xbf16, #tpu.memory_space<vmem>>, %arg7: memref<1x32xf32, #tpu.memory_space<vmem>>, %arg8: memref<1x32xf32, #tpu.memory_space<vmem>>, %arg9: memref<32x32xf32, #tpu.memory_space<vmem>>, %arg10: memref<1x32xf32, #tpu.memory_space<vmem>>, %arg11: memref<32x128xf32, #tpu.memory_space<vmem>>, %arg12: memref<1x128xf32, #tpu.memory_space<vmem>>, %arg13: memref<128x128xf32, #tpu.memory_space<vmem>>, %arg14: memref<1x128xf32, #tpu.memory_space<vmem>>, %arg15: memref<128x32xf32, #tpu.memory_space<vmem>>, %arg16: memref<1x32xf32, #tpu.memory_space<vmem>>, %arg17: memref<128x32xf32, #tpu.memory_space<vmem>>) attributes {dimension_semantics = [#tpu.dimension_semantics<parallel>], iteration_bounds = array<i64: 2>, scalar_prefetch = 0 : i64, scratch_operands = 0 : i64, tpu.core_type = #tpu.core_type<tc>, window_params = [{transform_indices = @transform_0, window_bounds = array<i64: 128, 32>}, {transform_indices = @transform_1, window_bounds = array<i64: 128, 32>}, {transform_indices = @transform_2, window_bounds = array<i64: 4, 128, 256>}, {pipeline_mode = #tpu.pipeline_mode<synchronous>, transform_indices = @transform_3, window_bounds = array<i64: 256, 32>}, {pipeline_mode = #tpu.pipeline_mode<synchronous>, transform_indices = @transform_4, window_bounds = array<i64: 256, 32>}, {pipeline_mode = #tpu.pipeline_mode<synchronous>, transform_indices = @transform_5, window_bounds = array<i64: 4, 1, 32>}, {pipeline_mode = #tpu.pipeline_mode<synchronous>, transform_indices = @transform_6, window_bounds = array<i64: 1, 32>}, {pipeline_mode = #tpu.pipeline_mode<synchronous>, transform_indices = @transform_7, window_bounds = array<i64: 1, 32>}, {pipeline_mode = #tpu.pipeline_mode<synchronous>, transform_indices = @transform_8, window_bounds = array<i64: 32, 32>}, {pipeline_mode = #tpu.pipeline_mode<synchronous>, transform_indices = @transform_9, window_bounds = array<i64: 1, 32>}, {pipeline_mode = #tpu.pipeline_mode<synchronous>, transform_indices = @transform_10, window_bounds = array<i64: 32, 128>}, {pipeline_mode = #tpu.pipeline_mode<synchronous>, transform_indices = @transform_11, window_bounds = array<i64: 1, 128>}, {pipeline_mode = #tpu.pipeline_mode<synchronous>, transform_indices = @transform_12, window_bounds = array<i64: 128, 128>}, {pipeline_mode = #tpu.pipeline_mode<synchronous>, transform_indices = @transform_13, window_bounds = array<i64: 1, 128>}, {pipeline_mode = #tpu.pipeline_mode<synchronous>, transform_indices = @transform_14, window_bounds = array<i64: 128, 32>}, {pipeline_mode = #tpu.pipeline_mode<synchronous>, transform_indices = @transform_15, window_bounds = array<i64: 1, 32>}, {transform_indices = @transform_16, window_bounds = array<i64: 128, 32>}]} {
    %c0 = arith.constant 0 : index
    %c0_0 = arith.constant 0 : index
    %0 = vector.load %arg1[%c0, %c0_0] : memref<128x32xf32, #tpu.memory_space<vmem>>, vector<128x32xf32>
    %c0_1 = arith.constant 0 : index
    %c0_2 = arith.constant 0 : index
    %1 = vector.load %arg2[%c0_1, %c0_2] : memref<128x32xbf16, #tpu.memory_space<vmem>>, vector<128x32xbf16>
    %c0_3 = arith.constant 0 : index
    %c0_4 = arith.constant 0 : index
    %2 = vector.load %arg4[%c0_3, %c0_4] : memref<256x32xbf16, #tpu.memory_space<vmem>>, vector<256x32xbf16>
    %c0_5 = arith.constant 0 : index
    %c0_6 = arith.constant 0 : index
    %3 = vector.load %arg5[%c0_5, %c0_6] : memref<256x32xbf16, #tpu.memory_space<vmem>>, vector<256x32xbf16>
    %cst = arith.constant 0.000000e+00 : f32
    %4 = vector.broadcast %cst : f32 to vector<128x32xf32>
    %c0_7 = arith.constant 0 : index
    %c0_8 = arith.constant 0 : index
    %c0_9 = arith.constant 0 : index
    %5 = vector.load %arg6[%c0_7, %c0_8, %c0_9] : memref<4x1x32xbf16, #tpu.memory_space<vmem>>, vector<1x1x32xbf16>
    %6 = vector.shape_cast %5 : vector<1x1x32xbf16> to vector<1x32xbf16>
    %7 = vector.broadcast %6 : vector<1x32xbf16> to vector<128x32xbf16>
    %8 = arith.mulf %1, %7 : vector<128x32xbf16>
    %cst_10 = arith.constant dense<0.000000e+00> : vector<128x256xf32>
    %9 = tpu.matmul %8, %2, %cst_10 {dimension_numbers = #tpu.dot_dimension_numbers<[1], [1], [0], [0], [0, 0, 1, 0], [], []>} : vector<128x32xbf16>, vector<256x32xbf16>, vector<128x256xf32> -> vector<128x256xf32>
    %c0_11 = arith.constant 0 : index
    %c0_12 = arith.constant 0 : index
    %c0_13 = arith.constant 0 : index
    %10 = vector.load %arg3[%c0_11, %c0_12, %c0_13] : memref<4x128x256xbf16, #tpu.memory_space<vmem>>, vector<1x128x256xbf16>
    %11 = vector.shape_cast %10 : vector<1x128x256xbf16> to vector<128x256xbf16>
    %12 = arith.extf %11 : vector<128x256xbf16> to vector<128x256xf32>
    %13 = arith.addf %9, %12 : vector<128x256xf32>
    %cst_14 = arith.constant dense<0xFF800000> : vector<128xf32>
    %14 = vector.multi_reduction <maximumf>, %13, %cst_14 [1] : vector<128x256xf32> to vector<128xf32>
    %15 = vector.shape_cast %14 : vector<128xf32> to vector<128x1xf32>
    %16 = vector.broadcast %15 : vector<128x1xf32> to vector<128x256xf32>
    %17 = arith.subf %13, %16 : vector<128x256xf32>
    %18 = math.exp %17 : vector<128x256xf32>
    %cst_15 = arith.constant dense<0.000000e+00> : vector<128xf32>
    %19 = vector.multi_reduction <add>, %18, %cst_15 [1] : vector<128x256xf32> to vector<128xf32>
    %20 = vector.shape_cast %19 : vector<128xf32> to vector<128x1xf32>
    %cst_16 = arith.constant -5.000000e+29 : f32
    %21 = vector.broadcast %cst_16 : f32 to vector<128x1xf32>
    %22 = arith.cmpf ogt, %15, %21 : vector<128x1xf32>
    %23 = arith.extui %22 : vector<128x1xi1> to vector<128x1xi32>
    %24 = arith.sitofp %23 : vector<128x1xi32> to vector<128x1xf32>
    %25 = tpu.reciprocal %20 {approx = true} : vector<128x1xf32> -> vector<128x1xf32>
    %26 = arith.mulf %25, %24 : vector<128x1xf32>
    %27 = vector.broadcast %26 : vector<128x1xf32> to vector<128x256xf32>
    %28 = arith.mulf %18, %27 : vector<128x256xf32>
    %29 = arith.truncf %28 : vector<128x256xf32> to vector<128x256xbf16>
    %cst_17 = arith.constant dense<0.000000e+00> : vector<128x32xf32>
    %30 = tpu.matmul %29, %3, %cst_17 {dimension_numbers = #tpu.dot_dimension_numbers<[1], [0], [0], [1], [0, 0, 1, 1], [], []>} : vector<128x256xbf16>, vector<256x32xbf16>, vector<128x32xf32> -> vector<128x32xf32>
    %31 = arith.extf %6 : vector<1x32xbf16> to vector<1x32xf32>
    %32 = vector.broadcast %31 : vector<1x32xf32> to vector<128x32xf32>
    %33 = arith.mulf %30, %32 : vector<128x32xf32>
    %34 = arith.addf %4, %33 : vector<128x32xf32>
    %c1 = arith.constant 1 : index
    %c0_18 = arith.constant 0 : index
    %c0_19 = arith.constant 0 : index
    %35 = vector.load %arg6[%c1, %c0_18, %c0_19] : memref<4x1x32xbf16, #tpu.memory_space<vmem>>, vector<1x1x32xbf16>
    %36 = vector.shape_cast %35 : vector<1x1x32xbf16> to vector<1x32xbf16>
    %37 = vector.broadcast %36 : vector<1x32xbf16> to vector<128x32xbf16>
    %38 = arith.mulf %1, %37 : vector<128x32xbf16>
    %cst_20 = arith.constant dense<0.000000e+00> : vector<128x256xf32>
    %39 = tpu.matmul %38, %2, %cst_20 {dimension_numbers = #tpu.dot_dimension_numbers<[1], [1], [0], [0], [0, 0, 1, 0], [], []>} : vector<128x32xbf16>, vector<256x32xbf16>, vector<128x256xf32> -> vector<128x256xf32>
    %c1_21 = arith.constant 1 : index
    %c0_22 = arith.constant 0 : index
    %c0_23 = arith.constant 0 : index
    %40 = vector.load %arg3[%c1_21, %c0_22, %c0_23] : memref<4x128x256xbf16, #tpu.memory_space<vmem>>, vector<1x128x256xbf16>
    %41 = vector.shape_cast %40 : vector<1x128x256xbf16> to vector<128x256xbf16>
    %42 = arith.extf %41 : vector<128x256xbf16> to vector<128x256xf32>
    %43 = arith.addf %39, %42 : vector<128x256xf32>
    %cst_24 = arith.constant dense<0xFF800000> : vector<128xf32>
    %44 = vector.multi_reduction <maximumf>, %43, %cst_24 [1] : vector<128x256xf32> to vector<128xf32>
    %45 = vector.shape_cast %44 : vector<128xf32> to vector<128x1xf32>
    %46 = vector.broadcast %45 : vector<128x1xf32> to vector<128x256xf32>
    %47 = arith.subf %43, %46 : vector<128x256xf32>
    %48 = math.exp %47 : vector<128x256xf32>
    %cst_25 = arith.constant dense<0.000000e+00> : vector<128xf32>
    %49 = vector.multi_reduction <add>, %48, %cst_25 [1] : vector<128x256xf32> to vector<128xf32>
    %50 = vector.shape_cast %49 : vector<128xf32> to vector<128x1xf32>
    %cst_26 = arith.constant -5.000000e+29 : f32
    %51 = vector.broadcast %cst_26 : f32 to vector<128x1xf32>
    %52 = arith.cmpf ogt, %45, %51 : vector<128x1xf32>
    %53 = arith.extui %52 : vector<128x1xi1> to vector<128x1xi32>
    %54 = arith.sitofp %53 : vector<128x1xi32> to vector<128x1xf32>
    %55 = tpu.reciprocal %50 {approx = true} : vector<128x1xf32> -> vector<128x1xf32>
    %56 = arith.mulf %55, %54 : vector<128x1xf32>
    %57 = vector.broadcast %56 : vector<128x1xf32> to vector<128x256xf32>
    %58 = arith.mulf %48, %57 : vector<128x256xf32>
    %59 = arith.truncf %58 : vector<128x256xf32> to vector<128x256xbf16>
    %cst_27 = arith.constant dense<0.000000e+00> : vector<128x32xf32>
    %60 = tpu.matmul %59, %3, %cst_27 {dimension_numbers = #tpu.dot_dimension_numbers<[1], [0], [0], [1], [0, 0, 1, 1], [], []>} : vector<128x256xbf16>, vector<256x32xbf16>, vector<128x32xf32> -> vector<128x32xf32>
    %61 = arith.extf %36 : vector<1x32xbf16> to vector<1x32xf32>
    %62 = vector.broadcast %61 : vector<1x32xf32> to vector<128x32xf32>
    %63 = arith.mulf %60, %62 : vector<128x32xf32>
    %64 = arith.addf %34, %63 : vector<128x32xf32>
    %c2 = arith.constant 2 : index
    %c0_28 = arith.constant 0 : index
    %c0_29 = arith.constant 0 : index
    %65 = vector.load %arg6[%c2, %c0_28, %c0_29] : memref<4x1x32xbf16, #tpu.memory_space<vmem>>, vector<1x1x32xbf16>
    %66 = vector.shape_cast %65 : vector<1x1x32xbf16> to vector<1x32xbf16>
    %67 = vector.broadcast %66 : vector<1x32xbf16> to vector<128x32xbf16>
    %68 = arith.mulf %1, %67 : vector<128x32xbf16>
    %cst_30 = arith.constant dense<0.000000e+00> : vector<128x256xf32>
    %69 = tpu.matmul %68, %2, %cst_30 {dimension_numbers = #tpu.dot_dimension_numbers<[1], [1], [0], [0], [0, 0, 1, 0], [], []>} : vector<128x32xbf16>, vector<256x32xbf16>, vector<128x256xf32> -> vector<128x256xf32>
    %c2_31 = arith.constant 2 : index
    %c0_32 = arith.constant 0 : index
    %c0_33 = arith.constant 0 : index
    %70 = vector.load %arg3[%c2_31, %c0_32, %c0_33] : memref<4x128x256xbf16, #tpu.memory_space<vmem>>, vector<1x128x256xbf16>
    %71 = vector.shape_cast %70 : vector<1x128x256xbf16> to vector<128x256xbf16>
    %72 = arith.extf %71 : vector<128x256xbf16> to vector<128x256xf32>
    %73 = arith.addf %69, %72 : vector<128x256xf32>
    %cst_34 = arith.constant dense<0xFF800000> : vector<128xf32>
    %74 = vector.multi_reduction <maximumf>, %73, %cst_34 [1] : vector<128x256xf32> to vector<128xf32>
    %75 = vector.shape_cast %74 : vector<128xf32> to vector<128x1xf32>
    %76 = vector.broadcast %75 : vector<128x1xf32> to vector<128x256xf32>
    %77 = arith.subf %73, %76 : vector<128x256xf32>
    %78 = math.exp %77 : vector<128x256xf32>
    %cst_35 = arith.constant dense<0.000000e+00> : vector<128xf32>
    %79 = vector.multi_reduction <add>, %78, %cst_35 [1] : vector<128x256xf32> to vector<128xf32>
    %80 = vector.shape_cast %79 : vector<128xf32> to vector<128x1xf32>
    %cst_36 = arith.constant -5.000000e+29 : f32
    %81 = vector.broadcast %cst_36 : f32 to vector<128x1xf32>
    %82 = arith.cmpf ogt, %75, %81 : vector<128x1xf32>
    %83 = arith.extui %82 : vector<128x1xi1> to vector<128x1xi32>
    %84 = arith.sitofp %83 : vector<128x1xi32> to vector<128x1xf32>
    %85 = tpu.reciprocal %80 {approx = true} : vector<128x1xf32> -> vector<128x1xf32>
    %86 = arith.mulf %85, %84 : vector<128x1xf32>
    %87 = vector.broadcast %86 : vector<128x1xf32> to vector<128x256xf32>
    %88 = arith.mulf %78, %87 : vector<128x256xf32>
    %89 = arith.truncf %88 : vector<128x256xf32> to vector<128x256xbf16>
    %cst_37 = arith.constant dense<0.000000e+00> : vector<128x32xf32>
    %90 = tpu.matmul %89, %3, %cst_37 {dimension_numbers = #tpu.dot_dimension_numbers<[1], [0], [0], [1], [0, 0, 1, 1], [], []>} : vector<128x256xbf16>, vector<256x32xbf16>, vector<128x32xf32> -> vector<128x32xf32>
    %91 = arith.extf %66 : vector<1x32xbf16> to vector<1x32xf32>
    %92 = vector.broadcast %91 : vector<1x32xf32> to vector<128x32xf32>
    %93 = arith.mulf %90, %92 : vector<128x32xf32>
    %94 = arith.addf %64, %93 : vector<128x32xf32>
    %c3 = arith.constant 3 : index
    %c0_38 = arith.constant 0 : index
    %c0_39 = arith.constant 0 : index
    %95 = vector.load %arg6[%c3, %c0_38, %c0_39] : memref<4x1x32xbf16, #tpu.memory_space<vmem>>, vector<1x1x32xbf16>
    %96 = vector.shape_cast %95 : vector<1x1x32xbf16> to vector<1x32xbf16>
    %97 = vector.broadcast %96 : vector<1x32xbf16> to vector<128x32xbf16>
    %98 = arith.mulf %1, %97 : vector<128x32xbf16>
    %cst_40 = arith.constant dense<0.000000e+00> : vector<128x256xf32>
    %99 = tpu.matmul %98, %2, %cst_40 {dimension_numbers = #tpu.dot_dimension_numbers<[1], [1], [0], [0], [0, 0, 1, 0], [], []>} : vector<128x32xbf16>, vector<256x32xbf16>, vector<128x256xf32> -> vector<128x256xf32>
    %c3_41 = arith.constant 3 : index
    %c0_42 = arith.constant 0 : index
    %c0_43 = arith.constant 0 : index
    %100 = vector.load %arg3[%c3_41, %c0_42, %c0_43] : memref<4x128x256xbf16, #tpu.memory_space<vmem>>, vector<1x128x256xbf16>
    %101 = vector.shape_cast %100 : vector<1x128x256xbf16> to vector<128x256xbf16>
    %102 = arith.extf %101 : vector<128x256xbf16> to vector<128x256xf32>
    %103 = arith.addf %99, %102 : vector<128x256xf32>
    %cst_44 = arith.constant dense<0xFF800000> : vector<128xf32>
    %104 = vector.multi_reduction <maximumf>, %103, %cst_44 [1] : vector<128x256xf32> to vector<128xf32>
    %105 = vector.shape_cast %104 : vector<128xf32> to vector<128x1xf32>
    %106 = vector.broadcast %105 : vector<128x1xf32> to vector<128x256xf32>
    %107 = arith.subf %103, %106 : vector<128x256xf32>
    %108 = math.exp %107 : vector<128x256xf32>
    %cst_45 = arith.constant dense<0.000000e+00> : vector<128xf32>
    %109 = vector.multi_reduction <add>, %108, %cst_45 [1] : vector<128x256xf32> to vector<128xf32>
    %110 = vector.shape_cast %109 : vector<128xf32> to vector<128x1xf32>
    %cst_46 = arith.constant -5.000000e+29 : f32
    %111 = vector.broadcast %cst_46 : f32 to vector<128x1xf32>
    %112 = arith.cmpf ogt, %105, %111 : vector<128x1xf32>
    %113 = arith.extui %112 : vector<128x1xi1> to vector<128x1xi32>
    %114 = arith.sitofp %113 : vector<128x1xi32> to vector<128x1xf32>
    %115 = tpu.reciprocal %110 {approx = true} : vector<128x1xf32> -> vector<128x1xf32>
    %116 = arith.mulf %115, %114 : vector<128x1xf32>
    %117 = vector.broadcast %116 : vector<128x1xf32> to vector<128x256xf32>
    %118 = arith.mulf %108, %117 : vector<128x256xf32>
    %119 = arith.truncf %118 : vector<128x256xf32> to vector<128x256xbf16>
    %cst_47 = arith.constant dense<0.000000e+00> : vector<128x32xf32>
    %120 = tpu.matmul %119, %3, %cst_47 {dimension_numbers = #tpu.dot_dimension_numbers<[1], [0], [0], [1], [0, 0, 1, 1], [], []>} : vector<128x256xbf16>, vector<256x32xbf16>, vector<128x32xf32> -> vector<128x32xf32>
    %121 = arith.extf %96 : vector<1x32xbf16> to vector<1x32xf32>
    %122 = vector.broadcast %121 : vector<1x32xf32> to vector<128x32xf32>
    %123 = arith.mulf %120, %122 : vector<128x32xf32>
    %124 = arith.addf %94, %123 : vector<128x32xf32>
    %c0_48 = arith.constant 0 : index
    %c0_49 = arith.constant 0 : index
    %125 = vector.load %arg9[%c0_48, %c0_49] : memref<32x32xf32, #tpu.memory_space<vmem>>, vector<32x32xf32>
    %cst_50 = arith.constant dense<0.000000e+00> : vector<128x32xf32>
    %126 = tpu.matmul %124, %125, %cst_50 {dimension_numbers = #tpu.dot_dimension_numbers<[1], [0], [0], [1], [0, 0, 1, 1], [], []>} : vector<128x32xf32>, vector<32x32xf32>, vector<128x32xf32> -> vector<128x32xf32>
    %127 = arith.addf %0, %126 : vector<128x32xf32>
    %c0_51 = arith.constant 0 : index
    %c0_52 = arith.constant 0 : index
    %128 = vector.load %arg10[%c0_51, %c0_52] : memref<1x32xf32, #tpu.memory_space<vmem>>, vector<1x32xf32>
    %129 = vector.broadcast %128 : vector<1x32xf32> to vector<128x32xf32>
    %130 = arith.addf %127, %129 : vector<128x32xf32>
    %c0_53 = arith.constant 0 : index
    %c0_54 = arith.constant 0 : index
    %131 = vector.load %arg7[%c0_53, %c0_54] : memref<1x32xf32, #tpu.memory_space<vmem>>, vector<1x32xf32>
    %c0_55 = arith.constant 0 : index
    %c0_56 = arith.constant 0 : index
    %132 = vector.load %arg8[%c0_55, %c0_56] : memref<1x32xf32, #tpu.memory_space<vmem>>, vector<1x32xf32>
    %cst_57 = arith.constant dense<0.000000e+00> : vector<128xf32>
    %133 = vector.multi_reduction <add>, %130, %cst_57 [1] : vector<128x32xf32> to vector<128xf32>
    %134 = vector.shape_cast %133 : vector<128xf32> to vector<128x1xf32>
    %cst_58 = arith.constant 3.200000e+01 : f32
    %135 = vector.broadcast %cst_58 : f32 to vector<128x1xf32>
    %136 = arith.divf %134, %135 : vector<128x1xf32>
    %137 = vector.broadcast %136 : vector<128x1xf32> to vector<128x32xf32>
    %138 = arith.subf %130, %137 : vector<128x32xf32>
    %139 = arith.mulf %138, %138 : vector<128x32xf32>
    %cst_59 = arith.constant dense<0.000000e+00> : vector<128xf32>
    %140 = vector.multi_reduction <add>, %139, %cst_59 [1] : vector<128x32xf32> to vector<128xf32>
    %141 = vector.shape_cast %140 : vector<128xf32> to vector<128x1xf32>
    %cst_60 = arith.constant 3.200000e+01 : f32
    %142 = vector.broadcast %cst_60 : f32 to vector<128x1xf32>
    %143 = arith.divf %141, %142 : vector<128x1xf32>
    %144 = vector.broadcast %136 : vector<128x1xf32> to vector<128x32xf32>
    %145 = arith.subf %130, %144 : vector<128x32xf32>
    %cst_61 = arith.constant 9.99999974E-6 : f32
    %146 = vector.broadcast %cst_61 : f32 to vector<128x1xf32>
    %147 = arith.addf %143, %146 : vector<128x1xf32>
    %148 = math.rsqrt %147 : vector<128x1xf32>
    %149 = vector.broadcast %148 : vector<128x1xf32> to vector<128x32xf32>
    %150 = arith.mulf %145, %149 : vector<128x32xf32>
    %151 = vector.broadcast %131 : vector<1x32xf32> to vector<128x32xf32>
    %152 = arith.mulf %150, %151 : vector<128x32xf32>
    %153 = vector.broadcast %132 : vector<1x32xf32> to vector<128x32xf32>
    %154 = arith.addf %152, %153 : vector<128x32xf32>
    %c0_62 = arith.constant 0 : index
    %c0_63 = arith.constant 0 : index
    %155 = vector.load %arg11[%c0_62, %c0_63] : memref<32x128xf32, #tpu.memory_space<vmem>>, vector<32x128xf32>
    %cst_64 = arith.constant dense<0.000000e+00> : vector<128x128xf32>
    %156 = tpu.matmul %154, %155, %cst_64 {dimension_numbers = #tpu.dot_dimension_numbers<[1], [0], [0], [1], [0, 0, 1, 1], [], []>} : vector<128x32xf32>, vector<32x128xf32>, vector<128x128xf32> -> vector<128x128xf32>
    %c0_65 = arith.constant 0 : index
    %c0_66 = arith.constant 0 : index
    %157 = vector.load %arg12[%c0_65, %c0_66] : memref<1x128xf32, #tpu.memory_space<vmem>>, vector<1x128xf32>
    %158 = vector.broadcast %157 : vector<1x128xf32> to vector<128x128xf32>
    %159 = arith.addf %156, %158 : vector<128x128xf32>
    %cst_67 = arith.constant 5.000000e-01 : f32
    %160 = vector.broadcast %cst_67 : f32 to vector<128x128xf32>
    %161 = arith.mulf %160, %159 : vector<128x128xf32>
    %cst_68 = arith.constant 0.707106769 : f32
    %162 = vector.broadcast %cst_68 : f32 to vector<128x128xf32>
    %163 = arith.mulf %159, %162 : vector<128x128xf32>
    %cst_69 = arith.constant 0.000000e+00 : f32
    %164 = vector.broadcast %cst_69 : f32 to vector<128x128xf32>
    %165 = arith.cmpf oge, %163, %164 : vector<128x128xf32>
    %cst_70 = arith.constant 1.000000e+00 : f32
    %cst_71 = arith.constant -1.000000e+00 : f32
    %166 = vector.broadcast %cst_70 : f32 to vector<128x128xf32>
    %167 = vector.broadcast %cst_71 : f32 to vector<128x128xf32>
    %168 = arith.select %165, %166, %167 : vector<128x128xi1>, vector<128x128xf32>
    %169 = math.absf %163 : vector<128x128xf32>
    %cst_72 = arith.constant 0.327591091 : f32
    %170 = vector.broadcast %cst_72 : f32 to vector<128x128xf32>
    %171 = arith.mulf %170, %169 : vector<128x128xf32>
    %cst_73 = arith.constant 1.000000e+00 : f32
    %172 = vector.broadcast %cst_73 : f32 to vector<128x128xf32>
    %173 = arith.addf %172, %171 : vector<128x128xf32>
    %174 = tpu.reciprocal %173 {approx = true} : vector<128x128xf32> -> vector<128x128xf32>
    %cst_74 = arith.constant 1.06140542 : f32
    %175 = vector.broadcast %cst_74 : f32 to vector<128x128xf32>
    %176 = arith.mulf %175, %174 : vector<128x128xf32>
    %cst_75 = arith.constant -1.45315206 : f32
    %177 = vector.broadcast %cst_75 : f32 to vector<128x128xf32>
    %178 = arith.addf %176, %177 : vector<128x128xf32>
    %179 = arith.mulf %178, %174 : vector<128x128xf32>
    %cst_76 = arith.constant 1.42141378 : f32
    %180 = vector.broadcast %cst_76 : f32 to vector<128x128xf32>
    %181 = arith.addf %179, %180 : vector<128x128xf32>
    %182 = arith.mulf %181, %174 : vector<128x128xf32>
    %cst_77 = arith.constant -0.284496725 : f32
    %183 = vector.broadcast %cst_77 : f32 to vector<128x128xf32>
    %184 = arith.addf %182, %183 : vector<128x128xf32>
    %185 = arith.mulf %184, %174 : vector<128x128xf32>
    %cst_78 = arith.constant 0.254829586 : f32
    %186 = vector.broadcast %cst_78 : f32 to vector<128x128xf32>
    %187 = arith.addf %185, %186 : vector<128x128xf32>
    %188 = arith.mulf %187, %174 : vector<128x128xf32>
    %cst_79 = arith.constant 0.000000e+00 : f32
    %189 = vector.broadcast %cst_79 : f32 to vector<128x128xf32>
    %190 = arith.subf %189, %169 : vector<128x128xf32>
    %191 = arith.mulf %190, %169 : vector<128x128xf32>
    %192 = math.exp %191 : vector<128x128xf32>
    %193 = arith.mulf %188, %192 : vector<128x128xf32>
    %cst_80 = arith.constant 1.000000e+00 : f32
    %194 = vector.broadcast %cst_80 : f32 to vector<128x128xf32>
    %195 = arith.subf %194, %193 : vector<128x128xf32>
    %196 = arith.mulf %168, %195 : vector<128x128xf32>
    %cst_81 = arith.constant 1.000000e+00 : f32
    %197 = vector.broadcast %cst_81 : f32 to vector<128x128xf32>
    %198 = arith.addf %197, %196 : vector<128x128xf32>
    %199 = arith.mulf %161, %198 : vector<128x128xf32>
    %c0_82 = arith.constant 0 : index
    %c0_83 = arith.constant 0 : index
    %200 = vector.load %arg13[%c0_82, %c0_83] : memref<128x128xf32, #tpu.memory_space<vmem>>, vector<128x128xf32>
    %c0_84 = arith.constant 0 : index
    %c0_85 = arith.constant 0 : index
    %201 = vector.load %arg14[%c0_84, %c0_85] : memref<1x128xf32, #tpu.memory_space<vmem>>, vector<1x128xf32>
    %cst_86 = arith.constant dense<0.000000e+00> : vector<128x128xf32>
    %202 = tpu.matmul %199, %200, %cst_86 {dimension_numbers = #tpu.dot_dimension_numbers<[1], [0], [0], [1], [0, 0, 1, 1], [], []>} : vector<128x128xf32>, vector<128x128xf32>, vector<128x128xf32> -> vector<128x128xf32>
    %203 = vector.broadcast %201 : vector<1x128xf32> to vector<128x128xf32>
    %204 = arith.addf %202, %203 : vector<128x128xf32>
    %cst_87 = arith.constant 5.000000e-01 : f32
    %205 = vector.broadcast %cst_87 : f32 to vector<128x128xf32>
    %206 = arith.mulf %205, %204 : vector<128x128xf32>
    %cst_88 = arith.constant 0.707106769 : f32
    %207 = vector.broadcast %cst_88 : f32 to vector<128x128xf32>
    %208 = arith.mulf %204, %207 : vector<128x128xf32>
    %cst_89 = arith.constant 0.000000e+00 : f32
    %209 = vector.broadcast %cst_89 : f32 to vector<128x128xf32>
    %210 = arith.cmpf oge, %208, %209 : vector<128x128xf32>
    %cst_90 = arith.constant 1.000000e+00 : f32
    %cst_91 = arith.constant -1.000000e+00 : f32
    %211 = vector.broadcast %cst_90 : f32 to vector<128x128xf32>
    %212 = vector.broadcast %cst_91 : f32 to vector<128x128xf32>
    %213 = arith.select %210, %211, %212 : vector<128x128xi1>, vector<128x128xf32>
    %214 = math.absf %208 : vector<128x128xf32>
    %cst_92 = arith.constant 0.327591091 : f32
    %215 = vector.broadcast %cst_92 : f32 to vector<128x128xf32>
    %216 = arith.mulf %215, %214 : vector<128x128xf32>
    %cst_93 = arith.constant 1.000000e+00 : f32
    %217 = vector.broadcast %cst_93 : f32 to vector<128x128xf32>
    %218 = arith.addf %217, %216 : vector<128x128xf32>
    %219 = tpu.reciprocal %218 {approx = true} : vector<128x128xf32> -> vector<128x128xf32>
    %cst_94 = arith.constant 1.06140542 : f32
    %220 = vector.broadcast %cst_94 : f32 to vector<128x128xf32>
    %221 = arith.mulf %220, %219 : vector<128x128xf32>
    %cst_95 = arith.constant -1.45315206 : f32
    %222 = vector.broadcast %cst_95 : f32 to vector<128x128xf32>
    %223 = arith.addf %221, %222 : vector<128x128xf32>
    %224 = arith.mulf %223, %219 : vector<128x128xf32>
    %cst_96 = arith.constant 1.42141378 : f32
    %225 = vector.broadcast %cst_96 : f32 to vector<128x128xf32>
    %226 = arith.addf %224, %225 : vector<128x128xf32>
    %227 = arith.mulf %226, %219 : vector<128x128xf32>
    %cst_97 = arith.constant -0.284496725 : f32
    %228 = vector.broadcast %cst_97 : f32 to vector<128x128xf32>
    %229 = arith.addf %227, %228 : vector<128x128xf32>
    %230 = arith.mulf %229, %219 : vector<128x128xf32>
    %cst_98 = arith.constant 0.254829586 : f32
    %231 = vector.broadcast %cst_98 : f32 to vector<128x128xf32>
    %232 = arith.addf %230, %231 : vector<128x128xf32>
    %233 = arith.mulf %232, %219 : vector<128x128xf32>
    %cst_99 = arith.constant 0.000000e+00 : f32
    %234 = vector.broadcast %cst_99 : f32 to vector<128x128xf32>
    %235 = arith.subf %234, %214 : vector<128x128xf32>
    %236 = arith.mulf %235, %214 : vector<128x128xf32>
    %237 = math.exp %236 : vector<128x128xf32>
    %238 = arith.mulf %233, %237 : vector<128x128xf32>
    %cst_100 = arith.constant 1.000000e+00 : f32
    %239 = vector.broadcast %cst_100 : f32 to vector<128x128xf32>
    %240 = arith.subf %239, %238 : vector<128x128xf32>
    %241 = arith.mulf %213, %240 : vector<128x128xf32>
    %cst_101 = arith.constant 1.000000e+00 : f32
    %242 = vector.broadcast %cst_101 : f32 to vector<128x128xf32>
    %243 = arith.addf %242, %241 : vector<128x128xf32>
    %244 = arith.mulf %206, %243 : vector<128x128xf32>
    %c0_102 = arith.constant 0 : index
    %c0_103 = arith.constant 0 : index
    %245 = vector.load %arg15[%c0_102, %c0_103] : memref<128x32xf32, #tpu.memory_space<vmem>>, vector<128x32xf32>
    %cst_104 = arith.constant dense<0.000000e+00> : vector<128x32xf32>
    %246 = tpu.matmul %244, %245, %cst_104 {dimension_numbers = #tpu.dot_dimension_numbers<[1], [0], [0], [1], [0, 0, 1, 1], [], []>} : vector<128x128xf32>, vector<128x32xf32>, vector<128x32xf32> -> vector<128x32xf32>
    %c0_105 = arith.constant 0 : index
    %c0_106 = arith.constant 0 : index
    %247 = vector.load %arg16[%c0_105, %c0_106] : memref<1x32xf32, #tpu.memory_space<vmem>>, vector<1x32xf32>
    %248 = vector.broadcast %247 : vector<1x32xf32> to vector<128x32xf32>
    %249 = arith.addf %246, %248 : vector<128x32xf32>
    %250 = arith.addf %130, %249 : vector<128x32xf32>
    %c0_107 = arith.constant 0 : index
    %c0_108 = arith.constant 0 : index
    %251 = vector.load %arg17[%c0_107, %c0_108] : memref<128x32xf32, #tpu.memory_space<vmem>>, vector<128x32xf32>
    tpu.vector_store %arg17[%c0_107, %c0_108], %250 {strides = array<i32>} : memref<128x32xf32, #tpu.memory_space<vmem>>, vector<128x32xf32>,
    return
  }
  func.func @transform_0(%arg0: i32) -> (i32, i32) {
    %c0_i32 = arith.constant 0 : i32
    %c0_i32_0 = arith.constant 0 : i32
    return %arg0, %c0_i32 : i32, i32
  }
  func.func @transform_1(%arg0: i32) -> (i32, i32) {
    %c0_i32 = arith.constant 0 : i32
    %c0_i32_0 = arith.constant 0 : i32
    return %arg0, %c0_i32 : i32, i32
  }
  func.func @transform_2(%arg0: i32) -> (i32, i32, i32) {
    %c0_i32 = arith.constant 0 : i32
    %c0_i32_0 = arith.constant 0 : i32
    %c0_i32_1 = arith.constant 0 : i32
    return %c0_i32, %arg0, %c0_i32_0 : i32, i32, i32
  }
  func.func @transform_3(%arg0: i32) -> (i32, i32) {
    %c0_i32 = arith.constant 0 : i32
    %c0_i32_0 = arith.constant 0 : i32
    %c0_i32_1 = arith.constant 0 : i32
    return %c0_i32, %c0_i32_0 : i32, i32
  }
  func.func @transform_4(%arg0: i32) -> (i32, i32) {
    %c0_i32 = arith.constant 0 : i32
    %c0_i32_0 = arith.constant 0 : i32
    %c0_i32_1 = arith.constant 0 : i32
    return %c0_i32, %c0_i32_0 : i32, i32
  }
  func.func @transform_5(%arg0: i32) -> (i32, i32, i32) {
    %c0_i32 = arith.constant 0 : i32
    %c0_i32_0 = arith.constant 0 : i32
    %c0_i32_1 = arith.constant 0 : i32
    %c0_i32_2 = arith.constant 0 : i32
    return %c0_i32, %c0_i32_0, %c0_i32_1 : i32, i32, i32
  }
  func.func @transform_6(%arg0: i32) -> (i32, i32) {
    %c0_i32 = arith.constant 0 : i32
    %c0_i32_0 = arith.constant 0 : i32
    %c0_i32_1 = arith.constant 0 : i32
    return %c0_i32, %c0_i32_0 : i32, i32
  }
  func.func @transform_7(%arg0: i32) -> (i32, i32) {
    %c0_i32 = arith.constant 0 : i32
    %c0_i32_0 = arith.constant 0 : i32
    %c0_i32_1 = arith.constant 0 : i32
    return %c0_i32, %c0_i32_0 : i32, i32
  }
  func.func @transform_8(%arg0: i32) -> (i32, i32) {
    %c0_i32 = arith.constant 0 : i32
    %c0_i32_0 = arith.constant 0 : i32
    %c0_i32_1 = arith.constant 0 : i32
    return %c0_i32, %c0_i32_0 : i32, i32
  }
  func.func @transform_9(%arg0: i32) -> (i32, i32) {
    %c0_i32 = arith.constant 0 : i32
    %c0_i32_0 = arith.constant 0 : i32
    %c0_i32_1 = arith.constant 0 : i32
    return %c0_i32, %c0_i32_0 : i32, i32
  }
  func.func @transform_10(%arg0: i32) -> (i32, i32) {
    %c0_i32 = arith.constant 0 : i32
    %c0_i32_0 = arith.constant 0 : i32
    %c0_i32_1 = arith.constant 0 : i32
    return %c0_i32, %c0_i32_0 : i32, i32
  }
  func.func @transform_11(%arg0: i32) -> (i32, i32) {
    %c0_i32 = arith.constant 0 : i32
    %c0_i32_0 = arith.constant 0 : i32
    %c0_i32_1 = arith.constant 0 : i32
    return %c0_i32, %c0_i32_0 : i32, i32
  }
  func.func @transform_12(%arg0: i32) -> (i32, i32) {
    %c0_i32 = arith.constant 0 : i32
    %c0_i32_0 = arith.constant 0 : i32
    %c0_i32_1 = arith.constant 0 : i32
    return %c0_i32, %c0_i32_0 : i32, i32
  }
  func.func @transform_13(%arg0: i32) -> (i32, i32) {
    %c0_i32 = arith.constant 0 : i32
    %c0_i32_0 = arith.constant 0 : i32
    %c0_i32_1 = arith.constant 0 : i32
    return %c0_i32, %c0_i32_0 : i32, i32
  }
  func.func @transform_14(%arg0: i32) -> (i32, i32) {
    %c0_i32 = arith.constant 0 : i32
    %c0_i32_0 = arith.constant 0 : i32
    %c0_i32_1 = arith.constant 0 : i32
    return %c0_i32, %c0_i32_0 : i32, i32
  }
  func.func @transform_15(%arg0: i32) -> (i32, i32) {
    %c0_i32 = arith.constant 0 : i32
    %c0_i32_0 = arith.constant 0 : i32
    %c0_i32_1 = arith.constant 0 : i32
    return %c0_i32, %c0_i32_0 : i32, i32
  }
  func.func @transform_16(%arg0: i32) -> (i32, i32) {
    %c0_i32 = arith.constant 0 : i32
    %c0_i32_0 = arith.constant 0 : i32
    return %arg0, %c0_i32 : i32, i32
  }
}

</mosaic_0001>

<llo_original>
// kernel: tpu_custom_call.1
$region0: #{tpu_custom_call.1}
  #allocation0 [shape = 'u32[]', space=smem, size = 0x4, offset = 0x4, fixed_abs, tag = 'smem constant byte address 0x4 - core index']
  #allocation1 [shape = 'u32[144,128]{1,0:T(1,128)}', space=vmem, size = 0x12000, scoped, tag = 'internal scratch']
  #allocation4 [shape = 's32[]', space=sflag, size = 0x4, offset = 0, fixed_abs, tag = 'sflag constant byte address 0x0 - dummy sync flag']
  %s0 = inlined_call_operand.vmem [shape: f32[256,32], index: 0, kind: input, shape index: {}]
  %s1 = inlined_call_operand.vmem [shape: bf16[256,32], index: 1, kind: input, shape index: {}]
  %s2 = inlined_call_operand.hbm [shape: bf16[4,256,256], index: 2, kind: input, shape index: {}]
  %s3 = inlined_call_operand.vmem [shape: bf16[256,32], index: 3, kind: input, shape index: {}]
  %s4 = inlined_call_operand.vmem [shape: bf16[256,32], index: 4, kind: input, shape index: {}]
  %s5 = inlined_call_operand.vmem [shape: bf16[4,1,32], index: 5, kind: input, shape index: {}]
  %s6 = inlined_call_operand.vmem [shape: f32[1,32], index: 6, kind: input, shape index: {}]
  %s7 = inlined_call_operand.vmem [shape: f32[1,32], index: 7, kind: input, shape index: {}]
  %s8 = inlined_call_operand.vmem [shape: f32[32,32], index: 8, kind: input, shape index: {}]
  %s9 = inlined_call_operand.vmem [shape: f32[1,32], index: 9, kind: input, shape index: {}]
  %s10 = inlined_call_operand.vmem [shape: f32[32,128], index: 10, kind: input, shape index: {}]
  %s11 = inlined_call_operand.vmem [shape: f32[1,128], index: 11, kind: input, shape index: {}]
  %s12 = inlined_call_operand.vmem [shape: f32[128,128], index: 12, kind: input, shape index: {}]
  %s13 = inlined_call_operand.vmem [shape: f32[1,128], index: 13, kind: input, shape index: {}]
  %s14 = inlined_call_operand.vmem [shape: f32[128,32], index: 14, kind: input, shape index: {}]
  %s15 = inlined_call_operand.vmem [shape: f32[1,32], index: 15, kind: input, shape index: {}]
  %s16 = inlined_call_operand.vmem [shape: f32[256,32], index: 16, kind: output, shape index: {}]
  %s17 = sld [smem:[#allocation0]]
  $region101: #{tpu_custom_call.1} parent=0
    _
  %s19 = ssub.s32 1, %s17
  %s20 = scalar_select 0, %s19, %s17
  $region1: #{tpu_custom_call.1} parent=0
    #allocation2 [shape = 'u8[524288]{0}', space=vmem, size = 0x80000, scoped, tag = 'input window, operand 2']
    #allocation3 [shape = 's32[2]{0}', space=sflag, size = 0x8, scoped, tag = 'scoped memory for tpu_custom_call.1']
    %21 = vsyncpa [#allocation3], 0
    %s22 = scalar_lea.sflag [#allocation3], 1
    %23 = vsyncpa %s22, 0
    loop: start=0, step=1, limit=4
    $region2: #{tpu_custom_call.1} parent=1 // loop_pre_header
      _
    $region3: #{tpu_custom_call.1} parent=1 // loop_header
      %s25 = sphi 0, %s29
      %p26 = scmp.ge.s32.totalorder %s25, 4
      %s35 = sphi 0, %s37
      %s38 = sphi 0, %s35
      %s39 = sphi 0, %s38
      %s55 = sphi 0, %s39
      %s61 = sphi 0, %s63
      %s64 = sphi 0, %s61
      %s65 = sphi 0, %s64
      %s81 = sphi 0, %s65
      %s87 = sphi 0, %s89
      %s90 = sphi 0, %s87
      %s91 = sphi 0, %s90
      %s107 = sphi 0, %s91
      %s111 = sphi 0, %s111
      %s113 = sphi 0, %s111
      %s114 = sphi 0, %s113
      %s128 = sphi 0, %s114
      %s132 = sphi 0, %s132
      %s134 = sphi 0, %s132
      %s135 = sphi 0, %s134
      %s149 = sphi 0, %s135
      %s153 = sphi 0, %s153
      %s155 = sphi 0, %s153
      %s156 = sphi 0, %s155
      %s170 = sphi 0, %s156
      %s174 = sphi 0, %s174
      %s176 = sphi 0, %s174
      %s177 = sphi 0, %s176
      %s191 = sphi 0, %s177
      %s195 = sphi 0, %s195
      %s197 = sphi 0, %s195
      %s198 = sphi 0, %s197
      %s212 = sphi 0, %s198
      %s216 = sphi 0, %s216
      %s218 = sphi 0, %s216
      %s219 = sphi 0, %s218
      %s233 = sphi 0, %s219
      %s237 = sphi 0, %s237
      %s239 = sphi 0, %s237
      %s240 = sphi 0, %s239
      %s254 = sphi 0, %s240
      %s258 = sphi 0, %s258
      %s260 = sphi 0, %s258
      %s261 = sphi 0, %s260
      %s275 = sphi 0, %s261
      %s279 = sphi 0, %s279
      %s281 = sphi 0, %s279
      %s282 = sphi 0, %s281
      %s296 = sphi 0, %s282
      %s300 = sphi 0, %s300
      %s302 = sphi 0, %s300
      %s303 = sphi 0, %s302
      %s317 = sphi 0, %s303
      %s321 = sphi 0, %s321
      %s323 = sphi 0, %s321
      %s324 = sphi 0, %s323
      %s338 = sphi 0, %s324
      %s342 = sphi 0, %s342
      %s344 = sphi 0, %s342
      %s345 = sphi 0, %s344
      %s359 = sphi 0, %s345
      %s363 = sphi 0, %s363
      %s365 = sphi 0, %s363
      %s366 = sphi 0, %s365
      %s380 = sphi 0, %s366
      %s386 = sphi 0, %s388
      %s389 = sphi 0, %s386
      %s390 = sphi 0, %s389
      %s406 = sphi 0, %s390
    $region4: #{tpu_custom_call.1} parent=1 // loop_header_branch
      %28 = sbr.rel (%p26) target = $region8
    $region5: #{tpu_custom_call.1} parent=1 // loop_body
      %s30 = ssub.s32 %s25, 1
      %s31 = ssub.s32 %s25, 2
      %s32 = sadd.s32 %s25, 1
      %s33 = ssub.s32 %s25, %s32
      %p34 = scmp.eq.s32.totalorder %s33, 0
      %s36 = sadd.s32 %s35, 1
      %s37 = scalar_select %p34, %s35, %s36
      %p40 = pneg %p34
      %p41 = scmp.eq.s32.totalorder %s25, 1
      %p42 = por %p40, %p41
      %p43 = scmp.ne.s32.totalorder %s35, %s38
      %p44 = scmp.eq.s32.totalorder %s25, 0
      %p45 = por %p43, %p44
      %p46 = scmp.ne.s32.totalorder %s35, %s38
      %p47 = scmp.eq.s32.totalorder %s30, 1
      %p48 = por %p46, %p47
      %p49 = scmp.ne.s32.totalorder %s38, %s39
      %p50 = scmp.eq.s32.totalorder %s30, 0
      %p51 = por %p49, %p50
      %p52 = scmp.ne.s32.totalorder %s38, %s39
      %p53 = scmp.eq.s32.totalorder %s31, 1
      %p54 = por %p52, %p53
      %p56 = scmp.ne.s32.totalorder %s39, %s55
      %p57 = scmp.eq.s32.totalorder %s31, 0
      %p58 = por %p56, %p57
      %s59 = ssub.s32 %s25, %s32
      %p60 = scmp.eq.s32.totalorder %s59, 0
      %s62 = sadd.s32 %s61, 1
      %s63 = scalar_select %p60, %s61, %s62
      %p66 = pneg %p60
      %p67 = scmp.eq.s32.totalorder %s25, 1
      %p68 = por %p66, %p67
      %p69 = scmp.ne.s32.totalorder %s61, %s64
      %p70 = scmp.eq.s32.totalorder %s25, 0
      %p71 = por %p69, %p70
      %p72 = scmp.ne.s32.totalorder %s61, %s64
      %p73 = scmp.eq.s32.totalorder %s30, 1
      %p74 = por %p72, %p73
      %p75 = scmp.ne.s32.totalorder %s64, %s65
      %p76 = scmp.eq.s32.totalorder %s30, 0
      %p77 = por %p75, %p76
      %p78 = scmp.ne.s32.totalorder %s64, %s65
      %p79 = scmp.eq.s32.totalorder %s31, 1
      %p80 = por %p78, %p79
      %p82 = scmp.ne.s32.totalorder %s65, %s81
      %p83 = scmp.eq.s32.totalorder %s31, 0
      %p84 = por %p82, %p83
      %s85 = ssub.s32 %s25, %s32
      %p86 = scmp.eq.s32.totalorder %s85, 0
      %s88 = sadd.s32 %s87, 1
      %s89 = scalar_select %p86, %s87, %s88
      %p92 = pneg %p86
      %p93 = scmp.eq.s32.totalorder %s25, 1
      %p94 = por %p92, %p93
      %p95 = scmp.ne.s32.totalorder %s87, %s90
      %p96 = scmp.eq.s32.totalorder %s25, 0
      %p97 = por %p95, %p96
      %p98 = scmp.ne.s32.totalorder %s87, %s90
      %p99 = scmp.eq.s32.totalorder %s30, 1
      %p100 = por %p98, %p99
      %p101 = scmp.ne.s32.totalorder %s90, %s91
      %p102 = scmp.eq.s32.totalorder %s30, 0
      %p103 = por %p101, %p102
      %p104 = scmp.ne.s32.totalorder %s90, %s91
      %p105 = scmp.eq.s32.totalorder %s31, 1
      %p106 = por %p104, %p105
      %p108 = scmp.ne.s32.totalorder %s91, %s107
      %p109 = scmp.eq.s32.totalorder %s31, 0
      %p110 = por %p108, %p109
      %s112 = sadd.s32 %s111, 1
      %p115 = scmp.eq.s32.totalorder %s25, 1
      %p116 = scmp.ne.s32.totalorder %s111, %s113
      %p117 = scmp.eq.s32.totalorder %s25, 0
      %p118 = por %p116, %p117
      %p119 = scmp.ne.s32.totalorder %s111, %s113
      %p120 = scmp.eq.s32.totalorder %s30, 1
      %p121 = por %p119, %p120
      %p122 = scmp.ne.s32.totalorder %s113, %s114
      %p123 = scmp.eq.s32.totalorder %s30, 0
      %p124 = por %p122, %p123
      %p125 = scmp.ne.s32.totalorder %s113, %s114
      %p126 = scmp.eq.s32.totalorder %s31, 1
      %p127 = por %p125, %p126
      %p129 = scmp.ne.s32.totalorder %s114, %s128
      %p130 = scmp.eq.s32.totalorder %s31, 0
      %p131 = por %p129, %p130
      %s133 = sadd.s32 %s132, 1
      %p136 = scmp.eq.s32.totalorder %s25, 1
      %p137 = scmp.ne.s32.totalorder %s132, %s134
      %p138 = scmp.eq.s32.totalorder %s25, 0
      %p139 = por %p137, %p138
      %p140 = scmp.ne.s32.totalorder %s132, %s134
      %p141 = scmp.eq.s32.totalorder %s30, 1
      %p142 = por %p140, %p141
      %p143 = scmp.ne.s32.totalorder %s134, %s135
      %p144 = scmp.eq.s32.totalorder %s30, 0
      %p145 = por %p143, %p144
      %p146 = scmp.ne.s32.totalorder %s134, %s135
      %p147 = scmp.eq.s32.totalorder %s31, 1
      %p148 = por %p146, %p147
      %p150 = scmp.ne.s32.totalorder %s135, %s149
      %p151 = scmp.eq.s32.totalorder %s31, 0
      %p152 = por %p150, %p151
      %s154 = sadd.s32 %s153, 1
      %p157 = scmp.eq.s32.totalorder %s25, 1
      %p158 = scmp.ne.s32.totalorder %s153, %s155
      %p159 = scmp.eq.s32.totalorder %s25, 0
      %p160 = por %p158, %p159
      %p161 = scmp.ne.s32.totalorder %s153, %s155
      %p162 = scmp.eq.s32.totalorder %s30, 1
      %p163 = por %p161, %p162
      %p164 = scmp.ne.s32.totalorder %s155, %s156
      %p165 = scmp.eq.s32.totalorder %s30, 0
      %p166 = por %p164, %p165
      %p167 = scmp.ne.s32.totalorder %s155, %s156
      %p168 = scmp.eq.s32.totalorder %s31, 1
      %p169 = por %p167, %p168
      %p171 = scmp.ne.s32.totalorder %s156, %s170
      %p172 = scmp.eq.s32.totalorder %s31, 0
      %p173 = por %p171, %p172
      %s175 = sadd.s32 %s174, 1
      %p178 = scmp.eq.s32.totalorder %s25, 1
      %p179 = scmp.ne.s32.totalorder %s174, %s176
      %p180 = scmp.eq.s32.totalorder %s25, 0
      %p181 = por %p179, %p180
      %p182 = scmp.ne.s32.totalorder %s174, %s176
      %p183 = scmp.eq.s32.totalorder %s30, 1
      %p184 = por %p182, %p183
      %p185 = scmp.ne.s32.totalorder %s176, %s177
      %p186 = scmp.eq.s32.totalorder %s30, 0
      %p187 = por %p185, %p186
      %p188 = scmp.ne.s32.totalorder %s176, %s177
      %p189 = scmp.eq.s32.totalorder %s31, 1
      %p190 = por %p188, %p189
      %p192 = scmp.ne.s32.totalorder %s177, %s191
      %p193 = scmp.eq.s32.totalorder %s31, 0
      %p194 = por %p192, %p193
      %s196 = sadd.s32 %s195, 1
      %p199 = scmp.eq.s32.totalorder %s25, 1
      %p200 = scmp.ne.s32.totalorder %s195, %s197
      %p201 = scmp.eq.s32.totalorder %s25, 0
      %p202 = por %p200, %p201
      %p203 = scmp.ne.s32.totalorder %s195, %s197
      %p204 = scmp.eq.s32.totalorder %s30, 1
      %p205 = por %p203, %p204
      %p206 = scmp.ne.s32.totalorder %s197, %s198
      %p207 = scmp.eq.s32.totalorder %s30, 0
      %p208 = por %p206, %p207
      %p209 = scmp.ne.s32.totalorder %s197, %s198
      %p210 = scmp.eq.s32.totalorder %s31, 1
      %p211 = por %p209, %p210
      %p213 = scmp.ne.s32.totalorder %s198, %s212
      %p214 = scmp.eq.s32.totalorder %s31, 0
      %p215 = por %p213, %p214
      %s217 = sadd.s32 %s216, 1
      %p220 = scmp.eq.s32.totalorder %s25, 1
      %p221 = scmp.ne.s32.totalorder %s216, %s218
      %p222 = scmp.eq.s32.totalorder %s25, 0
      %p223 = por %p221, %p222
      %p224 = scmp.ne.s32.totalorder %s216, %s218
      %p225 = scmp.eq.s32.totalorder %s30, 1
      %p226 = por %p224, %p225
      %p227 = scmp.ne.s32.totalorder %s218, %s219
      %p228 = scmp.eq.s32.totalorder %s30, 0
      %p229 = por %p227, %p228
      %p230 = scmp.ne.s32.totalorder %s218, %s219
      %p231 = scmp.eq.s32.totalorder %s31, 1
      %p232 = por %p230, %p231
      %p234 = scmp.ne.s32.totalorder %s219, %s233
      %p235 = scmp.eq.s32.totalorder %s31, 0
      %p236 = por %p234, %p235
      %s238 = sadd.s32 %s237, 1
      %p241 = scmp.eq.s32.totalorder %s25, 1
      %p242 = scmp.ne.s32.totalorder %s237, %s239
      %p243 = scmp.eq.s32.totalorder %s25, 0
      %p244 = por %p242, %p243
      %p245 = scmp.ne.s32.totalorder %s237, %s239
      %p246 = scmp.eq.s32.totalorder %s30, 1
      %p247 = por %p245, %p246
      %p248 = scmp.ne.s32.totalorder %s239, %s240
      %p249 = scmp.eq.s32.totalorder %s30, 0
      %p250 = por %p248, %p249
      %p251 = scmp.ne.s32.totalorder %s239, %s240
      %p252 = scmp.eq.s32.totalorder %s31, 1
      %p253 = por %p251, %p252
      %p255 = scmp.ne.s32.totalorder %s240, %s254
      %p256 = scmp.eq.s32.totalorder %s31, 0
      %p257 = por %p255, %p256
      %s259 = sadd.s32 %s258, 1
      %p262 = scmp.eq.s32.totalorder %s25, 1
      %p263 = scmp.ne.s32.totalorder %s258, %s260
      %p264 = scmp.eq.s32.totalorder %s25, 0
      %p265 = por %p263, %p264
      %p266 = scmp.ne.s32.totalorder %s258, %s260
      %p267 = scmp.eq.s32.totalorder %s30, 1
      %p268 = por %p266, %p267
      %p269 = scmp.ne.s32.totalorder %s260, %s261
      %p270 = scmp.eq.s32.totalorder %s30, 0
      %p271 = por %p269, %p270
      %p272 = scmp.ne.s32.totalorder %s260, %s261
      %p273 = scmp.eq.s32.totalorder %s31, 1
      %p274 = por %p272, %p273
      %p276 = scmp.ne.s32.totalorder %s261, %s275
      %p277 = scmp.eq.s32.totalorder %s31, 0
      %p278 = por %p276, %p277
      %s280 = sadd.s32 %s279, 1
      %p283 = scmp.eq.s32.totalorder %s25, 1
      %p284 = scmp.ne.s32.totalorder %s279, %s281
      %p285 = scmp.eq.s32.totalorder %s25, 0
      %p286 = por %p284, %p285
      %p287 = scmp.ne.s32.totalorder %s279, %s281
      %p288 = scmp.eq.s32.totalorder %s30, 1
      %p289 = por %p287, %p288
      %p290 = scmp.ne.s32.totalorder %s281, %s282
      %p291 = scmp.eq.s32.totalorder %s30, 0
      %p292 = por %p290, %p291
      %p293 = scmp.ne.s32.totalorder %s281, %s282
      %p294 = scmp.eq.s32.totalorder %s31, 1
      %p295 = por %p293, %p294
      %p297 = scmp.ne.s32.totalorder %s282, %s296
      %p298 = scmp.eq.s32.totalorder %s31, 0
      %p299 = por %p297, %p298
      %s301 = sadd.s32 %s300, 1
      %p304 = scmp.eq.s32.totalorder %s25, 1
      %p305 = scmp.ne.s32.totalorder %s300, %s302
      %p306 = scmp.eq.s32.totalorder %s25, 0
      %p307 = por %p305, %p306
      %p308 = scmp.ne.s32.totalorder %s300, %s302
      %p309 = scmp.eq.s32.totalorder %s30, 1
      %p310 = por %p308, %p309
      %p311 = scmp.ne.s32.totalorder %s302, %s303
      %p312 = scmp.eq.s32.totalorder %s30, 0
      %p313 = por %p311, %p312
      %p314 = scmp.ne.s32.totalorder %s302, %s303
      %p315 = scmp.eq.s32.totalorder %s31, 1
      %p316 = por %p314, %p315
      %p318 = scmp.ne.s32.totalorder %s303, %s317
      %p319 = scmp.eq.s32.totalorder %s31, 0
      %p320 = por %p318, %p319
      %s322 = sadd.s32 %s321, 1
      %p325 = scmp.eq.s32.totalorder %s25, 1
      %p326 = scmp.ne.s32.totalorder %s321, %s323
      %p327 = scmp.eq.s32.totalorder %s25, 0
      %p328 = por %p326, %p327
      %p329 = scmp.ne.s32.totalorder %s321, %s323
      %p330 = scmp.eq.s32.totalorder %s30, 1
      %p331 = por %p329, %p330
      %p332 = scmp.ne.s32.totalorder %s323, %s324
      %p333 = scmp.eq.s32.totalorder %s30, 0
      %p334 = por %p332, %p333
      %p335 = scmp.ne.s32.totalorder %s323, %s324
      %p336 = scmp.eq.s32.totalorder %s31, 1
      %p337 = por %p335, %p336
      %p339 = scmp.ne.s32.totalorder %s324, %s338
      %p340 = scmp.eq.s32.totalorder %s31, 0
      %p341 = por %p339, %p340
      %s343 = sadd.s32 %s342, 1
      %p346 = scmp.eq.s32.totalorder %s25, 1
      %p347 = scmp.ne.s32.totalorder %s342, %s344
      %p348 = scmp.eq.s32.totalorder %s25, 0
      %p349 = por %p347, %p348
      %p350 = scmp.ne.s32.totalorder %s342, %s344
      %p351 = scmp.eq.s32.totalorder %s30, 1
      %p352 = por %p350, %p351
      %p353 = scmp.ne.s32.totalorder %s344, %s345
      %p354 = scmp.eq.s32.totalorder %s30, 0
      %p355 = por %p353, %p354
      %p356 = scmp.ne.s32.totalorder %s344, %s345
      %p357 = scmp.eq.s32.totalorder %s31, 1
      %p358 = por %p356, %p357
      %p360 = scmp.ne.s32.totalorder %s345, %s359
      %p361 = scmp.eq.s32.totalorder %s31, 0
      %p362 = por %p360, %p361
      %s364 = sadd.s32 %s363, 1
      %p367 = scmp.eq.s32.totalorder %s25, 1
      %p368 = scmp.ne.s32.totalorder %s363, %s365
      %p369 = scmp.eq.s32.totalorder %s25, 0
      %p370 = por %p368, %p369
      %p371 = scmp.ne.s32.totalorder %s363, %s365
      %p372 = scmp.eq.s32.totalorder %s30, 1
      %p373 = por %p371, %p372
      %p374 = scmp.ne.s32.totalorder %s365, %s366
      %p375 = scmp.eq.s32.totalorder %s30, 0
      %p376 = por %p374, %p375
      %p377 = scmp.ne.s32.totalorder %s365, %s366
      %p378 = scmp.eq.s32.totalorder %s31, 1
      %p379 = por %p377, %p378
      %p381 = scmp.ne.s32.totalorder %s366, %s380
      %p382 = scmp.eq.s32.totalorder %s31, 0
      %p383 = por %p381, %p382
      %s384 = ssub.s32 %s25, %s32
      %p385 = scmp.eq.s32.totalorder %s384, 0
      %s387 = sadd.s32 %s386, 1
      %s388 = scalar_select %p385, %s386, %s387
      %p391 = pneg %p385
      %p392 = scmp.eq.s32.totalorder %s25, 1
      %p393 = por %p391, %p392
      %p394 = scmp.ne.s32.totalorder %s386, %s389
      %p395 = scmp.eq.s32.totalorder %s25, 0
      %p396 = por %p394, %p395
      %p397 = scmp.ne.s32.totalorder %s386, %s389
      %p398 = scmp.eq.s32.totalorder %s30, 1
      %p399 = por %p397, %p398
      %p400 = scmp.ne.s32.totalorder %s389, %s390
      %p401 = scmp.eq.s32.totalorder %s30, 0
      %p402 = por %p400, %p401
      %p403 = scmp.ne.s32.totalorder %s389, %s390
      %p404 = scmp.eq.s32.totalorder %s31, 1
      %p405 = por %p403, %p404
      %p407 = scmp.ne.s32.totalorder %s390, %s406
      %p408 = scmp.eq.s32.totalorder %s31, 0
      %p409 = por %p407, %p408
      %p410 = scmp.le.s32.totalorder 1, %s25
      %p411 = scmp.lt.s32.totalorder %s25, 3
      %p412 = pnand %p410, %p411
      %p413 = pneg %p412
      // Predicated region
      $region9: #{tpu_custom_call.1} parent=5 // pred_check
        _
      $region10: #{tpu_custom_call.1} parent=5 // pred_check_branch
        %415 = sbr.rel (%p412) target = $region12
      $region11: #{tpu_custom_call.1} parent=5 // pred_region
        %s416 = ssub.s32 %s25, 1
        // Predicated region
        $region13: #{tpu_custom_call.1} parent=11 // pred_check
          %p417 = pneg %p124
        $region14: #{tpu_custom_call.1} parent=11 // pred_check_branch
          %419 = sbr.rel (%p417) target = $region16
        $region15: #{tpu_custom_call.1} parent=11 // pred_region
          _
        $region16: #{tpu_custom_call.1} parent=11 // pred_fallthru
          _
        // Predicated region
        $region17: #{tpu_custom_call.1} parent=11 // pred_check
          %p420 = pneg %p145
        $region18: #{tpu_custom_call.1} parent=11 // pred_check_branch
          %422 = sbr.rel (%p420) target = $region20
        $region19: #{tpu_custom_call.1} parent=11 // pred_region
          _
        $region20: #{tpu_custom_call.1} parent=11 // pred_fallthru
          _
        // Predicated region
        $region21: #{tpu_custom_call.1} parent=11 // pred_check
          %p423 = pneg %p166
        $region22: #{tpu_custom_call.1} parent=11 // pred_check_branch
          %425 = sbr.rel (%p423) target = $region24
        $region23: #{tpu_custom_call.1} parent=11 // pred_region
          _
        $region24: #{tpu_custom_call.1} parent=11 // pred_fallthru
          _
        // Predicated region
        $region25: #{tpu_custom_call.1} parent=11 // pred_check
          %p426 = pneg %p187
        $region26: #{tpu_custom_call.1} parent=11 // pred_check_branch
          %428 = sbr.rel (%p426) target = $region28
        $region27: #{tpu_custom_call.1} parent=11 // pred_region
          _
        $region28: #{tpu_custom_call.1} parent=11 // pred_fallthru
          _
        // Predicated region
        $region29: #{tpu_custom_call.1} parent=11 // pred_check
          %p429 = pneg %p208
        $region30: #{tpu_custom_call.1} parent=11 // pred_check_branch
          %431 = sbr.rel (%p429) target = $region32
        $region31: #{tpu_custom_call.1} parent=11 // pred_region
          _
        $region32: #{tpu_custom_call.1} parent=11 // pred_fallthru
          _
        // Predicated region
        $region33: #{tpu_custom_call.1} parent=11 // pred_check
          %p432 = pneg %p229
        $region34: #{tpu_custom_call.1} parent=11 // pred_check_branch
          %434 = sbr.rel (%p432) target = $region36
        $region35: #{tpu_custom_call.1} parent=11 // pred_region
          _
        $region36: #{tpu_custom_call.1} parent=11 // pred_fallthru
          _
        // Predicated region
        $region37: #{tpu_custom_call.1} parent=11 // pred_check
          %p435 = pneg %p250
        $region38: #{tpu_custom_call.1} parent=11 // pred_check_branch
          %437 = sbr.rel (%p435) target = $region40
        $region39: #{tpu_custom_call.1} parent=11 // pred_region
          _
        $region40: #{tpu_custom_call.1} parent=11 // pred_fallthru
          _
        // Predicated region
        $region41: #{tpu_custom_call.1} parent=11 // pred_check
          %p438 = pneg %p271
        $region42: #{tpu_custom_call.1} parent=11 // pred_check_branch
          %440 = sbr.rel (%p438) target = $region44
        $region43: #{tpu_custom_call.1} parent=11 // pred_region
          _
        $region44: #{tpu_custom_call.1} parent=11 // pred_fallthru
          _
        // Predicated region
        $region45: #{tpu_custom_call.1} parent=11 // pred_check
          %p441 = pneg %p292
        $region46: #{tpu_custom_call.1} parent=11 // pred_check_branch
          %443 = sbr.rel (%p441) target = $region48
        $region47: #{tpu_custom_call.1} parent=11 // pred_region
          _
        $region48: #{tpu_custom_call.1} parent=11 // pred_fallthru
          _
        // Predicated region
        $region49: #{tpu_custom_call.1} parent=11 // pred_check
          %p444 = pneg %p313
        $region50: #{tpu_custom_call.1} parent=11 // pred_check_branch
          %446 = sbr.rel (%p444) target = $region52
        $region51: #{tpu_custom_call.1} parent=11 // pred_region
          _
        $region52: #{tpu_custom_call.1} parent=11 // pred_fallthru
          _
        // Predicated region
        $region53: #{tpu_custom_call.1} parent=11 // pred_check
          %p447 = pneg %p334
        $region54: #{tpu_custom_call.1} parent=11 // pred_check_branch
          %449 = sbr.rel (%p447) target = $region56
        $region55: #{tpu_custom_call.1} parent=11 // pred_region
          _
        $region56: #{tpu_custom_call.1} parent=11 // pred_fallthru
          _
        // Predicated region
        $region57: #{tpu_custom_call.1} parent=11 // pred_check
          %p450 = pneg %p355
        $region58: #{tpu_custom_call.1} parent=11 // pred_check_branch
          %452 = sbr.rel (%p450) target = $region60
        $region59: #{tpu_custom_call.1} parent=11 // pred_region
          _
        $region60: #{tpu_custom_call.1} parent=11 // pred_fallthru
          _
        // Predicated region
        $region61: #{tpu_custom_call.1} parent=11 // pred_check
          %p453 = pneg %p376
        $region62: #{tpu_custom_call.1} parent=11 // pred_check_branch
          %455 = sbr.rel (%p453) target = $region64
        $region63: #{tpu_custom_call.1} parent=11 // pred_region
          _
        $region64: #{tpu_custom_call.1} parent=11 // pred_fallthru
          _
      $region12: #{tpu_custom_call.1} parent=5 // pred_fallthru
        _
      %p456 = scmp.lt.s32.totalorder %s25, 2
      // Predicated region
      $region65: #{tpu_custom_call.1} parent=5 // pred_check
        %p457 = pneg %p456
      $region66: #{tpu_custom_call.1} parent=5 // pred_check_branch
        %459 = sbr.rel (%p457) target = $region68
      $region67: #{tpu_custom_call.1} parent=5 // pred_region
        // Predicated region
        $region69: #{tpu_custom_call.1} parent=67 // pred_check
          %p460 = pneg %p45
        $region70: #{tpu_custom_call.1} parent=67 // pred_check_branch
          %462 = sbr.rel (%p460) target = $region72
        $region71: #{tpu_custom_call.1} parent=67 // pred_region
          %s463 = smul.u32 16, %s25
          %p464 = scmp.lt.s32.totalorder %s463, 31
          %s465 = scalar_select %p464, %s463, 31
          %s466 = smul.addr %s465, 8
          %s467 = scalar_lea.vmem %s0, %s466
          %s468 = smul.u32 16, %s25
        $region72: #{tpu_custom_call.1} parent=67 // pred_fallthru
          _
        // Predicated region
        $region73: #{tpu_custom_call.1} parent=67 // pred_check
          %p469 = pneg %p71
        $region74: #{tpu_custom_call.1} parent=67 // pred_check_branch
          %471 = sbr.rel (%p469) target = $region76
        $region75: #{tpu_custom_call.1} parent=67 // pred_region
          %s472 = smul.u32 16, %s25
          %p473 = scmp.lt.s32.totalorder %s472, 31
          %s474 = scalar_select %p473, %s472, 31
          %s475 = smul.addr %s474, 4
          %s476 = scalar_lea.vmem %s1, %s475
          %s477 = smul.u32 16, %s25
        $region76: #{tpu_custom_call.1} parent=67 // pred_fallthru
          _
        // Predicated region
        $region77: #{tpu_custom_call.1} parent=67 // pred_check
          %p478 = pneg %p97
        $region78: #{tpu_custom_call.1} parent=67 // pred_check_branch
          %480 = sbr.rel (%p478) target = $region80
        $region79: #{tpu_custom_call.1} parent=67 // pred_region
          #allocation5 [shape = 'u32[6]{0}', space=smem, size = 0x18, scoped, tag = 'DMA stride descriptor']
          %s481 = sand.u32 %s87, 1
          %s482 = scalar_lea.sflag [#allocation3], %s481
          %s483 = sand.u32 %s87, 1
          %s484 = smul.addr %s483, 512
          %s485 = scalar_lea.vmem [#allocation2], %s484
          %s486 = smul.u32 16, %s25
          %s488 = ssub.s32 8192, 8192
          %489 = vsyncadd %s482, %s488
          %s490 = smul.addr %s486, 2
          %s491 = smul.addr %s490, 64
          %s492 = scalar_lea.hbm %s2, %s491
          %s494 = sshll.u32 1, 14
          %s495 = sxor.u32 4294967295, %s494
          %s497 = sld [smem:[#allocation0]]
          %s498 = sadd.s32 2, %s497
          %s500 = sshll.u32 7, 26
          %s501 = sxor.u32 4294967295, %s500
          %s502 = sand.u32 0, %s501
          %s503 = sshll.u32 %s498, 26
          %s504 = sor.u32 %s502, %s503
          %s505 = sshll.u32 %s485, 4
          %s506 = int_to_ptr.vmem [resolvable:$true] %s505
          %512 = sst [smem:[#allocation5]] 4096
          %s513 = scalar_lea.smem [#allocation5], 1
          %514 = sst [smem:[%s513]] 2048
          %s515 = scalar_lea.smem [#allocation5], 2
          %516 = sst [smem:[%s515]] 16
          %s517 = scalar_lea.smem [#allocation5], 3
          %518 = sst [smem:[%s517]] 128
          %s519 = scalar_lea.smem [#allocation5], 4
          %520 = sst [smem:[%s519]] 128
          %s521 = scalar_lea.smem [#allocation5], 5
          %522 = sst [smem:[%s521]] 8
          %524 = dma.general %s492, 8192, %s506, %s482, [#allocation4], [#allocation5], %s504, 0
        $region80: #{tpu_custom_call.1} parent=67 // pred_fallthru
          _
      $region68: #{tpu_custom_call.1} parent=5 // pred_fallthru
        _
      %p525 = scmp.le.s32.totalorder 1, %s25
      %p526 = scmp.lt.s32.totalorder %s25, 3
      %p527 = pnand %p525, %p526
      %p528 = pneg %p527
      // Predicated region
      $region81: #{tpu_custom_call.1} parent=5 // pred_check
        _
      $region82: #{tpu_custom_call.1} parent=5 // pred_check_branch
        %530 = sbr.rel (%p527) target = $region84
      $region83: #{tpu_custom_call.1} parent=5 // pred_region
        %s531 = ssub.s32 %s25, 1
        %s532 = sand.u32 %s90, 1
        %s533 = scalar_lea.sflag [#allocation3], %s532
        %s534 = sand.u32 %s90, 1
        %s535 = smul.addr %s534, 512
        %s536 = scalar_lea.vmem [#allocation2], %s535
        // Predicated region
        $region85: #{tpu_custom_call.1} parent=83 // pred_check
          %p537 = pneg %p103
        $region86: #{tpu_custom_call.1} parent=83 // pred_check_branch
          %539 = sbr.rel (%p537) target = $region88
        $region87: #{tpu_custom_call.1} parent=83 // pred_region
          %540 = dma.done %s533, 8192
        $region88: #{tpu_custom_call.1} parent=83 // pred_fallthru
          _
        %s541 = smul.u32 16, %s30
        %p542 = scmp.lt.s32.totalorder %s541, 31
        %s543 = scalar_select %p542, %s541, 31
        %s544 = smul.addr %s543, 8
        %s545 = scalar_lea.vmem %s0, %s544
        %p546 = pneg %p51
        %p547 = pneg %p48
        %s548 = smul.u32 16, %s30
        %p549 = scmp.lt.s32.totalorder %s548, 31
        %s550 = scalar_select %p549, %s548, 31
        %s551 = smul.addr %s550, 4
        %s552 = scalar_lea.vmem %s1, %s551
        %p553 = pneg %p77
        %p554 = pneg %p74
        %s555 = sand.u32 %s90, 1
        %s556 = scalar_lea.sflag [#allocation3], %s555
        %s557 = sand.u32 %s90, 1
        %s558 = smul.addr %s557, 512
        %s559 = scalar_lea.vmem [#allocation2], %s558
        %p560 = pneg %p103
        %p561 = pneg %p100
        %p562 = pneg %p124
        %p563 = pneg %p121
        %p564 = pneg %p145
        %p565 = pneg %p142
        %p566 = pneg %p166
        %p567 = pneg %p163
        %p568 = pneg %p187
        %p569 = pneg %p184
        %p570 = pneg %p208
        %p571 = pneg %p205
        %p572 = pneg %p229
        %p573 = pneg %p226
        %p574 = pneg %p250
        %p575 = pneg %p247
        %p576 = pneg %p271
        %p577 = pneg %p268
        %p578 = pneg %p292
        %p579 = pneg %p289
        %p580 = pneg %p313
        %p581 = pneg %p310
        %p582 = pneg %p334
        %p583 = pneg %p331
        %p584 = pneg %p355
        %p585 = pneg %p352
        %p586 = pneg %p376
        %p587 = pneg %p373
        %p588 = pneg %p402
        %p589 = pneg %p399
        %s590 = smul.u32 16, %s30
        %p591 = scmp.lt.s32.totalorder %s590, 31
        %s592 = scalar_select %p591, %s590, 31
        %s593 = smul.addr %s592, 8
        %s594 = scalar_lea.vmem %s16, %s593
        %s595 = smul.u32 16, %s30
        %p596 = scmp.lt.s32.totalorder %s595, 31
        %s597 = scalar_select %p596, %s595, 31
        %s598 = smul.addr %s597, 8
        %s599 = scalar_lea.vmem %s0, %s598
        %s600 = smul.u32 16, %s30
        %s601 = smul.u32 16, %s30
        %p602 = scmp.lt.s32.totalorder %s601, 31
        %s603 = scalar_select %p602, %s601, 31
        %s604 = smul.addr %s603, 4
        %s605 = scalar_lea.vmem %s1, %s604
        %s606 = smul.u32 16, %s30
        %s607 = smul.u32 16, %s30
        %s608 = smul.u32 16, %s30
        %p609 = scmp.lt.s32.totalorder %s608, 31
        %s610 = scalar_select %p609, %s608, 31
        %s611 = smul.addr %s610, 8
        %s612 = scalar_lea.vmem %s16, %s611
        %s613 = smul.u32 16, %s30
        %v615 = vld [vmem:[%s599] sm:$0xff]
        %v616 = vld [vmem:[%s599 + $0x8] sm:$0xff]
        %v617 = vld [vmem:[%s599 + $0x10] sm:$0xff]
        %v618 = vld [vmem:[%s599 + $0x18] sm:$0xff]
        %v619 = vld [vmem:[%s599 + $0x20] sm:$0xff]
        %v620 = vld [vmem:[%s599 + $0x28] sm:$0xff]
        %v621 = vld [vmem:[%s599 + $0x30] sm:$0xff]
        %v622 = vld [vmem:[%s599 + $0x38] sm:$0xff]
        %v623 = vld [vmem:[%s599 + $0x40] sm:$0xff]
        %v624 = vld [vmem:[%s599 + $0x48] sm:$0xff]
        %v625 = vld [vmem:[%s599 + $0x50] sm:$0xff]
        %v626 = vld [vmem:[%s599 + $0x58] sm:$0xff]
        %v627 = vld [vmem:[%s599 + $0x60] sm:$0xff]
        %v628 = vld [vmem:[%s599 + $0x68] sm:$0xff]
        %v629 = vld [vmem:[%s599 + $0x70] sm:$0xff]
        %v630 = vld [vmem:[%s599 + $0x78] sm:$0xff]
        %v631 = vld [vmem:[%s605] sm:$0xf]
        %v632 = vld [vmem:[%s605 + $0x4] sm:$0xf]
        %v633 = vld [vmem:[%s605 + $0x8] sm:$0xf]
        %v634 = vld [vmem:[%s605 + $0xc] sm:$0xf]
        %v635 = vld [vmem:[%s605 + $0x10] sm:$0xf]
        %v636 = vld [vmem:[%s605 + $0x14] sm:$0xf]
        %v637 = vld [vmem:[%s605 + $0x18] sm:$0xf]
        %v638 = vld [vmem:[%s605 + $0x1c] sm:$0xf]
        %v639 = vld [vmem:[%s605 + $0x20] sm:$0xf]
        %v640 = vld [vmem:[%s605 + $0x24] sm:$0xf]
        %v641 = vld [vmem:[%s605 + $0x28] sm:$0xf]
        %v642 = vld [vmem:[%s605 + $0x2c] sm:$0xf]
        %v643 = vld [vmem:[%s605 + $0x30] sm:$0xf]
        %v644 = vld [vmem:[%s605 + $0x34] sm:$0xf]
        %v645 = vld [vmem:[%s605 + $0x38] sm:$0xf]
        %v646 = vld [vmem:[%s605 + $0x3c] sm:$0xf]
        %v647 = vld [vmem:[%s3] sm:$0xf]
        %v648 = vld [vmem:[%s3 + $0x4] sm:$0xf]
        %v649 = vld [vmem:[%s3 + $0x8] sm:$0xf]
        %v650 = vld [vmem:[%s3 + $0xc] sm:$0xf]
        %v651 = vld [vmem:[%s3 + $0x10] sm:$0xf]
        %v652 = vld [vmem:[%s3 + $0x14] sm:$0xf]
        %v653 = vld [vmem:[%s3 + $0x18] sm:$0xf]
        %v654 = vld [vmem:[%s3 + $0x1c] sm:$0xf]
        %v655 = vld [vmem:[%s3 + $0x20] sm:$0xf]
        %v656 = vld [vmem:[%s3 + $0x24] sm:$0xf]
        %v657 = vld [vmem:[%s3 + $0x28] sm:$0xf]
        %v658 = vld [vmem:[%s3 + $0x2c] sm:$0xf]
        %v659 = vld [vmem:[%s3 + $0x30] sm:$0xf]
        %v660 = vld [vmem:[%s3 + $0x34] sm:$0xf]
        %v661 = vld [vmem:[%s3 + $0x38] sm:$0xf]
        %v662 = vld [vmem:[%s3 + $0x3c] sm:$0xf]
        %v663 = vld [vmem:[%s3 + $0x40] sm:$0xf]
        %v664 = vld [vmem:[%s3 + $0x44] sm:$0xf]
        %v665 = vld [vmem:[%s3 + $0x48] sm:$0xf]
        %v666 = vld [vmem:[%s3 + $0x4c] sm:$0xf]
        %v667 = vld [vmem:[%s3 + $0x50] sm:$0xf]
        %v668 = vld [vmem:[%s3 + $0x54] sm:$0xf]
        %v669 = vld [vmem:[%s3 + $0x58] sm:$0xf]
        %v670 = vld [vmem:[%s3 + $0x5c] sm:$0xf]
        %v671 = vld [vmem:[%s3 + $0x60] sm:$0xf]
        %v672 = vld [vmem:[%s3 + $0x64] sm:$0xf]
        %v673 = vld [vmem:[%s3 + $0x68] sm:$0xf]
        %v674 = vld [vmem:[%s3 + $0x6c] sm:$0xf]
        %v675 = vld [vmem:[%s3 + $0x70] sm:$0xf]
        %v676 = vld [vmem:[%s3 + $0x74] sm:$0xf]
        %v677 = vld [vmem:[%s3 + $0x78] sm:$0xf]
        %v678 = vld [vmem:[%s3 + $0x7c] sm:$0xf]
        %v679 = vld [vmem:[%s4] sm:$0xf]
        %v680 = vld [vmem:[%s4 + $0x4] sm:$0xf]
        %v681 = vld [vmem:[%s4 + $0x8] sm:$0xf]
        %v682 = vld [vmem:[%s4 + $0xc] sm:$0xf]
        %v683 = vld [vmem:[%s4 + $0x10] sm:$0xf]
        %v684 = vld [vmem:[%s4 + $0x14] sm:$0xf]
        %v685 = vld [vmem:[%s4 + $0x18] sm:$0xf]
        %v686 = vld [vmem:[%s4 + $0x1c] sm:$0xf]
        %v687 = vld [vmem:[%s4 + $0x20] sm:$0xf]
        %v688 = vld [vmem:[%s4 + $0x24] sm:$0xf]
        %v689 = vld [vmem:[%s4 + $0x28] sm:$0xf]
        %v690 = vld [vmem:[%s4 + $0x2c] sm:$0xf]
        %v691 = vld [vmem:[%s4 + $0x30] sm:$0xf]
        %v692 = vld [vmem:[%s4 + $0x34] sm:$0xf]
        %v693 = vld [vmem:[%s4 + $0x38] sm:$0xf]
        %v694 = vld [vmem:[%s4 + $0x3c] sm:$0xf]
        %v695 = vld [vmem:[%s4 + $0x40] sm:$0xf]
        %v696 = vld [vmem:[%s4 + $0x44] sm:$0xf]
        %v697 = vld [vmem:[%s4 + $0x48] sm:$0xf]
        %v698 = vld [vmem:[%s4 + $0x4c] sm:$0xf]
        %v699 = vld [vmem:[%s4 + $0x50] sm:$0xf]
        %v700 = vld [vmem:[%s4 + $0x54] sm:$0xf]
        %v701 = vld [vmem:[%s4 + $0x58] sm:$0xf]
        %v702 = vld [vmem:[%s4 + $0x5c] sm:$0xf]
        %v703 = vld [vmem:[%s4 + $0x60] sm:$0xf]
        %v704 = vld [vmem:[%s4 + $0x64] sm:$0xf]
        %v705 = vld [vmem:[%s4 + $0x68] sm:$0xf]
        %v706 = vld [vmem:[%s4 + $0x6c] sm:$0xf]
        %v707 = vld [vmem:[%s4 + $0x70] sm:$0xf]
        %v708 = vld [vmem:[%s4 + $0x74] sm:$0xf]
        %v709 = vld [vmem:[%s4 + $0x78] sm:$0xf]
        %v710 = vld [vmem:[%s4 + $0x7c] sm:$0xf]
        %v711 = vld [vmem:[%s5] sm:$0x1]
        %v713 = vpack.i.b16 %v711, %v711
        %v715 = vlaneseq
        %v716 = vshrl.u32 %v715, 7
        %v717 = vsub.s32 0, %v716
        %v718 = vrot.slane %v713, %v717
        %v720 = vunpack.c.l.b16 %v718
        %v721 = vpack.c.b16 %v720, %v720
        %v723 = vmul.bf16 %v631, %v721
        %v724 = vmul.bf16 %v632, %v721
        %v725 = vmul.bf16 %v633, %v721
        %v726 = vmul.bf16 %v634, %v721
        %v727 = vmul.bf16 %v635, %v721
        %v728 = vmul.bf16 %v636, %v721
        %v729 = vmul.bf16 %v637, %v721
        %v730 = vmul.bf16 %v638, %v721
        %v731 = vmul.bf16 %v639, %v721
        %v732 = vmul.bf16 %v640, %v721
        %v733 = vmul.bf16 %v641, %v721
        %v734 = vmul.bf16 %v642, %v721
        %v735 = vmul.bf16 %v643, %v721
        %v736 = vmul.bf16 %v644, %v721
        %v737 = vmul.bf16 %v645, %v721
        %v738 = vmul.bf16 %v646, %v721
        %v739 = vld [vmem:[%s536] sm:$0xff]
        %v740 = vld [vmem:[%s536 + $0x8] sm:$0xff]
        %v741 = vld [vmem:[%s536 + $0x10] sm:$0xff]
        %v742 = vld [vmem:[%s536 + $0x18] sm:$0xff]
        %v743 = vld [vmem:[%s536 + $0x20] sm:$0xff]
        %v744 = vld [vmem:[%s536 + $0x28] sm:$0xff]
        %v745 = vld [vmem:[%s536 + $0x30] sm:$0xff]
        %v746 = vld [vmem:[%s536 + $0x38] sm:$0xff]
        %v747 = vld [vmem:[%s536 + $0x40] sm:$0xff]
        %v748 = vld [vmem:[%s536 + $0x48] sm:$0xff]
        %v749 = vld [vmem:[%s536 + $0x50] sm:$0xff]
        %v750 = vld [vmem:[%s536 + $0x58] sm:$0xff]
        %v751 = vld [vmem:[%s536 + $0x60] sm:$0xff]
        %v752 = vld [vmem:[%s536 + $0x68] sm:$0xff]
        %v753 = vld [vmem:[%s536 + $0x70] sm:$0xff]
        %v754 = vld [vmem:[%s536 + $0x78] sm:$0xff]
        %v755 = vunpack.c.l.bf16 %v739
        %v756 = vunpack.c.h.bf16 %v739
        %v757 = vunpack.c.l.bf16 %v740
        %v758 = vunpack.c.h.bf16 %v740
        %v759 = vunpack.c.l.bf16 %v741
        %v760 = vunpack.c.h.bf16 %v741
        %v761 = vunpack.c.l.bf16 %v742
        %v762 = vunpack.c.h.bf16 %v742
        %v763 = vunpack.c.l.bf16 %v743
        %v764 = vunpack.c.h.bf16 %v743
        %v765 = vunpack.c.l.bf16 %v744
        %v766 = vunpack.c.h.bf16 %v744
        %v767 = vunpack.c.l.bf16 %v745
        %v768 = vunpack.c.h.bf16 %v745
        %v769 = vunpack.c.l.bf16 %v746
        %v770 = vunpack.c.h.bf16 %v746
        %v771 = vunpack.c.l.bf16 %v747
        %v772 = vunpack.c.h.bf16 %v747
        %v773 = vunpack.c.l.bf16 %v748
        %v774 = vunpack.c.h.bf16 %v748
        %v775 = vunpack.c.l.bf16 %v749
        %v776 = vunpack.c.h.bf16 %v749
        %v777 = vunpack.c.l.bf16 %v750
        %v778 = vunpack.c.h.bf16 %v750
        %v779 = vunpack.c.l.bf16 %v751
        %v780 = vunpack.c.h.bf16 %v751
        %v781 = vunpack.c.l.bf16 %v752
        %v782 = vunpack.c.h.bf16 %v752
        %v783 = vunpack.c.l.bf16 %v753
        %v784 = vunpack.c.h.bf16 %v753
        %v785 = vunpack.c.l.bf16 %v754
        %v786 = vunpack.c.h.bf16 %v754
        %v803 = vunpack.c.l.b16 %v723
        %v804 = vunpack.c.l.b16 %v724
        %v805 = vunpack.c.l.b16 %v725
        %v806 = vunpack.c.l.b16 %v726
        %v807 = vunpack.c.l.b16 %v727
        %v808 = vunpack.c.l.b16 %v728
        %v809 = vunpack.c.l.b16 %v729
        %v810 = vunpack.c.l.b16 %v730
        %v811 = vunpack.c.l.b16 %v731
        %v812 = vunpack.c.l.b16 %v732
        %v813 = vunpack.c.l.b16 %v733
        %v814 = vunpack.c.l.b16 %v734
        %v815 = vunpack.c.l.b16 %v735
        %v816 = vunpack.c.l.b16 %v736
        %v817 = vunpack.c.l.b16 %v737
        %v818 = vunpack.c.l.b16 %v738
        %v819 = vpack.c.b16 %v804, %v803
        %v820 = vpack.c.b16 %v806, %v805
        %v821 = vpack.c.b16 %v808, %v807
        %v822 = vpack.c.b16 %v810, %v809
        %v823 = vpack.c.b16 %v812, %v811
        %v824 = vpack.c.b16 %v814, %v813
        %v825 = vpack.c.b16 %v816, %v815
        %v826 = vpack.c.b16 %v818, %v817
        %v859 = vunpack.c.l.b16 %v647
        %v860 = vunpack.c.l.b16 %v648
        %v861 = vunpack.c.l.b16 %v649
        %v862 = vunpack.c.l.b16 %v650
        %v863 = vunpack.c.l.b16 %v651
        %v864 = vunpack.c.l.b16 %v652
        %v865 = vunpack.c.l.b16 %v653
        %v866 = vunpack.c.l.b16 %v654
        %v867 = vunpack.c.l.b16 %v655
        %v868 = vunpack.c.l.b16 %v656
        %v869 = vunpack.c.l.b16 %v657
        %v870 = vunpack.c.l.b16 %v658
        %v871 = vunpack.c.l.b16 %v659
        %v872 = vunpack.c.l.b16 %v660
        %v873 = vunpack.c.l.b16 %v661
        %v874 = vunpack.c.l.b16 %v662
        %v875 = vunpack.c.l.b16 %v663
        %v876 = vunpack.c.l.b16 %v664
        %v877 = vunpack.c.l.b16 %v665
        %v878 = vunpack.c.l.b16 %v666
        %v879 = vunpack.c.l.b16 %v667
        %v880 = vunpack.c.l.b16 %v668
        %v881 = vunpack.c.l.b16 %v669
        %v882 = vunpack.c.l.b16 %v670
        %v883 = vunpack.c.l.b16 %v671
        %v884 = vunpack.c.l.b16 %v672
        %v885 = vunpack.c.l.b16 %v673
        %v886 = vunpack.c.l.b16 %v674
        %v887 = vunpack.c.l.b16 %v675
        %v888 = vunpack.c.l.b16 %v676
        %v889 = vunpack.c.l.b16 %v677
        %v890 = vunpack.c.l.b16 %v678
        %v891 = vpack.c.b16 %v860, %v859
        %v892 = vpack.c.b16 %v862, %v861
        %v893 = vpack.c.b16 %v864, %v863
        %v894 = vpack.c.b16 %v866, %v865
        %v895 = vpack.c.b16 %v868, %v867
        %v896 = vpack.c.b16 %v870, %v869
        %v897 = vpack.c.b16 %v872, %v871
        %v898 = vpack.c.b16 %v874, %v873
        %v899 = vpack.c.b16 %v876, %v875
        %v900 = vpack.c.b16 %v878, %v877
        %v901 = vpack.c.b16 %v880, %v879
        %v902 = vpack.c.b16 %v882, %v881
        %v903 = vpack.c.b16 %v884, %v883
        %v904 = vpack.c.b16 %v886, %v885
        %v905 = vpack.c.b16 %v888, %v887
        %v906 = vpack.c.b16 %v890, %v889
        %vm907 = vcmask 261120
        %v909 = vsel %vm907, %v819, 0
        %v912 = vsel %vm907, %v820, 0
        %v915 = vsel %vm907, %v821, 0
        %v918 = vsel %vm907, %v822, 0
        %v921 = vsel %vm907, %v823, 0
        %v924 = vsel %vm907, %v824, 0
        %v927 = vsel %vm907, %v825, 0
        %v930 = vsel %vm907, %v826, 0
        %v933 = vsel %vm907, %v891, 0
        %v936 = vsel %vm907, %v892, 0
        %v939 = vsel %vm907, %v893, 0
        %v942 = vsel %vm907, %v894, 0
        %v945 = vsel %vm907, %v895, 0
        %v948 = vsel %vm907, %v896, 0
        %v951 = vsel %vm907, %v897, 0
        %v954 = vsel %vm907, %v898, 0
        %v957 = vsel %vm907, %v899, 0
        %v960 = vsel %vm907, %v900, 0
        %v963 = vsel %vm907, %v901, 0
        %v966 = vsel %vm907, %v902, 0
        %v969 = vsel %vm907, %v903, 0
        %v972 = vsel %vm907, %v904, 0
        %v975 = vsel %vm907, %v905, 0
        %v978 = vsel %vm907, %v906, 0
        %980 = vmatprep.subr.bf16.mxu0 0
        %981 = vmatpush1.bf16.xpose.msra.mxu0 %v933
        %982 = vmatprep.subr.bf16.mxu0 0
        %983 = vmatpush1.bf16.xpose.msra.mxu0 %v936
        %984 = vmatprep.subr.bf16.mxu0 0
        %985 = vmatpush1.bf16.xpose.msra.mxu0 %v939
        %986 = vmatprep.subr.bf16.mxu0 0
        %987 = vmatpush1.bf16.xpose.msra.mxu0 %v942
        %988 = vmatprep.subr.bf16.mxu0 0
        %989 = vmatpush1.bf16.xpose.msra.mxu0 %v945
        %990 = vmatprep.subr.bf16.mxu0 0
        %991 = vmatpush1.bf16.xpose.msra.mxu0 %v948
        %992 = vmatprep.subr.bf16.mxu0 0
        %993 = vmatpush1.bf16.xpose.msra.mxu0 %v951
        %994 = vmatprep.subr.bf16.mxu0 0
        %995 = vmatpush1.bf16.xpose.msra.mxu0 %v954
        %996 = vmatprep.subr.bf16.mxu0 0
        %997 = vmatpush1.bf16.xpose.msra.mxu0 %v957
        %998 = vmatprep.subr.bf16.mxu0 0
        %999 = vmatpush1.bf16.xpose.msra.mxu0 %v960
        %1000 = vmatprep.subr.bf16.mxu0 0
        %1001 = vmatpush1.bf16.xpose.msra.mxu0 %v963
        %1002 = vmatprep.subr.bf16.mxu0 0
        %1003 = vmatpush1.bf16.xpose.msra.mxu0 %v966
        %1004 = vmatprep.subr.bf16.mxu0 0
        %1005 = vmatpush1.bf16.xpose.msra.mxu0 %v969
        %1006 = vmatprep.subr.bf16.mxu0 0
        %1007 = vmatpush1.bf16.xpose.msra.mxu0 %v972
        %1008 = vmatprep.subr.bf16.mxu0 0
        %1009 = vmatpush1.bf16.xpose.msra.mxu0 %v975
        %1010 = vmatprep.subr.bf16.mxu0 0
        %1011 = vmatpush1.bf16.xpose.msra.mxu0 %v978
        %1012 = vmatprep.mubr.bf16.mxu0 0
        %1013 = vmatmul.mubr.bf16.gmra.mrb[0].mxu0 %v909
        %v1014 = vpop.f32.mrb[0].mxu0
        %v1015 = vadd.f32 %v755, %v1014
        %v1016 = vpop.f32.mrb[0].mxu0
        %v1017 = vadd.f32 %v756, %v1016
        %v1018 = vpop.f32.mrb[0].mxu0
        %v1019 = vadd.f32 %v757, %v1018
        %v1020 = vpop.f32.mrb[0].mxu0
        %v1021 = vadd.f32 %v758, %v1020
        %1022 = vmatprep.mubr.bf16.mxu0 0
        %1023 = vmatmul.mubr.bf16.gmra.mrb[0].mxu0 %v912
        %v1024 = vpop.f32.mrb[0].mxu0
        %v1025 = vadd.f32 %v759, %v1024
        %v1026 = vpop.f32.mrb[0].mxu0
        %v1027 = vadd.f32 %v760, %v1026
        %v1028 = vpop.f32.mrb[0].mxu0
        %v1029 = vadd.f32 %v761, %v1028
        %v1030 = vpop.f32.mrb[0].mxu0
        %v1031 = vadd.f32 %v762, %v1030
        %1032 = vmatprep.mubr.bf16.mxu0 0
        %1033 = vmatmul.mubr.bf16.gmra.mrb[0].mxu0 %v915
        %v1034 = vpop.f32.mrb[0].mxu0
        %v1035 = vadd.f32 %v763, %v1034
        %v1036 = vpop.f32.mrb[0].mxu0
        %v1037 = vadd.f32 %v764, %v1036
        %v1038 = vpop.f32.mrb[0].mxu0
        %v1039 = vadd.f32 %v765, %v1038
        %v1040 = vpop.f32.mrb[0].mxu0
        %v1041 = vadd.f32 %v766, %v1040
        %1042 = vmatprep.mubr.bf16.mxu0 0
        %1043 = vmatmul.mubr.bf16.gmra.mrb[0].mxu0 %v918
        %v1044 = vpop.f32.mrb[0].mxu0
        %v1045 = vadd.f32 %v767, %v1044
        %v1046 = vpop.f32.mrb[0].mxu0
        %v1047 = vadd.f32 %v768, %v1046
        %v1048 = vpop.f32.mrb[0].mxu0
        %v1049 = vadd.f32 %v769, %v1048
        %v1050 = vpop.f32.mrb[0].mxu0
        %v1051 = vadd.f32 %v770, %v1050
        %1052 = vmatprep.mubr.bf16.mxu0 0
        %1053 = vmatmul.mubr.bf16.gmra.mrb[0].mxu0 %v921
        %v1054 = vpop.f32.mrb[0].mxu0
        %v1055 = vadd.f32 %v771, %v1054
        %v1056 = vpop.f32.mrb[0].mxu0
        %v1057 = vadd.f32 %v772, %v1056
        %v1058 = vpop.f32.mrb[0].mxu0
        %v1059 = vadd.f32 %v773, %v1058
        %v1060 = vpop.f32.mrb[0].mxu0
        %v1061 = vadd.f32 %v774, %v1060
        %1062 = vmatprep.mubr.bf16.mxu0 0
        %1063 = vmatmul.mubr.bf16.gmra.mrb[0].mxu0 %v924
        %v1064 = vpop.f32.mrb[0].mxu0
        %v1065 = vadd.f32 %v775, %v1064
        %v1066 = vpop.f32.mrb[0].mxu0
        %v1067 = vadd.f32 %v776, %v1066
        %v1068 = vpop.f32.mrb[0].mxu0
        %v1069 = vadd.f32 %v777, %v1068
        %v1070 = vpop.f32.mrb[0].mxu0
        %v1071 = vadd.f32 %v778, %v1070
        %1072 = vmatprep.mubr.bf16.mxu0 0
        %1073 = vmatmul.mubr.bf16.gmra.mrb[0].mxu0 %v927
        %v1074 = vpop.f32.mrb[0].mxu0
        %v1075 = vadd.f32 %v779, %v1074
        %v1076 = vpop.f32.mrb[0].mxu0
        %v1077 = vadd.f32 %v780, %v1076
        %v1078 = vpop.f32.mrb[0].mxu0
        %v1079 = vadd.f32 %v781, %v1078
        %v1080 = vpop.f32.mrb[0].mxu0
        %v1081 = vadd.f32 %v782, %v1080
        %1082 = vmatprep.mubr.bf16.mxu0 0
        %1083 = vmatmul.mubr.bf16.gmra.mrb[0].mxu0 %v930
        %v1084 = vpop.f32.mrb[0].mxu0
        %v1085 = vadd.f32 %v783, %v1084
        %v1086 = vpop.f32.mrb[0].mxu0
        %v1087 = vadd.f32 %v784, %v1086
        %v1088 = vpop.f32.mrb[0].mxu0
        %v1089 = vadd.f32 %v785, %v1088
        %v1090 = vpop.f32.mrb[0].mxu0
        %v1091 = vadd.f32 %v786, %v1090
        %1092 = vdwg.mxu0
        %v1093 = vmax.f32 %v1015, %v1017
        %1094 = vmax.xlane.f32.xlu0 %v1093
        %v1095 = vpop.xlane.xlu0 %1094
        %v1096 = vmax.f32 %v1019, %v1021
        %1097 = vmax.xlane.f32.xlu0 %v1096
        %v1098 = vpop.xlane.xlu0 %1097
        %v1099 = vmax.f32 %v1025, %v1027
        %1100 = vmax.xlane.f32.xlu0 %v1099
        %v1101 = vpop.xlane.xlu0 %1100
        %v1102 = vmax.f32 %v1029, %v1031
        %1103 = vmax.xlane.f32.xlu0 %v1102
        %v1104 = vpop.xlane.xlu0 %1103
        %v1105 = vmax.f32 %v1035, %v1037
        %1106 = vmax.xlane.f32.xlu0 %v1105
        %v1107 = vpop.xlane.xlu0 %1106
        %v1108 = vmax.f32 %v1039, %v1041
        %1109 = vmax.xlane.f32.xlu0 %v1108
        %v1110 = vpop.xlane.xlu0 %1109
        %v1111 = vmax.f32 %v1045, %v1047
        %1112 = vmax.xlane.f32.xlu0 %v1111
        %v1113 = vpop.xlane.xlu0 %1112
        %v1114 = vmax.f32 %v1049, %v1051
        %1115 = vmax.xlane.f32.xlu0 %v1114
        %v1116 = vpop.xlane.xlu0 %1115
        %v1117 = vmax.f32 %v1055, %v1057
        %1118 = vmax.xlane.f32.xlu0 %v1117
        %v1119 = vpop.xlane.xlu0 %1118
        %v1120 = vmax.f32 %v1059, %v1061
        %1121 = vmax.xlane.f32.xlu0 %v1120
        %v1122 = vpop.xlane.xlu0 %1121
        %v1123 = vmax.f32 %v1065, %v1067
        %1124 = vmax.xlane.f32.xlu0 %v1123
        %v1125 = vpop.xlane.xlu0 %1124
        %v1126 = vmax.f32 %v1069, %v1071
        %1127 = vmax.xlane.f32.xlu0 %v1126
        %v1128 = vpop.xlane.xlu0 %1127
        %v1129 = vmax.f32 %v1075, %v1077
        %1130 = vmax.xlane.f32.xlu0 %v1129
        %v1131 = vpop.xlane.xlu0 %1130
        %v1132 = vmax.f32 %v1079, %v1081
        %1133 = vmax.xlane.f32.xlu0 %v1132
        %v1134 = vpop.xlane.xlu0 %1133
        %v1135 = vmax.f32 %v1085, %v1087
        %1136 = vmax.xlane.f32.xlu0 %v1135
        %v1137 = vpop.xlane.xlu0 %1136
        %v1138 = vmax.f32 %v1089, %v1091
        %1139 = vmax.xlane.f32.xlu0 %v1138
        %v1140 = vpop.xlane.xlu0 %1139
        %v1141 = vsub.f32 %v1015, %v1095
        %v1142 = vsub.f32 %v1017, %v1095
        %v1143 = vsub.f32 %v1019, %v1098
        %v1144 = vsub.f32 %v1021, %v1098
        %v1145 = vsub.f32 %v1025, %v1101
        %v1146 = vsub.f32 %v1027, %v1101
        %v1147 = vsub.f32 %v1029, %v1104
        %v1148 = vsub.f32 %v1031, %v1104
        %v1149 = vsub.f32 %v1035, %v1107
        %v1150 = vsub.f32 %v1037, %v1107
        %v1151 = vsub.f32 %v1039, %v1110
        %v1152 = vsub.f32 %v1041, %v1110
        %v1153 = vsub.f32 %v1045, %v1113
        %v1154 = vsub.f32 %v1047, %v1113
        %v1155 = vsub.f32 %v1049, %v1116
        %v1156 = vsub.f32 %v1051, %v1116
        %v1157 = vsub.f32 %v1055, %v1119
        %v1158 = vsub.f32 %v1057, %v1119
        %v1159 = vsub.f32 %v1059, %v1122
        %v1160 = vsub.f32 %v1061, %v1122
        %v1161 = vsub.f32 %v1065, %v1125
        %v1162 = vsub.f32 %v1067, %v1125
        %v1163 = vsub.f32 %v1069, %v1128
        %v1164 = vsub.f32 %v1071, %v1128
        %v1165 = vsub.f32 %v1075, %v1131
        %v1166 = vsub.f32 %v1077, %v1131
        %v1167 = vsub.f32 %v1079, %v1134
        %v1168 = vsub.f32 %v1081, %v1134
        %v1169 = vsub.f32 %v1085, %v1137
        %v1170 = vsub.f32 %v1087, %v1137
        %v1171 = vsub.f32 %v1089, %v1140
        %v1172 = vsub.f32 %v1091, %v1140
        %v1173 = vmul.f32 %v1141, 1.442695
        %v1174 = vpow.pop %v1173
        %v1175 = vmul.f32 %v1142, 1.442695
        %v1176 = vpow.pop %v1175
        %v1177 = vmul.f32 %v1143, 1.442695
        %v1178 = vpow.pop %v1177
        %v1179 = vmul.f32 %v1144, 1.442695
        %v1180 = vpow.pop %v1179
        %v1181 = vmul.f32 %v1145, 1.442695
        %v1182 = vpow.pop %v1181
        %v1183 = vmul.f32 %v1146, 1.442695
        %v1184 = vpow.pop %v1183
        %v1185 = vmul.f32 %v1147, 1.442695
        %v1186 = vpow.pop %v1185
        %v1187 = vmul.f32 %v1148, 1.442695
        %v1188 = vpow.pop %v1187
        %v1189 = vmul.f32 %v1149, 1.442695
        %v1190 = vpow.pop %v1189
        %v1191 = vmul.f32 %v1150, 1.442695
        %v1192 = vpow.pop %v1191
        %v1193 = vmul.f32 %v1151, 1.442695
        %v1194 = vpow.pop %v1193
        %v1195 = vmul.f32 %v1152, 1.442695
        %v1196 = vpow.pop %v1195
        %v1197 = vmul.f32 %v1153, 1.442695
        %v1198 = vpow.pop %v1197
        %v1199 = vmul.f32 %v1154, 1.442695
        %v1200 = vpow.pop %v1199
        %v1201 = vmul.f32 %v1155, 1.442695
        %v1202 = vpow.pop %v1201
        %v1203 = vmul.f32 %v1156, 1.442695
        %v1204 = vpow.pop %v1203
        %v1205 = vmul.f32 %v1157, 1.442695
        %v1206 = vpow.pop %v1205
        %v1207 = vmul.f32 %v1158, 1.442695
        %v1208 = vpow.pop %v1207
        %v1209 = vmul.f32 %v1159, 1.442695
        %v1210 = vpow.pop %v1209
        %v1211 = vmul.f32 %v1160, 1.442695
        %v1212 = vpow.pop %v1211
        %v1213 = vmul.f32 %v1161, 1.442695
        %v1214 = vpow.pop %v1213
        %v1215 = vmul.f32 %v1162, 1.442695
        %v1216 = vpow.pop %v1215
        %v1217 = vmul.f32 %v1163, 1.442695
        %v1218 = vpow.pop %v1217
        %v1219 = vmul.f32 %v1164, 1.442695
        %v1220 = vpow.pop %v1219
        %v1221 = vmul.f32 %v1165, 1.442695
        %v1222 = vpow.pop %v1221
        %v1223 = vmul.f32 %v1166, 1.442695
        %v1224 = vpow.pop %v1223
        %v1225 = vmul.f32 %v1167, 1.442695
        %v1226 = vpow.pop %v1225
        %v1227 = vmul.f32 %v1168, 1.442695
        %v1228 = vpow.pop %v1227
        %v1229 = vmul.f32 %v1169, 1.442695
        %v1230 = vpow.pop %v1229
        %v1231 = vmul.f32 %v1170, 1.442695
        %v1232 = vpow.pop %v1231
        %v1233 = vmul.f32 %v1171, 1.442695
        %v1234 = vpow.pop %v1233
        %v1235 = vmul.f32 %v1172, 1.442695
        %v1236 = vpow.pop %v1235
        %v1237 = vadd.f32 %v1174, %v1176
        %1238 = vadd.xlane.f32.xlu0 %v1237
        %v1239 = vpop.xlane.xlu0 %1238
        %v1240 = vadd.f32 %v1178, %v1180
        %1241 = vadd.xlane.f32.xlu0 %v1240
        %v1242 = vpop.xlane.xlu0 %1241
        %v1243 = vadd.f32 %v1182, %v1184
        %1244 = vadd.xlane.f32.xlu0 %v1243
        %v1245 = vpop.xlane.xlu0 %1244
        %v1246 = vadd.f32 %v1186, %v1188
        %1247 = vadd.xlane.f32.xlu0 %v1246
        %v1248 = vpop.xlane.xlu0 %1247
        %v1249 = vadd.f32 %v1190, %v1192
        %1250 = vadd.xlane.f32.xlu0 %v1249
        %v1251 = vpop.xlane.xlu0 %1250
        %v1252 = vadd.f32 %v1194, %v1196
        %1253 = vadd.xlane.f32.xlu0 %v1252
        %v1254 = vpop.xlane.xlu0 %1253
        %v1255 = vadd.f32 %v1198, %v1200
        %1256 = vadd.xlane.f32.xlu0 %v1255
        %v1257 = vpop.xlane.xlu0 %1256
        %v1258 = vadd.f32 %v1202, %v1204
        %1259 = vadd.xlane.f32.xlu0 %v1258
        %v1260 = vpop.xlane.xlu0 %1259
        %v1261 = vadd.f32 %v1206, %v1208
        %1262 = vadd.xlane.f32.xlu0 %v1261
        %v1263 = vpop.xlane.xlu0 %1262
        %v1264 = vadd.f32 %v1210, %v1212
        %1265 = vadd.xlane.f32.xlu0 %v1264
        %v1266 = vpop.xlane.xlu0 %1265
        %v1267 = vadd.f32 %v1214, %v1216
        %1268 = vadd.xlane.f32.xlu0 %v1267
        %v1269 = vpop.xlane.xlu0 %1268
        %v1270 = vadd.f32 %v1218, %v1220
        %1271 = vadd.xlane.f32.xlu0 %v1270
        %v1272 = vpop.xlane.xlu0 %1271
        %v1273 = vadd.f32 %v1222, %v1224
        %1274 = vadd.xlane.f32.xlu0 %v1273
        %v1275 = vpop.xlane.xlu0 %1274
        %v1276 = vadd.f32 %v1226, %v1228
        %1277 = vadd.xlane.f32.xlu0 %v1276
        %v1278 = vpop.xlane.xlu0 %1277
        %v1279 = vadd.f32 %v1230, %v1232
        %1280 = vadd.xlane.f32.xlu0 %v1279
        %v1281 = vpop.xlane.xlu0 %1280
        %v1282 = vadd.f32 %v1234, %v1236
        %1283 = vadd.xlane.f32.xlu0 %v1282
        %v1284 = vpop.xlane.xlu0 %1283
        %vm1285 = vcmp.gt.f32.partialorder %v1095, -5e+29
        %vm1286 = vcmp.gt.f32.partialorder %v1098, -5e+29
        %vm1287 = vcmp.gt.f32.partialorder %v1101, -5e+29
        %vm1288 = vcmp.gt.f32.partialorder %v1104, -5e+29
        %vm1289 = vcmp.gt.f32.partialorder %v1107, -5e+29
        %vm1290 = vcmp.gt.f32.partialorder %v1110, -5e+29
        %vm1291 = vcmp.gt.f32.partialorder %v1113, -5e+29
        %vm1292 = vcmp.gt.f32.partialorder %v1116, -5e+29
        %vm1293 = vcmp.gt.f32.partialorder %v1119, -5e+29
        %vm1294 = vcmp.gt.f32.partialorder %v1122, -5e+29
        %vm1295 = vcmp.gt.f32.partialorder %v1125, -5e+29
        %vm1296 = vcmp.gt.f32.partialorder %v1128, -5e+29
        %vm1297 = vcmp.gt.f32.partialorder %v1131, -5e+29
        %vm1298 = vcmp.gt.f32.partialorder %v1134, -5e+29
        %vm1299 = vcmp.gt.f32.partialorder %v1137, -5e+29
        %vm1300 = vcmp.gt.f32.partialorder %v1140, -5e+29
        %v1301 = vsel %vm1285, 1, 0
        %v1302 = vsel %vm1286, 1, 0
        %v1303 = vsel %vm1287, 1, 0
        %v1304 = vsel %vm1288, 1, 0
        %v1305 = vsel %vm1289, 1, 0
        %v1306 = vsel %vm1290, 1, 0
        %v1307 = vsel %vm1291, 1, 0
        %v1308 = vsel %vm1292, 1, 0
        %v1309 = vsel %vm1293, 1, 0
        %v1310 = vsel %vm1294, 1, 0
        %v1311 = vsel %vm1295, 1, 0
        %v1312 = vsel %vm1296, 1, 0
        %v1313 = vsel %vm1297, 1, 0
        %v1314 = vsel %vm1298, 1, 0
        %v1315 = vsel %vm1299, 1, 0
        %v1316 = vsel %vm1300, 1, 0
        %v1317 = vcvt.s32.f32 %v1301
        %v1318 = vcvt.s32.f32 %v1302
        %v1319 = vcvt.s32.f32 %v1303
        %v1320 = vcvt.s32.f32 %v1304
        %v1321 = vcvt.s32.f32 %v1305
        %v1322 = vcvt.s32.f32 %v1306
        %v1323 = vcvt.s32.f32 %v1307
        %v1324 = vcvt.s32.f32 %v1308
        %v1325 = vcvt.s32.f32 %v1309
        %v1326 = vcvt.s32.f32 %v1310
        %v1327 = vcvt.s32.f32 %v1311
        %v1328 = vcvt.s32.f32 %v1312
        %v1329 = vcvt.s32.f32 %v1313
        %v1330 = vcvt.s32.f32 %v1314
        %v1331 = vcvt.s32.f32 %v1315
        %v1332 = vcvt.s32.f32 %v1316
        %v1333 = vrcp.pop %v1239
        %v1334 = vrcp.pop %v1242
        %v1335 = vrcp.pop %v1245
        %v1336 = vrcp.pop %v1248
        %v1337 = vrcp.pop %v1251
        %v1338 = vrcp.pop %v1254
        %v1339 = vrcp.pop %v1257
        %v1340 = vrcp.pop %v1260
        %v1341 = vrcp.pop %v1263
        %v1342 = vrcp.pop %v1266
        %v1343 = vrcp.pop %v1269
        %v1344 = vrcp.pop %v1272
        %v1345 = vrcp.pop %v1275
        %v1346 = vrcp.pop %v1278
        %v1347 = vrcp.pop %v1281
        %v1348 = vrcp.pop %v1284
        %v1349 = vmul.f32 %v1333, %v1317
        %v1350 = vmul.f32 %v1334, %v1318
        %v1351 = vmul.f32 %v1335, %v1319
        %v1352 = vmul.f32 %v1336, %v1320
        %v1353 = vmul.f32 %v1337, %v1321
        %v1354 = vmul.f32 %v1338, %v1322
        %v1355 = vmul.f32 %v1339, %v1323
        %v1356 = vmul.f32 %v1340, %v1324
        %v1357 = vmul.f32 %v1341, %v1325
        %v1358 = vmul.f32 %v1342, %v1326
        %v1359 = vmul.f32 %v1343, %v1327
        %v1360 = vmul.f32 %v1344, %v1328
        %v1361 = vmul.f32 %v1345, %v1329
        %v1362 = vmul.f32 %v1346, %v1330
        %v1363 = vmul.f32 %v1347, %v1331
        %v1364 = vmul.f32 %v1348, %v1332
        %v1365 = vmul.f32 %v1174, %v1349
        %v1366 = vmul.f32 %v1176, %v1349
        %v1367 = vmul.f32 %v1178, %v1350
        %v1368 = vmul.f32 %v1180, %v1350
        %v1369 = vmul.f32 %v1182, %v1351
        %v1370 = vmul.f32 %v1184, %v1351
        %v1371 = vmul.f32 %v1186, %v1352
        %v1372 = vmul.f32 %v1188, %v1352
        %v1373 = vmul.f32 %v1190, %v1353
        %v1374 = vmul.f32 %v1192, %v1353
        %v1375 = vmul.f32 %v1194, %v1354
        %v1376 = vmul.f32 %v1196, %v1354
        %v1377 = vmul.f32 %v1198, %v1355
        %v1378 = vmul.f32 %v1200, %v1355
        %v1379 = vmul.f32 %v1202, %v1356
        %v1380 = vmul.f32 %v1204, %v1356
        %v1381 = vmul.f32 %v1206, %v1357
        %v1382 = vmul.f32 %v1208, %v1357
        %v1383 = vmul.f32 %v1210, %v1358
        %v1384 = vmul.f32 %v1212, %v1358
        %v1385 = vmul.f32 %v1214, %v1359
        %v1386 = vmul.f32 %v1216, %v1359
        %v1387 = vmul.f32 %v1218, %v1360
        %v1388 = vmul.f32 %v1220, %v1360
        %v1389 = vmul.f32 %v1222, %v1361
        %v1390 = vmul.f32 %v1224, %v1361
        %v1391 = vmul.f32 %v1226, %v1362
        %v1392 = vmul.f32 %v1228, %v1362
        %v1393 = vmul.f32 %v1230, %v1363
        %v1394 = vmul.f32 %v1232, %v1363
        %v1395 = vmul.f32 %v1234, %v1364
        %v1396 = vmul.f32 %v1236, %v1364
        %v1397 = vpack.c.bf16 %v1367, %v1365
        %v1398 = vpack.c.bf16 %v1368, %v1366
        %v1399 = vpack.c.bf16 %v1371, %v1369
        %v1400 = vpack.c.bf16 %v1372, %v1370
        %v1401 = vpack.c.bf16 %v1375, %v1373
        %v1402 = vpack.c.bf16 %v1376, %v1374
        %v1403 = vpack.c.bf16 %v1379, %v1377
        %v1404 = vpack.c.bf16 %v1380, %v1378
        %v1405 = vpack.c.bf16 %v1383, %v1381
        %v1406 = vpack.c.bf16 %v1384, %v1382
        %v1407 = vpack.c.bf16 %v1387, %v1385
        %v1408 = vpack.c.bf16 %v1388, %v1386
        %v1409 = vpack.c.bf16 %v1391, %v1389
        %v1410 = vpack.c.bf16 %v1392, %v1390
        %v1411 = vpack.c.bf16 %v1395, %v1393
        %v1412 = vpack.c.bf16 %v1396, %v1394
        %v1445 = vunpack.c.l.b16 %v679
        %v1446 = vunpack.c.l.b16 %v680
        %v1447 = vunpack.c.l.b16 %v681
        %v1448 = vunpack.c.l.b16 %v682
        %v1449 = vunpack.c.l.b16 %v683
        %v1450 = vunpack.c.l.b16 %v684
        %v1451 = vunpack.c.l.b16 %v685
        %v1452 = vunpack.c.l.b16 %v686
        %v1453 = vunpack.c.l.b16 %v687
        %v1454 = vunpack.c.l.b16 %v688
        %v1455 = vunpack.c.l.b16 %v689
        %v1456 = vunpack.c.l.b16 %v690
        %v1457 = vunpack.c.l.b16 %v691
        %v1458 = vunpack.c.l.b16 %v692
        %v1459 = vunpack.c.l.b16 %v693
        %v1460 = vunpack.c.l.b16 %v694
        %v1461 = vunpack.c.l.b16 %v695
        %v1462 = vunpack.c.l.b16 %v696
        %v1463 = vunpack.c.l.b16 %v697
        %v1464 = vunpack.c.l.b16 %v698
        %v1465 = vunpack.c.l.b16 %v699
        %v1466 = vunpack.c.l.b16 %v700
        %v1467 = vunpack.c.l.b16 %v701
        %v1468 = vunpack.c.l.b16 %v702
        %v1469 = vunpack.c.l.b16 %v703
        %v1470 = vunpack.c.l.b16 %v704
        %v1471 = vunpack.c.l.b16 %v705
        %v1472 = vunpack.c.l.b16 %v706
        %v1473 = vunpack.c.l.b16 %v707
        %v1474 = vunpack.c.l.b16 %v708
        %v1475 = vunpack.c.l.b16 %v709
        %v1476 = vunpack.c.l.b16 %v710
        %v1477 = vpack.c.b16 %v1446, %v1445
        %v1478 = vpack.c.b16 %v1448, %v1447
        %v1479 = vpack.c.b16 %v1450, %v1449
        %v1480 = vpack.c.b16 %v1452, %v1451
        %v1481 = vpack.c.b16 %v1454, %v1453
        %v1482 = vpack.c.b16 %v1456, %v1455
        %v1483 = vpack.c.b16 %v1458, %v1457
        %v1484 = vpack.c.b16 %v1460, %v1459
        %v1485 = vpack.c.b16 %v1462, %v1461
        %v1486 = vpack.c.b16 %v1464, %v1463
        %v1487 = vpack.c.b16 %v1466, %v1465
        %v1488 = vpack.c.b16 %v1468, %v1467
        %v1489 = vpack.c.b16 %v1470, %v1469
        %v1490 = vpack.c.b16 %v1472, %v1471
        %v1491 = vpack.c.b16 %v1474, %v1473
        %v1492 = vpack.c.b16 %v1476, %v1475
        %1509 = vmatprep.subr.bf16.mxu0 0
        %1510 = vmatpush1.bf16.msra.mxu0 %v1477
        %1511 = vmatprep.subr.bf16.mxu0 0
        %1512 = vmatpush1.bf16.msra.mxu0 %v1478
        %1513 = vmatprep.subr.bf16.mxu0 0
        %1514 = vmatpush1.bf16.msra.mxu0 %v1479
        %1515 = vmatprep.subr.bf16.mxu0 0
        %1516 = vmatpush1.bf16.msra.mxu0 %v1480
        %1517 = vmatprep.subr.bf16.mxu0 0
        %1518 = vmatpush1.bf16.msra.mxu0 %v1481
        %1519 = vmatprep.subr.bf16.mxu0 0
        %1520 = vmatpush1.bf16.msra.mxu0 %v1482
        %1521 = vmatprep.subr.bf16.mxu0 0
        %1522 = vmatpush1.bf16.msra.mxu0 %v1483
        %1523 = vmatprep.subr.bf16.mxu0 0
        %1524 = vmatpush1.bf16.msra.mxu0 %v1484
        %1525 = vmatprep.subr.bf16.mxu0 0
        %1526 = vmatpush1.bf16.msra.mxu0 %v1485
        %1527 = vmatprep.subr.bf16.mxu0 0
        %1528 = vmatpush1.bf16.msra.mxu0 %v1486
        %1529 = vmatprep.subr.bf16.mxu0 0
        %1530 = vmatpush1.bf16.msra.mxu0 %v1487
        %1531 = vmatprep.subr.bf16.mxu0 0
        %1532 = vmatpush1.bf16.msra.mxu0 %v1488
        %1533 = vmatprep.subr.bf16.mxu0 0
        %1534 = vmatpush1.bf16.msra.mxu0 %v1489
        %1535 = vmatprep.subr.bf16.mxu0 0
        %1536 = vmatpush1.bf16.msra.mxu0 %v1490
        %1537 = vmatprep.subr.bf16.mxu0 0
        %1538 = vmatpush1.bf16.msra.mxu0 %v1491
        %1539 = vmatprep.subr.bf16.mxu0 0
        %1540 = vmatpush1.bf16.msra.mxu0 %v1492
        %1541 = vmatprep.mubr.bf16.mxu0 %v1398
        %1542 = vmatmul.mubr.bf16.gmra.mrb[0].mxu0 %v1397
        %v1543 = vpop.f32.mrb[0].mxu0
        %v1544 = vadd.f32 0.0, %v1543
        %v1545 = vpop.f32.mrb[0].mxu0
        %v1546 = vpop.f32.mrb[0].mxu0
        %v1547 = vadd.f32 0.0, %v1546
        %v1548 = vpop.f32.mrb[0].mxu0
        %1549 = vmatprep.mubr.bf16.mxu0 %v1400
        %1550 = vmatmul.mubr.bf16.gmra.mrb[0].mxu0 %v1399
        %v1551 = vpop.f32.mrb[0].mxu0
        %v1552 = vadd.f32 0.0, %v1551
        %v1553 = vpop.f32.mrb[0].mxu0
        %v1554 = vpop.f32.mrb[0].mxu0
        %v1555 = vadd.f32 0.0, %v1554
        %v1556 = vpop.f32.mrb[0].mxu0
        %1557 = vmatprep.mubr.bf16.mxu0 %v1402
        %1558 = vmatmul.mubr.bf16.gmra.mrb[0].mxu0 %v1401
        %v1559 = vpop.f32.mrb[0].mxu0
        %v1560 = vadd.f32 0.0, %v1559
        %v1561 = vpop.f32.mrb[0].mxu0
        %v1562 = vpop.f32.mrb[0].mxu0
        %v1563 = vadd.f32 0.0, %v1562
        %v1564 = vpop.f32.mrb[0].mxu0
        %1565 = vmatprep.mubr.bf16.mxu0 %v1404
        %1566 = vmatmul.mubr.bf16.gmra.mrb[0].mxu0 %v1403
        %v1567 = vpop.f32.mrb[0].mxu0
        %v1568 = vadd.f32 0.0, %v1567
        %v1569 = vpop.f32.mrb[0].mxu0
        %v1570 = vpop.f32.mrb[0].mxu0
        %v1571 = vadd.f32 0.0, %v1570
        %v1572 = vpop.f32.mrb[0].mxu0
        %1573 = vmatprep.mubr.bf16.mxu0 %v1406
        %1574 = vmatmul.mubr.bf16.gmra.mrb[0].mxu0 %v1405
        %v1575 = vpop.f32.mrb[0].mxu0
        %v1576 = vadd.f32 0.0, %v1575
        %v1577 = vpop.f32.mrb[0].mxu0
        %v1578 = vpop.f32.mrb[0].mxu0
        %v1579 = vadd.f32 0.0, %v1578
        %v1580 = vpop.f32.mrb[0].mxu0
        %1581 = vmatprep.mubr.bf16.mxu0 %v1408
        %1582 = vmatmul.mubr.bf16.gmra.mrb[0].mxu0 %v1407
        %v1583 = vpop.f32.mrb[0].mxu0
        %v1584 = vadd.f32 0.0, %v1583
        %v1585 = vpop.f32.mrb[0].mxu0
        %v1586 = vpop.f32.mrb[0].mxu0
        %v1587 = vadd.f32 0.0, %v1586
        %v1588 = vpop.f32.mrb[0].mxu0
        %1589 = vmatprep.mubr.bf16.mxu0 %v1410
        %1590 = vmatmul.mubr.bf16.gmra.mrb[0].mxu0 %v1409
        %v1591 = vpop.f32.mrb[0].mxu0
        %v1592 = vadd.f32 0.0, %v1591
        %v1593 = vpop.f32.mrb[0].mxu0
        %v1594 = vpop.f32.mrb[0].mxu0
        %v1595 = vadd.f32 0.0, %v1594
        %v1596 = vpop.f32.mrb[0].mxu0
        %1597 = vmatprep.mubr.bf16.mxu0 %v1412
        %1598 = vmatmul.mubr.bf16.gmra.mrb[0].mxu0 %v1411
        %v1599 = vpop.f32.mrb[0].mxu0
        %v1600 = vadd.f32 0.0, %v1599
        %v1601 = vpop.f32.mrb[0].mxu0
        %v1602 = vpop.f32.mrb[0].mxu0
        %v1603 = vadd.f32 0.0, %v1602
        %v1604 = vpop.f32.mrb[0].mxu0
        %1605 = vdwg.mxu0
        %v1606 = vunpack.c.l.bf16 %v711
        %v1607 = vlaneseq
        %v1608 = vshrl.u32 %v1607, 7
        %v1609 = vsub.s32 0, %v1608
        %v1610 = vrot.slane %v1606, %v1609
        %v1611 = vmul.f32 %v1544, %v1610
        %v1612 = vmul.f32 %v1547, %v1610
        %v1613 = vmul.f32 %v1552, %v1610
        %v1614 = vmul.f32 %v1555, %v1610
        %v1615 = vmul.f32 %v1560, %v1610
        %v1616 = vmul.f32 %v1563, %v1610
        %v1617 = vmul.f32 %v1568, %v1610
        %v1618 = vmul.f32 %v1571, %v1610
        %v1619 = vmul.f32 %v1576, %v1610
        %v1620 = vmul.f32 %v1579, %v1610
        %v1621 = vmul.f32 %v1584, %v1610
        %v1622 = vmul.f32 %v1587, %v1610
        %v1623 = vmul.f32 %v1592, %v1610
        %v1624 = vmul.f32 %v1595, %v1610
        %v1625 = vmul.f32 %v1600, %v1610
        %v1626 = vmul.f32 %v1603, %v1610
        %v1627 = vadd.f32 %v1611, 0.0
        %v1628 = vadd.f32 %v1612, 0.0
        %v1629 = vadd.f32 %v1613, 0.0
        %v1630 = vadd.f32 %v1614, 0.0
        %v1631 = vadd.f32 %v1615, 0.0
        %v1632 = vadd.f32 %v1616, 0.0
        %v1633 = vadd.f32 %v1617, 0.0
        %v1634 = vadd.f32 %v1618, 0.0
        %v1635 = vadd.f32 %v1619, 0.0
        %v1636 = vadd.f32 %v1620, 0.0
        %v1637 = vadd.f32 %v1621, 0.0
        %v1638 = vadd.f32 %v1622, 0.0
        %v1639 = vadd.f32 %v1623, 0.0
        %v1640 = vadd.f32 %v1624, 0.0
        %v1641 = vadd.f32 %v1625, 0.0
        %v1642 = vadd.f32 %v1626, 0.0
        %s1643 = scalar_lea.vmem %s5, 1
        %v1644 = vld [vmem:[%s1643] sm:$0x1]
        %v1646 = vpack.i.b16 %v1644, %v1644
        %v1648 = vlaneseq
        %v1649 = vshrl.u32 %v1648, 7
        %v1650 = vsub.s32 0, %v1649
        %v1651 = vrot.slane %v1646, %v1650
        %v1653 = vunpack.c.l.b16 %v1651
        %v1654 = vpack.c.b16 %v1653, %v1653
        %v1656 = vmul.bf16 %v631, %v1654
        %v1657 = vmul.bf16 %v632, %v1654
        %v1658 = vmul.bf16 %v633, %v1654
        %v1659 = vmul.bf16 %v634, %v1654
        %v1660 = vmul.bf16 %v635, %v1654
        %v1661 = vmul.bf16 %v636, %v1654
        %v1662 = vmul.bf16 %v637, %v1654
        %v1663 = vmul.bf16 %v638, %v1654
        %v1664 = vmul.bf16 %v639, %v1654
        %v1665 = vmul.bf16 %v640, %v1654
        %v1666 = vmul.bf16 %v641, %v1654
        %v1667 = vmul.bf16 %v642, %v1654
        %v1668 = vmul.bf16 %v643, %v1654
        %v1669 = vmul.bf16 %v644, %v1654
        %v1670 = vmul.bf16 %v645, %v1654
        %v1671 = vmul.bf16 %v646, %v1654
        %s1672 = scalar_lea.vmem %s536, 128 [#allocation2]
        %v1673 = vld [vmem:[%s1672] sm:$0xff]
        %v1674 = vld [vmem:[%s1672 + $0x8] sm:$0xff]
        %v1675 = vld [vmem:[%s1672 + $0x10] sm:$0xff]
        %v1676 = vld [vmem:[%s1672 + $0x18] sm:$0xff]
        %v1677 = vld [vmem:[%s1672 + $0x20] sm:$0xff]
        %v1678 = vld [vmem:[%s1672 + $0x28] sm:$0xff]
        %v1679 = vld [vmem:[%s1672 + $0x30] sm:$0xff]
        %v1680 = vld [vmem:[%s1672 + $0x38] sm:$0xff]
        %v1681 = vld [vmem:[%s1672 + $0x40] sm:$0xff]
        %v1682 = vld [vmem:[%s1672 + $0x48] sm:$0xff]
        %v1683 = vld [vmem:[%s1672 + $0x50] sm:$0xff]
        %v1684 = vld [vmem:[%s1672 + $0x58] sm:$0xff]
        %v1685 = vld [vmem:[%s1672 + $0x60] sm:$0xff]
        %v1686 = vld [vmem:[%s1672 + $0x68] sm:$0xff]
        %v1687 = vld [vmem:[%s1672 + $0x70] sm:$0xff]
        %v1688 = vld [vmem:[%s1672 + $0x78] sm:$0xff]
        %v1689 = vunpack.c.l.bf16 %v1673
        %v1690 = vunpack.c.h.bf16 %v1673
        %v1691 = vunpack.c.l.bf16 %v1674
        %v1692 = vunpack.c.h.bf16 %v1674
        %v1693 = vunpack.c.l.bf16 %v1675
        %v1694 = vunpack.c.h.bf16 %v1675
        %v1695 = vunpack.c.l.bf16 %v1676
        %v1696 = vunpack.c.h.bf16 %v1676
        %v1697 = vunpack.c.l.bf16 %v1677
        %v1698 = vunpack.c.h.bf16 %v1677
        %v1699 = vunpack.c.l.bf16 %v1678
        %v1700 = vunpack.c.h.bf16 %v1678
        %v1701 = vunpack.c.l.bf16 %v1679
        %v1702 = vunpack.c.h.bf16 %v1679
        %v1703 = vunpack.c.l.bf16 %v1680
        %v1704 = vunpack.c.h.bf16 %v1680
        %v1705 = vunpack.c.l.bf16 %v1681
        %v1706 = vunpack.c.h.bf16 %v1681
        %v1707 = vunpack.c.l.bf16 %v1682
        %v1708 = vunpack.c.h.bf16 %v1682
        %v1709 = vunpack.c.l.bf16 %v1683
        %v1710 = vunpack.c.h.bf16 %v1683
        %v1711 = vunpack.c.l.bf16 %v1684
        %v1712 = vunpack.c.h.bf16 %v1684
        %v1713 = vunpack.c.l.bf16 %v1685
        %v1714 = vunpack.c.h.bf16 %v1685
        %v1715 = vunpack.c.l.bf16 %v1686
        %v1716 = vunpack.c.h.bf16 %v1686
        %v1717 = vunpack.c.l.bf16 %v1687
        %v1718 = vunpack.c.h.bf16 %v1687
        %v1719 = vunpack.c.l.bf16 %v1688
        %v1720 = vunpack.c.h.bf16 %v1688
        %v1737 = vunpack.c.l.b16 %v1656
        %v1738 = vunpack.c.l.b16 %v1657
        %v1739 = vunpack.c.l.b16 %v1658
        %v1740 = vunpack.c.l.b16 %v1659
        %v1741 = vunpack.c.l.b16 %v1660
        %v1742 = vunpack.c.l.b16 %v1661
        %v1743 = vunpack.c.l.b16 %v1662
        %v1744 = vunpack.c.l.b16 %v1663
        %v1745 = vunpack.c.l.b16 %v1664
        %v1746 = vunpack.c.l.b16 %v1665
        %v1747 = vunpack.c.l.b16 %v1666
        %v1748 = vunpack.c.l.b16 %v1667
        %v1749 = vunpack.c.l.b16 %v1668
        %v1750 = vunpack.c.l.b16 %v1669
        %v1751 = vunpack.c.l.b16 %v1670
        %v1752 = vunpack.c.l.b16 %v1671
        %v1753 = vpack.c.b16 %v1738, %v1737
        %v1754 = vpack.c.b16 %v1740, %v1739
        %v1755 = vpack.c.b16 %v1742, %v1741
        %v1756 = vpack.c.b16 %v1744, %v1743
        %v1757 = vpack.c.b16 %v1746, %v1745
        %v1758 = vpack.c.b16 %v1748, %v1747
        %v1759 = vpack.c.b16 %v1750, %v1749
        %v1760 = vpack.c.b16 %v1752, %v1751
        %v1762 = vsel %vm907, %v1753, 0
        %v1765 = vsel %vm907, %v1754, 0
        %v1768 = vsel %vm907, %v1755, 0
        %v1771 = vsel %vm907, %v1756, 0
        %v1774 = vsel %vm907, %v1757, 0
        %v1777 = vsel %vm907, %v1758, 0
        %v1780 = vsel %vm907, %v1759, 0
        %v1783 = vsel %vm907, %v1760, 0
        %1785 = vmatprep.subr.bf16.mxu0 0
        %1786 = vmatpush1.bf16.xpose.msra.mxu0 %v933
        %1787 = vmatprep.subr.bf16.mxu0 0
        %1788 = vmatpush1.bf16.xpose.msra.mxu0 %v936
        %1789 = vmatprep.subr.bf16.mxu0 0
        %1790 = vmatpush1.bf16.xpose.msra.mxu0 %v939
        %1791 = vmatprep.subr.bf16.mxu0 0
        %1792 = vmatpush1.bf16.xpose.msra.mxu0 %v942
        %1793 = vmatprep.subr.bf16.mxu0 0
        %1794 = vmatpush1.bf16.xpose.msra.mxu0 %v945
        %1795 = vmatprep.subr.bf16.mxu0 0
        %1796 = vmatpush1.bf16.xpose.msra.mxu0 %v948
        %1797 = vmatprep.subr.bf16.mxu0 0
        %1798 = vmatpush1.bf16.xpose.msra.mxu0 %v951
        %1799 = vmatprep.subr.bf16.mxu0 0
        %1800 = vmatpush1.bf16.xpose.msra.mxu0 %v954
        %1801 = vmatprep.subr.bf16.mxu0 0
        %1802 = vmatpush1.bf16.xpose.msra.mxu0 %v957
        %1803 = vmatprep.subr.bf16.mxu0 0
        %1804 = vmatpush1.bf16.xpose.msra.mxu0 %v960
        %1805 = vmatprep.subr.bf16.mxu0 0
        %1806 = vmatpush1.bf16.xpose.msra.mxu0 %v963
        %1807 = vmatprep.subr.bf16.mxu0 0
        %1808 = vmatpush1.bf16.xpose.msra.mxu0 %v966
        %1809 = vmatprep.subr.bf16.mxu0 0
        %1810 = vmatpush1.bf16.xpose.msra.mxu0 %v969
        %1811 = vmatprep.subr.bf16.mxu0 0
        %1812 = vmatpush1.bf16.xpose.msra.mxu0 %v972
        %1813 = vmatprep.subr.bf16.mxu0 0
        %1814 = vmatpush1.bf16.xpose.msra.mxu0 %v975
        %1815 = vmatprep.subr.bf16.mxu0 0
        %1816 = vmatpush1.bf16.xpose.msra.mxu0 %v978
        %1817 = vmatprep.mubr.bf16.mxu0 0
        %1818 = vmatmul.mubr.bf16.gmra.mrb[0].mxu0 %v1762
        %v1819 = vpop.f32.mrb[0].mxu0
        %v1820 = vadd.f32 %v1689, %v1819
        %v1821 = vpop.f32.mrb[0].mxu0
        %v1822 = vadd.f32 %v1690, %v1821
        %v1823 = vpop.f32.mrb[0].mxu0
        %v1824 = vadd.f32 %v1691, %v1823
        %v1825 = vpop.f32.mrb[0].mxu0
        %v1826 = vadd.f32 %v1692, %v1825
        %1827 = vmatprep.mubr.bf16.mxu0 0
        %1828 = vmatmul.mubr.bf16.gmra.mrb[0].mxu0 %v1765
        %v1829 = vpop.f32.mrb[0].mxu0
        %v1830 = vadd.f32 %v1693, %v1829
        %v1831 = vpop.f32.mrb[0].mxu0
        %v1832 = vadd.f32 %v1694, %v1831
        %v1833 = vpop.f32.mrb[0].mxu0
        %v1834 = vadd.f32 %v1695, %v1833
        %v1835 = vpop.f32.mrb[0].mxu0
        %v1836 = vadd.f32 %v1696, %v1835
        %1837 = vmatprep.mubr.bf16.mxu0 0
        %1838 = vmatmul.mubr.bf16.gmra.mrb[0].mxu0 %v1768
        %v1839 = vpop.f32.mrb[0].mxu0
        %v1840 = vadd.f32 %v1697, %v1839
        %v1841 = vpop.f32.mrb[0].mxu0
        %v1842 = vadd.f32 %v1698, %v1841
        %v1843 = vpop.f32.mrb[0].mxu0
        %v1844 = vadd.f32 %v1699, %v1843
        %v1845 = vpop.f32.mrb[0].mxu0
        %v1846 = vadd.f32 %v1700, %v1845
        %1847 = vmatprep.mubr.bf16.mxu0 0
        %1848 = vmatmul.mubr.bf16.gmra.mrb[0].mxu0 %v1771
        %v1849 = vpop.f32.mrb[0].mxu0
        %v1850 = vadd.f32 %v1701, %v1849
        %v1851 = vpop.f32.mrb[0].mxu0
        %v1852 = vadd.f32 %v1702, %v1851
        %v1853 = vpop.f32.mrb[0].mxu0
        %v1854 = vadd.f32 %v1703, %v1853
        %v1855 = vpop.f32.mrb[0].mxu0
        %v1856 = vadd.f32 %v1704, %v1855
        %1857 = vmatprep.mubr.bf16.mxu0 0
        %1858 = vmatmul.mubr.bf16.gmra.mrb[0].mxu0 %v1774
        %v1859 = vpop.f32.mrb[0].mxu0
        %v1860 = vadd.f32 %v1705, %v1859
        %v1861 = vpop.f32.mrb[0].mxu0
        %v1862 = vadd.f32 %v1706, %v1861
        %v1863 = vpop.f32.mrb[0].mxu0
        %v1864 = vadd.f32 %v1707, %v1863
        %v1865 = vpop.f32.mrb[0].mxu0
        %v1866 = vadd.f32 %v1708, %v1865
        %1867 = vmatprep.mubr.bf16.mxu0 0
        %1868 = vmatmul.mubr.bf16.gmra.mrb[0].mxu0 %v1777
        %v1869 = vpop.f32.mrb[0].mxu0
        %v1870 = vadd.f32 %v1709, %v1869
        %v1871 = vpop.f32.mrb[0].mxu0
        %v1872 = vadd.f32 %v1710, %v1871
        %v1873 = vpop.f32.mrb[0].mxu0
        %v1874 = vadd.f32 %v1711, %v1873
        %v1875 = vpop.f32.mrb[0].mxu0
        %v1876 = vadd.f32 %v1712, %v1875
        %1877 = vmatprep.mubr.bf16.mxu0 0
        %1878 = vmatmul.mubr.bf16.gmra.mrb[0].mxu0 %v1780
        %v1879 = vpop.f32.mrb[0].mxu0
        %v1880 = vadd.f32 %v1713, %v1879
        %v1881 = vpop.f32.mrb[0].mxu0
        %v1882 = vadd.f32 %v1714, %v1881
        %v1883 = vpop.f32.mrb[0].mxu0
        %v1884 = vadd.f32 %v1715, %v1883
        %v1885 = vpop.f32.mrb[0].mxu0
        %v1886 = vadd.f32 %v1716, %v1885
        %1887 = vmatprep.mubr.bf16.mxu0 0
        %1888 = vmatmul.mubr.bf16.gmra.mrb[0].mxu0 %v1783
        %v1889 = vpop.f32.mrb[0].mxu0
        %v1890 = vadd.f32 %v1717, %v1889
        %v1891 = vpop.f32.mrb[0].mxu0
        %v1892 = vadd.f32 %v1718, %v1891
        %v1893 = vpop.f32.mrb[0].mxu0
        %v1894 = vadd.f32 %v1719, %v1893
        %v1895 = vpop.f32.mrb[0].mxu0
        %v1896 = vadd.f32 %v1720, %v1895
        %1897 = vdwg.mxu0
        %v1898 = vmax.f32 %v1820, %v1822
        %1899 = vmax.xlane.f32.xlu0 %v1898
        %v1900 = vpop.xlane.xlu0 %1899
        %v1901 = vmax.f32 %v1824, %v1826
        %1902 = vmax.xlane.f32.xlu0 %v1901
        %v1903 = vpop.xlane.xlu0 %1902
        %v1904 = vmax.f32 %v1830, %v1832
        %1905 = vmax.xlane.f32.xlu0 %v1904
        %v1906 = vpop.xlane.xlu0 %1905
        %v1907 = vmax.f32 %v1834, %v1836
        %1908 = vmax.xlane.f32.xlu0 %v1907
        %v1909 = vpop.xlane.xlu0 %1908
        %v1910 = vmax.f32 %v1840, %v1842
        %1911 = vmax.xlane.f32.xlu0 %v1910
        %v1912 = vpop.xlane.xlu0 %1911
        %v1913 = vmax.f32 %v1844, %v1846
        %1914 = vmax.xlane.f32.xlu0 %v1913
        %v1915 = vpop.xlane.xlu0 %1914
        %v1916 = vmax.f32 %v1850, %v1852
        %1917 = vmax.xlane.f32.xlu0 %v1916
        %v1918 = vpop.xlane.xlu0 %1917
        %v1919 = vmax.f32 %v1854, %v1856
        %1920 = vmax.xlane.f32.xlu0 %v1919
        %v1921 = vpop.xlane.xlu0 %1920
        %v1922 = vmax.f32 %v1860, %v1862
        %1923 = vmax.xlane.f32.xlu0 %v1922
        %v1924 = vpop.xlane.xlu0 %1923
        %v1925 = vmax.f32 %v1864, %v1866
        %1926 = vmax.xlane.f32.xlu0 %v1925
        %v1927 = vpop.xlane.xlu0 %1926
        %v1928 = vmax.f32 %v1870, %v1872
        %1929 = vmax.xlane.f32.xlu0 %v1928
        %v1930 = vpop.xlane.xlu0 %1929
        %v1931 = vmax.f32 %v1874, %v1876
        %1932 = vmax.xlane.f32.xlu0 %v1931
        %v1933 = vpop.xlane.xlu0 %1932
        %v1934 = vmax.f32 %v1880, %v1882
        %1935 = vmax.xlane.f32.xlu0 %v1934
        %v1936 = vpop.xlane.xlu0 %1935
        %v1937 = vmax.f32 %v1884, %v1886
        %1938 = vmax.xlane.f32.xlu0 %v1937
        %v1939 = vpop.xlane.xlu0 %1938
        %v1940 = vmax.f32 %v1890, %v1892
        %1941 = vmax.xlane.f32.xlu0 %v1940
        %v1942 = vpop.xlane.xlu0 %1941
        %v1943 = vmax.f32 %v1894, %v1896
        %1944 = vmax.xlane.f32.xlu0 %v1943
        %v1945 = vpop.xlane.xlu0 %1944
        %v1946 = vsub.f32 %v1820, %v1900
        %v1947 = vsub.f32 %v1822, %v1900
        %v1948 = vsub.f32 %v1824, %v1903
        %v1949 = vsub.f32 %v1826, %v1903
        %v1950 = vsub.f32 %v1830, %v1906
        %v1951 = vsub.f32 %v1832, %v1906
        %v1952 = vsub.f32 %v1834, %v1909
        %v1953 = vsub.f32 %v1836, %v1909
        %v1954 = vsub.f32 %v1840, %v1912
        %v1955 = vsub.f32 %v1842, %v1912
        %v1956 = vsub.f32 %v1844, %v1915
        %v1957 = vsub.f32 %v1846, %v1915
        %v1958 = vsub.f32 %v1850, %v1918
        %v1959 = vsub.f32 %v1852, %v1918
        %v1960 = vsub.f32 %v1854, %v1921
        %v1961 = vsub.f32 %v1856, %v1921
        %v1962 = vsub.f32 %v1860, %v1924
        %v1963 = vsub.f32 %v1862, %v1924
        %v1964 = vsub.f32 %v1864, %v1927
        %v1965 = vsub.f32 %v1866, %v1927
        %v1966 = vsub.f32 %v1870, %v1930
        %v1967 = vsub.f32 %v1872, %v1930
        %v1968 = vsub.f32 %v1874, %v1933
        %v1969 = vsub.f32 %v1876, %v1933
        %v1970 = vsub.f32 %v1880, %v1936
        %v1971 = vsub.f32 %v1882, %v1936
        %v1972 = vsub.f32 %v1884, %v1939
        %v1973 = vsub.f32 %v1886, %v1939
        %v1974 = vsub.f32 %v1890, %v1942
        %v1975 = vsub.f32 %v1892, %v1942
        %v1976 = vsub.f32 %v1894, %v1945
        %v1977 = vsub.f32 %v1896, %v1945
        %v1978 = vmul.f32 %v1946, 1.442695
        %v1979 = vpow.pop %v1978
        %v1980 = vmul.f32 %v1947, 1.442695
        %v1981 = vpow.pop %v1980
        %v1982 = vmul.f32 %v1948, 1.442695
        %v1983 = vpow.pop %v1982
        %v1984 = vmul.f32 %v1949, 1.442695
        %v1985 = vpow.pop %v1984
        %v1986 = vmul.f32 %v1950, 1.442695
        %v1987 = vpow.pop %v1986
        %v1988 = vmul.f32 %v1951, 1.442695
        %v1989 = vpow.pop %v1988
        %v1990 = vmul.f32 %v1952, 1.442695
        %v1991 = vpow.pop %v1990
        %v1992 = vmul.f32 %v1953, 1.442695
        %v1993 = vpow.pop %v1992
        %v1994 = vmul.f32 %v1954, 1.442695
        %v1995 = vpow.pop %v1994
        %v1996 = vmul.f32 %v1955, 1.442695
        %v1997 = vpow.pop %v1996
        %v1998 = vmul.f32 %v1956, 1.442695
        %v1999 = vpow.pop %v1998
        %v2000 = vmul.f32 %v1957, 1.442695
        %v2001 = vpow.pop %v2000
        %v2002 = vmul.f32 %v1958, 1.442695
        %v2003 = vpow.pop %v2002
        %v2004 = vmul.f32 %v1959, 1.442695
        %v2005 = vpow.pop %v2004
        %v2006 = vmul.f32 %v1960, 1.442695
        %v2007 = vpow.pop %v2006
        %v2008 = vmul.f32 %v1961, 1.442695
        %v2009 = vpow.pop %v2008
        %v2010 = vmul.f32 %v1962, 1.442695
        %v2011 = vpow.pop %v2010
        %v2012 = vmul.f32 %v1963, 1.442695
        %v2013 = vpow.pop %v2012
        %v2014 = vmul.f32 %v1964, 1.442695
        %v2015 = vpow.pop %v2014
        %v2016 = vmul.f32 %v1965, 1.442695
        %v2017 = vpow.pop %v2016
        %v2018 = vmul.f32 %v1966, 1.442695
        %v2019 = vpow.pop %v2018
        %v2020 = vmul.f32 %v1967, 1.442695
        %v2021 = vpow.pop %v2020
        %v2022 = vmul.f32 %v1968, 1.442695
        %v2023 = vpow.pop %v2022
        %v2024 = vmul.f32 %v1969, 1.442695
        %v2025 = vpow.pop %v2024
        %v2026 = vmul.f32 %v1970, 1.442695
        %v2027 = vpow.pop %v2026
        %v2028 = vmul.f32 %v1971, 1.442695
        %v2029 = vpow.pop %v2028
        %v2030 = vmul.f32 %v1972, 1.442695
        %v2031 = vpow.pop %v2030
        %v2032 = vmul.f32 %v1973, 1.442695
        %v2033 = vpow.pop %v2032
        %v2034 = vmul.f32 %v1974, 1.442695
        %v2035 = vpow.pop %v2034
        %v2036 = vmul.f32 %v1975, 1.442695
        %v2037 = vpow.pop %v2036
        %v2038 = vmul.f32 %v1976, 1.442695
        %v2039 = vpow.pop %v2038
        %v2040 = vmul.f32 %v1977, 1.442695
        %v2041 = vpow.pop %v2040
        %v2042 = vadd.f32 %v1979, %v1981
        %2043 = vadd.xlane.f32.xlu0 %v2042
        %v2044 = vpop.xlane.xlu0 %2043
        %v2045 = vadd.f32 %v1983, %v1985
        %2046 = vadd.xlane.f32.xlu0 %v2045
        %v2047 = vpop.xlane.xlu0 %2046
        %v2048 = vadd.f32 %v1987, %v1989
        %2049 = vadd.xlane.f32.xlu0 %v2048
        %v2050 = vpop.xlane.xlu0 %2049
        %v2051 = vadd.f32 %v1991, %v1993
        %2052 = vadd.xlane.f32.xlu0 %v2051
        %v2053 = vpop.xlane.xlu0 %2052
        %v2054 = vadd.f32 %v1995, %v1997
        %2055 = vadd.xlane.f32.xlu0 %v2054
        %v2056 = vpop.xlane.xlu0 %2055
        %v2057 = vadd.f32 %v1999, %v2001
        %2058 = vadd.xlane.f32.xlu0 %v2057
        %v2059 = vpop.xlane.xlu0 %2058
        %v2060 = vadd.f32 %v2003, %v2005
        %2061 = vadd.xlane.f32.xlu0 %v2060
        %v2062 = vpop.xlane.xlu0 %2061
        %v2063 = vadd.f32 %v2007, %v2009
        %2064 = vadd.xlane.f32.xlu0 %v2063
        %v2065 = vpop.xlane.xlu0 %2064
        %v2066 = vadd.f32 %v2011, %v2013
        %2067 = vadd.xlane.f32.xlu0 %v2066
        %v2068 = vpop.xlane.xlu0 %2067
        %v2069 = vadd.f32 %v2015, %v2017
        %2070 = vadd.xlane.f32.xlu0 %v2069
        %v2071 = vpop.xlane.xlu0 %2070
        %v2072 = vadd.f32 %v2019, %v2021
        %2073 = vadd.xlane.f32.xlu0 %v2072
        %v2074 = vpop.xlane.xlu0 %2073
        %v2075 = vadd.f32 %v2023, %v2025
        %2076 = vadd.xlane.f32.xlu0 %v2075
        %v2077 = vpop.xlane.xlu0 %2076
        %v2078 = vadd.f32 %v2027, %v2029
        %2079 = vadd.xlane.f32.xlu0 %v2078
        %v2080 = vpop.xlane.xlu0 %2079
        %v2081 = vadd.f32 %v2031, %v2033
        %2082 = vadd.xlane.f32.xlu0 %v2081
        %v2083 = vpop.xlane.xlu0 %2082
        %v2084 = vadd.f32 %v2035, %v2037
        %2085 = vadd.xlane.f32.xlu0 %v2084
        %v2086 = vpop.xlane.xlu0 %2085
        %v2087 = vadd.f32 %v2039, %v2041
        %2088 = vadd.xlane.f32.xlu0 %v2087
        %v2089 = vpop.xlane.xlu0 %2088
        %vm2090 = vcmp.gt.f32.partialorder %v1900, -5e+29
        %vm2091 = vcmp.gt.f32.partialorder %v1903, -5e+29
        %vm2092 = vcmp.gt.f32.partialorder %v1906, -5e+29
        %vm2093 = vcmp.gt.f32.partialorder %v1909, -5e+29
        %vm2094 = vcmp.gt.f32.partialorder %v1912, -5e+29
        %vm2095 = vcmp.gt.f32.partialorder %v1915, -5e+29
        %vm2096 = vcmp.gt.f32.partialorder %v1918, -5e+29
        %vm2097 = vcmp.gt.f32.partialorder %v1921, -5e+29
        %vm2098 = vcmp.gt.f32.partialorder %v1924, -5e+29
        %vm2099 = vcmp.gt.f32.partialorder %v1927, -5e+29
        %vm2100 = vcmp.gt.f32.partialorder %v1930, -5e+29
        %vm2101 = vcmp.gt.f32.partialorder %v1933, -5e+29
        %vm2102 = vcmp.gt.f32.partialorder %v1936, -5e+29
        %vm2103 = vcmp.gt.f32.partialorder %v1939, -5e+29
        %vm2104 = vcmp.gt.f32.partialorder %v1942, -5e+29
        %vm2105 = vcmp.gt.f32.partialorder %v1945, -5e+29
        %v2106 = vsel %vm2090, 1, 0
        %v2107 = vsel %vm2091, 1, 0
        %v2108 = vsel %vm2092, 1, 0
        %v2109 = vsel %vm2093, 1, 0
        %v2110 = vsel %vm2094, 1, 0
        %v2111 = vsel %vm2095, 1, 0
        %v2112 = vsel %vm2096, 1, 0
        %v2113 = vsel %vm2097, 1, 0
        %v2114 = vsel %vm2098, 1, 0
        %v2115 = vsel %vm2099, 1, 0
        %v2116 = vsel %vm2100, 1, 0
        %v2117 = vsel %vm2101, 1, 0
        %v2118 = vsel %vm2102, 1, 0
        %v2119 = vsel %vm2103, 1, 0
        %v2120 = vsel %vm2104, 1, 0
        %v2121 = vsel %vm2105, 1, 0
        %v2122 = vcvt.s32.f32 %v2106
        %v2123 = vcvt.s32.f32 %v2107
        %v2124 = vcvt.s32.f32 %v2108
        %v2125 = vcvt.s32.f32 %v2109
        %v2126 = vcvt.s32.f32 %v2110
        %v2127 = vcvt.s32.f32 %v2111
        %v2128 = vcvt.s32.f32 %v2112
        %v2129 = vcvt.s32.f32 %v2113
        %v2130 = vcvt.s32.f32 %v2114
        %v2131 = vcvt.s32.f32 %v2115
        %v2132 = vcvt.s32.f32 %v2116
        %v2133 = vcvt.s32.f32 %v2117
        %v2134 = vcvt.s32.f32 %v2118
        %v2135 = vcvt.s32.f32 %v2119
        %v2136 = vcvt.s32.f32 %v2120
        %v2137 = vcvt.s32.f32 %v2121
        %v2138 = vrcp.pop %v2044
        %v2139 = vrcp.pop %v2047
        %v2140 = vrcp.pop %v2050
        %v2141 = vrcp.pop %v2053
        %v2142 = vrcp.pop %v2056
        %v2143 = vrcp.pop %v2059
        %v2144 = vrcp.pop %v2062
        %v2145 = vrcp.pop %v2065
        %v2146 = vrcp.pop %v2068
        %v2147 = vrcp.pop %v2071
        %v2148 = vrcp.pop %v2074
        %v2149 = vrcp.pop %v2077
        %v2150 = vrcp.pop %v2080
        %v2151 = vrcp.pop %v2083
        %v2152 = vrcp.pop %v2086
        %v2153 = vrcp.pop %v2089
        %v2154 = vmul.f32 %v2138, %v2122
        %v2155 = vmul.f32 %v2139, %v2123
        %v2156 = vmul.f32 %v2140, %v2124
        %v2157 = vmul.f32 %v2141, %v2125
        %v2158 = vmul.f32 %v2142, %v2126
        %v2159 = vmul.f32 %v2143, %v2127
        %v2160 = vmul.f32 %v2144, %v2128
        %v2161 = vmul.f32 %v2145, %v2129
        %v2162 = vmul.f32 %v2146, %v2130
        %v2163 = vmul.f32 %v2147, %v2131
        %v2164 = vmul.f32 %v2148, %v2132
        %v2165 = vmul.f32 %v2149, %v2133
        %v2166 = vmul.f32 %v2150, %v2134
        %v2167 = vmul.f32 %v2151, %v2135
        %v2168 = vmul.f32 %v2152, %v2136
        %v2169 = vmul.f32 %v2153, %v2137
        %v2170 = vmul.f32 %v1979, %v2154
        %v2171 = vmul.f32 %v1981, %v2154
        %v2172 = vmul.f32 %v1983, %v2155
        %v2173 = vmul.f32 %v1985, %v2155
        %v2174 = vmul.f32 %v1987, %v2156
        %v2175 = vmul.f32 %v1989, %v2156
        %v2176 = vmul.f32 %v1991, %v2157
        %v2177 = vmul.f32 %v1993, %v2157
        %v2178 = vmul.f32 %v1995, %v2158
        %v2179 = vmul.f32 %v1997, %v2158
        %v2180 = vmul.f32 %v1999, %v2159
        %v2181 = vmul.f32 %v2001, %v2159
        %v2182 = vmul.f32 %v2003, %v2160
        %v2183 = vmul.f32 %v2005, %v2160
        %v2184 = vmul.f32 %v2007, %v2161
        %v2185 = vmul.f32 %v2009, %v2161
        %v2186 = vmul.f32 %v2011, %v2162
        %v2187 = vmul.f32 %v2013, %v2162
        %v2188 = vmul.f32 %v2015, %v2163
        %v2189 = vmul.f32 %v2017, %v2163
        %v2190 = vmul.f32 %v2019, %v2164
        %v2191 = vmul.f32 %v2021, %v2164
        %v2192 = vmul.f32 %v2023, %v2165
        %v2193 = vmul.f32 %v2025, %v2165
        %v2194 = vmul.f32 %v2027, %v2166
        %v2195 = vmul.f32 %v2029, %v2166
        %v2196 = vmul.f32 %v2031, %v2167
        %v2197 = vmul.f32 %v2033, %v2167
        %v2198 = vmul.f32 %v2035, %v2168
        %v2199 = vmul.f32 %v2037, %v2168
        %v2200 = vmul.f32 %v2039, %v2169
        %v2201 = vmul.f32 %v2041, %v2169
        %v2202 = vpack.c.bf16 %v2172, %v2170
        %v2203 = vpack.c.bf16 %v2173, %v2171
        %v2204 = vpack.c.bf16 %v2176, %v2174
        %v2205 = vpack.c.bf16 %v2177, %v2175
        %v2206 = vpack.c.bf16 %v2180, %v2178
        %v2207 = vpack.c.bf16 %v2181, %v2179
        %v2208 = vpack.c.bf16 %v2184, %v2182
        %v2209 = vpack.c.bf16 %v2185, %v2183
        %v2210 = vpack.c.bf16 %v2188, %v2186
        %v2211 = vpack.c.bf16 %v2189, %v2187
        %v2212 = vpack.c.bf16 %v2192, %v2190
        %v2213 = vpack.c.bf16 %v2193, %v2191
        %v2214 = vpack.c.bf16 %v2196, %v2194
        %v2215 = vpack.c.bf16 %v2197, %v2195
        %v2216 = vpack.c.bf16 %v2200, %v2198
        %v2217 = vpack.c.bf16 %v2201, %v2199
        %2218 = vmatprep.subr.bf16.mxu0 0
        %2219 = vmatpush1.bf16.msra.mxu0 %v1477
        %2220 = vmatprep.subr.bf16.mxu0 0
        %2221 = vmatpush1.bf16.msra.mxu0 %v1478
        %2222 = vmatprep.subr.bf16.mxu0 0
        %2223 = vmatpush1.bf16.msra.mxu0 %v1479
        %2224 = vmatprep.subr.bf16.mxu0 0
        %2225 = vmatpush1.bf16.msra.mxu0 %v1480
        %2226 = vmatprep.subr.bf16.mxu0 0
        %2227 = vmatpush1.bf16.msra.mxu0 %v1481
        %2228 = vmatprep.subr.bf16.mxu0 0
        %2229 = vmatpush1.bf16.msra.mxu0 %v1482
        %2230 = vmatprep.subr.bf16.mxu0 0
        %2231 = vmatpush1.bf16.msra.mxu0 %v1483
        %2232 = vmatprep.subr.bf16.mxu0 0
        %2233 = vmatpush1.bf16.msra.mxu0 %v1484
        %2234 = vmatprep.subr.bf16.mxu0 0
        %2235 = vmatpush1.bf16.msra.mxu0 %v1485
        %2236 = vmatprep.subr.bf16.mxu0 0
        %2237 = vmatpush1.bf16.msra.mxu0 %v1486
        %2238 = vmatprep.subr.bf16.mxu0 0
        %2239 = vmatpush1.bf16.msra.mxu0 %v1487
        %2240 = vmatprep.subr.bf16.mxu0 0
        %2241 = vmatpush1.bf16.msra.mxu0 %v1488
        %2242 = vmatprep.subr.bf16.mxu0 0
        %2243 = vmatpush1.bf16.msra.mxu0 %v1489
        %2244 = vmatprep.subr.bf16.mxu0 0
        %2245 = vmatpush1.bf16.msra.mxu0 %v1490
        %2246 = vmatprep.subr.bf16.mxu0 0
        %2247 = vmatpush1.bf16.msra.mxu0 %v1491
        %2248 = vmatprep.subr.bf16.mxu0 0
        %2249 = vmatpush1.bf16.msra.mxu0 %v1492
        %2250 = vmatprep.mubr.bf16.mxu0 %v2203
        %2251 = vmatmul.mubr.bf16.gmra.mrb[0].mxu0 %v2202
        %v2252 = vpop.f32.mrb[0].mxu0
        %v2253 = vadd.f32 0.0, %v2252
        %v2254 = vpop.f32.mrb[0].mxu0
        %v2255 = vpop.f32.mrb[0].mxu0
        %v2256 = vadd.f32 0.0, %v2255
        %v2257 = vpop.f32.mrb[0].mxu0
        %2258 = vmatprep.mubr.bf16.mxu0 %v2205
        %2259 = vmatmul.mubr.bf16.gmra.mrb[0].mxu0 %v2204
        %v2260 = vpop.f32.mrb[0].mxu0
        %v2261 = vadd.f32 0.0, %v2260
        %v2262 = vpop.f32.mrb[0].mxu0
        %v2263 = vpop.f32.mrb[0].mxu0
        %v2264 = vadd.f32 0.0, %v2263
        %v2265 = vpop.f32.mrb[0].mxu0
        %2266 = vmatprep.mubr.bf16.mxu0 %v2207
        %2267 = vmatmul.mubr.bf16.gmra.mrb[0].mxu0 %v2206
        %v2268 = vpop.f32.mrb[0].mxu0
        %v2269 = vadd.f32 0.0, %v2268
        %v2270 = vpop.f32.mrb[0].mxu0
        %v2271 = vpop.f32.mrb[0].mxu0
        %v2272 = vadd.f32 0.0, %v2271
        %v2273 = vpop.f32.mrb[0].mxu0
        %2274 = vmatprep.mubr.bf16.mxu0 %v2209
        %2275 = vmatmul.mubr.bf16.gmra.mrb[0].mxu0 %v2208
        %v2276 = vpop.f32.mrb[0].mxu0
        %v2277 = vadd.f32 0.0, %v2276
        %v2278 = vpop.f32.mrb[0].mxu0
        %v2279 = vpop.f32.mrb[0].mxu0
        %v2280 = vadd.f32 0.0, %v2279
        %v2281 = vpop.f32.mrb[0].mxu0
        %2282 = vmatprep.mubr.bf16.mxu0 %v2211
        %2283 = vmatmul.mubr.bf16.gmra.mrb[0].mxu0 %v2210
        %v2284 = vpop.f32.mrb[0].mxu0
        %v2285 = vadd.f32 0.0, %v2284
        %v2286 = vpop.f32.mrb[0].mxu0
        %v2287 = vpop.f32.mrb[0].mxu0
        %v2288 = vadd.f32 0.0, %v2287
        %v2289 = vpop.f32.mrb[0].mxu0
        %2290 = vmatprep.mubr.bf16.mxu0 %v2213
        %2291 = vmatmul.mubr.bf16.gmra.mrb[0].mxu0 %v2212
        %v2292 = vpop.f32.mrb[0].mxu0
        %v2293 = vadd.f32 0.0, %v2292
        %v2294 = vpop.f32.mrb[0].mxu0
        %v2295 = vpop.f32.mrb[0].mxu0
        %v2296 = vadd.f32 0.0, %v2295
        %v2297 = vpop.f32.mrb[0].mxu0
        %2298 = vmatprep.mubr.bf16.mxu0 %v2215
        %2299 = vmatmul.mubr.bf16.gmra.mrb[0].mxu0 %v2214
        %v2300 = vpop.f32.mrb[0].mxu0
        %v2301 = vadd.f32 0.0, %v2300
        %v2302 = vpop.f32.mrb[0].mxu0
        %v2303 = vpop.f32.mrb[0].mxu0
        %v2304 = vadd.f32 0.0, %v2303
        %v2305 = vpop.f32.mrb[0].mxu0
        %2306 = vmatprep.mubr.bf16.mxu0 %v2217
        %2307 = vmatmul.mubr.bf16.gmra.mrb[0].mxu0 %v2216
        %v2308 = vpop.f32.mrb[0].mxu0
        %v2309 = vadd.f32 0.0, %v2308
        %v2310 = vpop.f32.mrb[0].mxu0
        %v2311 = vpop.f32.mrb[0].mxu0
        %v2312 = vadd.f32 0.0, %v2311
        %v2313 = vpop.f32.mrb[0].mxu0
        %2314 = vdwg.mxu0
        %v2315 = vunpack.c.l.bf16 %v1644
        %v2316 = vlaneseq
        %v2317 = vshrl.u32 %v2316, 7
        %v2318 = vsub.s32 0, %v2317
        %v2319 = vrot.slane %v2315, %v2318
        %v2320 = vmul.f32 %v2253, %v2319
        %v2321 = vmul.f32 %v2256, %v2319
        %v2322 = vmul.f32 %v2261, %v2319
        %v2323 = vmul.f32 %v2264, %v2319
        %v2324 = vmul.f32 %v2269, %v2319
        %v2325 = vmul.f32 %v2272, %v2319
        %v2326 = vmul.f32 %v2277, %v2319
        %v2327 = vmul.f32 %v2280, %v2319
        %v2328 = vmul.f32 %v2285, %v2319
        %v2329 = vmul.f32 %v2288, %v2319
        %v2330 = vmul.f32 %v2293, %v2319
        %v2331 = vmul.f32 %v2296, %v2319
        %v2332 = vmul.f32 %v2301, %v2319
        %v2333 = vmul.f32 %v2304, %v2319
        %v2334 = vmul.f32 %v2309, %v2319
        %v2335 = vmul.f32 %v2312, %v2319
        %v2336 = vadd.f32 %v1627, %v2320
        %v2337 = vadd.f32 %v1628, %v2321
        %v2338 = vadd.f32 %v1629, %v2322
        %v2339 = vadd.f32 %v1630, %v2323
        %v2340 = vadd.f32 %v1631, %v2324
        %v2341 = vadd.f32 %v1632, %v2325
        %v2342 = vadd.f32 %v1633, %v2326
        %v2343 = vadd.f32 %v1634, %v2327
        %v2344 = vadd.f32 %v1635, %v2328
        %v2345 = vadd.f32 %v1636, %v2329
        %v2346 = vadd.f32 %v1637, %v2330
        %v2347 = vadd.f32 %v1638, %v2331
        %v2348 = vadd.f32 %v1639, %v2332
        %v2349 = vadd.f32 %v1640, %v2333
        %v2350 = vadd.f32 %v1641, %v2334
        %v2351 = vadd.f32 %v1642, %v2335
        %s2352 = scalar_lea.vmem %s5, 2
        %v2353 = vld [vmem:[%s2352] sm:$0x1]
        %v2355 = vpack.i.b16 %v2353, %v2353
        %v2357 = vlaneseq
        %v2358 = vshrl.u32 %v2357, 7
        %v2359 = vsub.s32 0, %v2358
        %v2360 = vrot.slane %v2355, %v2359
        %v2362 = vunpack.c.l.b16 %v2360
        %v2363 = vpack.c.b16 %v2362, %v2362
        %v2365 = vmul.bf16 %v631, %v2363
        %v2366 = vmul.bf16 %v632, %v2363
        %v2367 = vmul.bf16 %v633, %v2363
        %v2368 = vmul.bf16 %v634, %v2363
        %v2369 = vmul.bf16 %v635, %v2363
        %v2370 = vmul.bf16 %v636, %v2363
        %v2371 = vmul.bf16 %v637, %v2363
        %v2372 = vmul.bf16 %v638, %v2363
        %v2373 = vmul.bf16 %v639, %v2363
        %v2374 = vmul.bf16 %v640, %v2363
        %v2375 = vmul.bf16 %v641, %v2363
        %v2376 = vmul.bf16 %v642, %v2363
        %v2377 = vmul.bf16 %v643, %v2363
        %v2378 = vmul.bf16 %v644, %v2363
        %v2379 = vmul.bf16 %v645, %v2363
        %v2380 = vmul.bf16 %v646, %v2363
        %s2381 = scalar_lea.vmem %s536, 256 [#allocation2]
        %v2382 = vld [vmem:[%s2381] sm:$0xff]
        %v2383 = vld [vmem:[%s2381 + $0x8] sm:$0xff]
        %v2384 = vld [vmem:[%s2381 + $0x10] sm:$0xff]
        %v2385 = vld [vmem:[%s2381 + $0x18] sm:$0xff]
        %v2386 = vld [vmem:[%s2381 + $0x20] sm:$0xff]
        %v2387 = vld [vmem:[%s2381 + $0x28] sm:$0xff]
        %v2388 = vld [vmem:[%s2381 + $0x30] sm:$0xff]
        %v2389 = vld [vmem:[%s2381 + $0x38] sm:$0xff]
        %v2390 = vld [vmem:[%s2381 + $0x40] sm:$0xff]
        %v2391 = vld [vmem:[%s2381 + $0x48] sm:$0xff]
        %v2392 = vld [vmem:[%s2381 + $0x50] sm:$0xff]
        %v2393 = vld [vmem:[%s2381 + $0x58] sm:$0xff]
        %v2394 = vld [vmem:[%s2381 + $0x60] sm:$0xff]
        %v2395 = vld [vmem:[%s2381 + $0x68] sm:$0xff]
        %v2396 = vld [vmem:[%s2381 + $0x70] sm:$0xff]
        %v2397 = vld [vmem:[%s2381 + $0x78] sm:$0xff]
        %v2398 = vunpack.c.l.bf16 %v2382
        %v2399 = vunpack.c.h.bf16 %v2382
        %v2400 = vunpack.c.l.bf16 %v2383
        %v2401 = vunpack.c.h.bf16 %v2383
        %v2402 = vunpack.c.l.bf16 %v2384
        %v2403 = vunpack.c.h.bf16 %v2384
        %v2404 = vunpack.c.l.bf16 %v2385
        %v2405 = vunpack.c.h.bf16 %v2385
        %v2406 = vunpack.c.l.bf16 %v2386
        %v2407 = vunpack.c.h.bf16 %v2386
        %v2408 = vunpack.c.l.bf16 %v2387
        %v2409 = vunpack.c.h.bf16 %v2387
        %v2410 = vunpack.c.l.bf16 %v2388
        %v2411 = vunpack.c.h.bf16 %v2388
        %v2412 = vunpack.c.l.bf16 %v2389
        %v2413 = vunpack.c.h.bf16 %v2389
        %v2414 = vunpack.c.l.bf16 %v2390
        %v2415 = vunpack.c.h.bf16 %v2390
        %v2416 = vunpack.c.l.bf16 %v2391
        %v2417 = vunpack.c.h.bf16 %v2391
        %v2418 = vunpack.c.l.bf16 %v2392
        %v2419 = vunpack.c.h.bf16 %v2392
        %v2420 = vunpack.c.l.bf16 %v2393
        %v2421 = vunpack.c.h.bf16 %v2393
        %v2422 = vunpack.c.l.bf16 %v2394
        %v2423 = vunpack.c.h.bf16 %v2394
        %v2424 = vunpack.c.l.bf16 %v2395
        %v2425 = vunpack.c.h.bf16 %v2395
        %v2426 = vunpack.c.l.bf16 %v2396
        %v2427 = vunpack.c.h.bf16 %v2396
        %v2428 = vunpack.c.l.bf16 %v2397
        %v2429 = vunpack.c.h.bf16 %v2397
        %v2446 = vunpack.c.l.b16 %v2365
        %v2447 = vunpack.c.l.b16 %v2366
        %v2448 = vunpack.c.l.b16 %v2367
        %v2449 = vunpack.c.l.b16 %v2368
        %v2450 = vunpack.c.l.b16 %v2369
        %v2451 = vunpack.c.l.b16 %v2370
        %v2452 = vunpack.c.l.b16 %v2371
        %v2453 = vunpack.c.l.b16 %v2372
        %v2454 = vunpack.c.l.b16 %v2373
        %v2455 = vunpack.c.l.b16 %v2374
        %v2456 = vunpack.c.l.b16 %v2375
        %v2457 = vunpack.c.l.b16 %v2376
        %v2458 = vunpack.c.l.b16 %v2377
        %v2459 = vunpack.c.l.b16 %v2378
        %v2460 = vunpack.c.l.b16 %v2379
        %v2461 = vunpack.c.l.b16 %v2380
        %v2462 = vpack.c.b16 %v2447, %v2446
        %v2463 = vpack.c.b16 %v2449, %v2448
        %v2464 = vpack.c.b16 %v2451, %v2450
        %v2465 = vpack.c.b16 %v2453, %v2452
        %v2466 = vpack.c.b16 %v2455, %v2454
        %v2467 = vpack.c.b16 %v2457, %v2456
        %v2468 = vpack.c.b16 %v2459, %v2458
        %v2469 = vpack.c.b16 %v2461, %v2460
        %v2471 = vsel %vm907, %v2462, 0
        %v2474 = vsel %vm907, %v2463, 0
        %v2477 = vsel %vm907, %v2464, 0
        %v2480 = vsel %vm907, %v2465, 0
        %v2483 = vsel %vm907, %v2466, 0
        %v2486 = vsel %vm907, %v2467, 0
        %v2489 = vsel %vm907, %v2468, 0
        %v2492 = vsel %vm907, %v2469, 0
        %2494 = vmatprep.subr.bf16.mxu0 0
        %2495 = vmatpush1.bf16.xpose.msra.mxu0 %v933
        %2496 = vmatprep.subr.bf16.mxu0 0
        %2497 = vmatpush1.bf16.xpose.msra.mxu0 %v936
        %2498 = vmatprep.subr.bf16.mxu0 0
        %2499 = vmatpush1.bf16.xpose.msra.mxu0 %v939
        %2500 = vmatprep.subr.bf16.mxu0 0
        %2501 = vmatpush1.bf16.xpose.msra.mxu0 %v942
        %2502 = vmatprep.subr.bf16.mxu0 0
        %2503 = vmatpush1.bf16.xpose.msra.mxu0 %v945
        %2504 = vmatprep.subr.bf16.mxu0 0
        %2505 = vmatpush1.bf16.xpose.msra.mxu0 %v948
        %2506 = vmatprep.subr.bf16.mxu0 0
        %2507 = vmatpush1.bf16.xpose.msra.mxu0 %v951
        %2508 = vmatprep.subr.bf16.mxu0 0
        %2509 = vmatpush1.bf16.xpose.msra.mxu0 %v954
        %2510 = vmatprep.subr.bf16.mxu0 0
        %2511 = vmatpush1.bf16.xpose.msra.mxu0 %v957
        %2512 = vmatprep.subr.bf16.mxu0 0
        %2513 = vmatpush1.bf16.xpose.msra.mxu0 %v960
        %2514 = vmatprep.subr.bf16.mxu0 0
        %2515 = vmatpush1.bf16.xpose.msra.mxu0 %v963
        %2516 = vmatprep.subr.bf16.mxu0 0
        %2517 = vmatpush1.bf16.xpose.msra.mxu0 %v966
        %2518 = vmatprep.subr.bf16.mxu0 0
        %2519 = vmatpush1.bf16.xpose.msra.mxu0 %v969
        %2520 = vmatprep.subr.bf16.mxu0 0
        %2521 = vmatpush1.bf16.xpose.msra.mxu0 %v972
        %2522 = vmatprep.subr.bf16.mxu0 0
        %2523 = vmatpush1.bf16.xpose.msra.mxu0 %v975
        %2524 = vmatprep.subr.bf16.mxu0 0
        %2525 = vmatpush1.bf16.xpose.msra.mxu0 %v978
        %2526 = vmatprep.mubr.bf16.mxu0 0
        %2527 = vmatmul.mubr.bf16.gmra.mrb[0].mxu0 %v2471
        %v2528 = vpop.f32.mrb[0].mxu0
        %v2529 = vadd.f32 %v2398, %v2528
        %v2530 = vpop.f32.mrb[0].mxu0
        %v2531 = vadd.f32 %v2399, %v2530
        %v2532 = vpop.f32.mrb[0].mxu0
        %v2533 = vadd.f32 %v2400, %v2532
        %v2534 = vpop.f32.mrb[0].mxu0
        %v2535 = vadd.f32 %v2401, %v2534
        %2536 = vmatprep.mubr.bf16.mxu0 0
        %2537 = vmatmul.mubr.bf16.gmra.mrb[0].mxu0 %v2474
        %v2538 = vpop.f32.mrb[0].mxu0
        %v2539 = vadd.f32 %v2402, %v2538
        %v2540 = vpop.f32.mrb[0].mxu0
        %v2541 = vadd.f32 %v2403, %v2540
        %v2542 = vpop.f32.mrb[0].mxu0
        %v2543 = vadd.f32 %v2404, %v2542
        %v2544 = vpop.f32.mrb[0].mxu0
        %v2545 = vadd.f32 %v2405, %v2544
        %2546 = vmatprep.mubr.bf16.mxu0 0
        %2547 = vmatmul.mubr.bf16.gmra.mrb[0].mxu0 %v2477
        %v2548 = vpop.f32.mrb[0].mxu0
        %v2549 = vadd.f32 %v2406, %v2548
        %v2550 = vpop.f32.mrb[0].mxu0
        %v2551 = vadd.f32 %v2407, %v2550
        %v2552 = vpop.f32.mrb[0].mxu0
        %v2553 = vadd.f32 %v2408, %v2552
        %v2554 = vpop.f32.mrb[0].mxu0
        %v2555 = vadd.f32 %v2409, %v2554
        %2556 = vmatprep.mubr.bf16.mxu0 0
        %2557 = vmatmul.mubr.bf16.gmra.mrb[0].mxu0 %v2480
        %v2558 = vpop.f32.mrb[0].mxu0
        %v2559 = vadd.f32 %v2410, %v2558
        %v2560 = vpop.f32.mrb[0].mxu0
        %v2561 = vadd.f32 %v2411, %v2560
        %v2562 = vpop.f32.mrb[0].mxu0
        %v2563 = vadd.f32 %v2412, %v2562
        %v2564 = vpop.f32.mrb[0].mxu0
        %v2565 = vadd.f32 %v2413, %v2564
        %2566 = vmatprep.mubr.bf16.mxu0 0
        %2567 = vmatmul.mubr.bf16.gmra.mrb[0].mxu0 %v2483
        %v2568 = vpop.f32.mrb[0].mxu0
        %v2569 = vadd.f32 %v2414, %v2568
        %v2570 = vpop.f32.mrb[0].mxu0
        %v2571 = vadd.f32 %v2415, %v2570
        %v2572 = vpop.f32.mrb[0].mxu0
        %v2573 = vadd.f32 %v2416, %v2572
        %v2574 = vpop.f32.mrb[0].mxu0
        %v2575 = vadd.f32 %v2417, %v2574
        %2576 = vmatprep.mubr.bf16.mxu0 0
        %2577 = vmatmul.mubr.bf16.gmra.mrb[0].mxu0 %v2486
        %v2578 = vpop.f32.mrb[0].mxu0
        %v2579 = vadd.f32 %v2418, %v2578
        %v2580 = vpop.f32.mrb[0].mxu0
        %v2581 = vadd.f32 %v2419, %v2580
        %v2582 = vpop.f32.mrb[0].mxu0
        %v2583 = vadd.f32 %v2420, %v2582
        %v2584 = vpop.f32.mrb[0].mxu0
        %v2585 = vadd.f32 %v2421, %v2584
        %2586 = vmatprep.mubr.bf16.mxu0 0
        %2587 = vmatmul.mubr.bf16.gmra.mrb[0].mxu0 %v2489
        %v2588 = vpop.f32.mrb[0].mxu0
        %v2589 = vadd.f32 %v2422, %v2588
        %v2590 = vpop.f32.mrb[0].mxu0
        %v2591 = vadd.f32 %v2423, %v2590
        %v2592 = vpop.f32.mrb[0].mxu0
        %v2593 = vadd.f32 %v2424, %v2592
        %v2594 = vpop.f32.mrb[0].mxu0
        %v2595 = vadd.f32 %v2425, %v2594
        %2596 = vmatprep.mubr.bf16.mxu0 0
        %2597 = vmatmul.mubr.bf16.gmra.mrb[0].mxu0 %v2492
        %v2598 = vpop.f32.mrb[0].mxu0
        %v2599 = vadd.f32 %v2426, %v2598
        %v2600 = vpop.f32.mrb[0].mxu0
        %v2601 = vadd.f32 %v2427, %v2600
        %v2602 = vpop.f32.mrb[0].mxu0
        %v2603 = vadd.f32 %v2428, %v2602
        %v2604 = vpop.f32.mrb[0].mxu0
        %v2605 = vadd.f32 %v2429, %v2604
        %2606 = vdwg.mxu0
        %v2607 = vmax.f32 %v2529, %v2531
        %2608 = vmax.xlane.f32.xlu0 %v2607
        %v2609 = vpop.xlane.xlu0 %2608
        %v2610 = vmax.f32 %v2533, %v2535
        %2611 = vmax.xlane.f32.xlu0 %v2610
        %v2612 = vpop.xlane.xlu0 %2611
        %v2613 = vmax.f32 %v2539, %v2541
        %2614 = vmax.xlane.f32.xlu0 %v2613
        %v2615 = vpop.xlane.xlu0 %2614
        %v2616 = vmax.f32 %v2543, %v2545
        %2617 = vmax.xlane.f32.xlu0 %v2616
        %v2618 = vpop.xlane.xlu0 %2617
        %v2619 = vmax.f32 %v2549, %v2551
        %2620 = vmax.xlane.f32.xlu0 %v2619
        %v2621 = vpop.xlane.xlu0 %2620
        %v2622 = vmax.f32 %v2553, %v2555
        %2623 = vmax.xlane.f32.xlu0 %v2622
        %v2624 = vpop.xlane.xlu0 %2623
        %v2625 = vmax.f32 %v2559, %v2561
        %2626 = vmax.xlane.f32.xlu0 %v2625
        %v2627 = vpop.xlane.xlu0 %2626
        %v2628 = vmax.f32 %v2563, %v2565
        %2629 = vmax.xlane.f32.xlu0 %v2628
        %v2630 = vpop.xlane.xlu0 %2629
        %v2631 = vmax.f32 %v2569, %v2571
        %2632 = vmax.xlane.f32.xlu0 %v2631
        %v2633 = vpop.xlane.xlu0 %2632
        %v2634 = vmax.f32 %v2573, %v2575
        %2635 = vmax.xlane.f32.xlu0 %v2634
        %v2636 = vpop.xlane.xlu0 %2635
        %v2637 = vmax.f32 %v2579, %v2581
        %2638 = vmax.xlane.f32.xlu0 %v2637
        %v2639 = vpop.xlane.xlu0 %2638
        %v2640 = vmax.f32 %v2583, %v2585
        %2641 = vmax.xlane.f32.xlu0 %v2640
        %v2642 = vpop.xlane.xlu0 %2641
        %v2643 = vmax.f32 %v2589, %v2591
        %2644 = vmax.xlane.f32.xlu0 %v2643
        %v2645 = vpop.xlane.xlu0 %2644
        %v2646 = vmax.f32 %v2593, %v2595
        %2647 = vmax.xlane.f32.xlu0 %v2646
        %v2648 = vpop.xlane.xlu0 %2647
        %v2649 = vmax.f32 %v2599, %v2601
        %2650 = vmax.xlane.f32.xlu0 %v2649
        %v2651 = vpop.xlane.xlu0 %2650
        %v2652 = vmax.f32 %v2603, %v2605
        %2653 = vmax.xlane.f32.xlu0 %v2652
        %v2654 = vpop.xlane.xlu0 %2653
        %v2655 = vsub.f32 %v2529, %v2609
        %v2656 = vsub.f32 %v2531, %v2609
        %v2657 = vsub.f32 %v2533, %v2612
        %v2658 = vsub.f32 %v2535, %v2612
        %v2659 = vsub.f32 %v2539, %v2615
        %v2660 = vsub.f32 %v2541, %v2615
        %v2661 = vsub.f32 %v2543, %v2618
        %v2662 = vsub.f32 %v2545, %v2618
        %v2663 = vsub.f32 %v2549, %v2621
        %v2664 = vsub.f32 %v2551, %v2621
        %v2665 = vsub.f32 %v2553, %v2624
        %v2666 = vsub.f32 %v2555, %v2624
        %v2667 = vsub.f32 %v2559, %v2627
        %v2668 = vsub.f32 %v2561, %v2627
        %v2669 = vsub.f32 %v2563, %v2630
        %v2670 = vsub.f32 %v2565, %v2630
        %v2671 = vsub.f32 %v2569, %v2633
        %v2672 = vsub.f32 %v2571, %v2633
        %v2673 = vsub.f32 %v2573, %v2636
        %v2674 = vsub.f32 %v2575, %v2636
        %v2675 = vsub.f32 %v2579, %v2639
        %v2676 = vsub.f32 %v2581, %v2639
        %v2677 = vsub.f32 %v2583, %v2642
        %v2678 = vsub.f32 %v2585, %v2642
        %v2679 = vsub.f32 %v2589, %v2645
        %v2680 = vsub.f32 %v2591, %v2645
        %v2681 = vsub.f32 %v2593, %v2648
        %v2682 = vsub.f32 %v2595, %v2648
        %v2683 = vsub.f32 %v2599, %v2651
        %v2684 = vsub.f32 %v2601, %v2651
        %v2685 = vsub.f32 %v2603, %v2654
        %v2686 = vsub.f32 %v2605, %v2654
        %v2687 = vmul.f32 %v2655, 1.442695
        %v2688 = vpow.pop %v2687
        %v2689 = vmul.f32 %v2656, 1.442695
        %v2690 = vpow.pop %v2689
        %v2691 = vmul.f32 %v2657, 1.442695
        %v2692 = vpow.pop %v2691
        %v2693 = vmul.f32 %v2658, 1.442695
        %v2694 = vpow.pop %v2693
        %v2695 = vmul.f32 %v2659, 1.442695
        %v2696 = vpow.pop %v2695
        %v2697 = vmul.f32 %v2660, 1.442695
        %v2698 = vpow.pop %v2697
        %v2699 = vmul.f32 %v2661, 1.442695
        %v2700 = vpow.pop %v2699
        %v2701 = vmul.f32 %v2662, 1.442695
        %v2702 = vpow.pop %v2701
        %v2703 = vmul.f32 %v2663, 1.442695
        %v2704 = vpow.pop %v2703
        %v2705 = vmul.f32 %v2664, 1.442695
        %v2706 = vpow.pop %v2705
        %v2707 = vmul.f32 %v2665, 1.442695
        %v2708 = vpow.pop %v2707
        %v2709 = vmul.f32 %v2666, 1.442695
        %v2710 = vpow.pop %v2709
        %v2711 = vmul.f32 %v2667, 1.442695
        %v2712 = vpow.pop %v2711
        %v2713 = vmul.f32 %v2668, 1.442695
        %v2714 = vpow.pop %v2713
        %v2715 = vmul.f32 %v2669, 1.442695
        %v2716 = vpow.pop %v2715
        %v2717 = vmul.f32 %v2670, 1.442695
        %v2718 = vpow.pop %v2717
        %v2719 = vmul.f32 %v2671, 1.442695
        %v2720 = vpow.pop %v2719
        %v2721 = vmul.f32 %v2672, 1.442695
        %v2722 = vpow.pop %v2721
        %v2723 = vmul.f32 %v2673, 1.442695
        %v2724 = vpow.pop %v2723
        %v2725 = vmul.f32 %v2674, 1.442695
        %v2726 = vpow.pop %v2725
        %v2727 = vmul.f32 %v2675, 1.442695
        %v2728 = vpow.pop %v2727
        %v2729 = vmul.f32 %v2676, 1.442695
        %v2730 = vpow.pop %v2729
        %v2731 = vmul.f32 %v2677, 1.442695
        %v2732 = vpow.pop %v2731
        %v2733 = vmul.f32 %v2678, 1.442695
        %v2734 = vpow.pop %v2733
        %v2735 = vmul.f32 %v2679, 1.442695
        %v2736 = vpow.pop %v2735
        %v2737 = vmul.f32 %v2680, 1.442695
        %v2738 = vpow.pop %v2737
        %v2739 = vmul.f32 %v2681, 1.442695
        %v2740 = vpow.pop %v2739
        %v2741 = vmul.f32 %v2682, 1.442695
        %v2742 = vpow.pop %v2741
        %v2743 = vmul.f32 %v2683, 1.442695
        %v2744 = vpow.pop %v2743
        %v2745 = vmul.f32 %v2684, 1.442695
        %v2746 = vpow.pop %v2745
        %v2747 = vmul.f32 %v2685, 1.442695
        %v2748 = vpow.pop %v2747
        %v2749 = vmul.f32 %v2686, 1.442695
        %v2750 = vpow.pop %v2749
        %v2751 = vadd.f32 %v2688, %v2690
        %2752 = vadd.xlane.f32.xlu0 %v2751
        %v2753 = vpop.xlane.xlu0 %2752
        %v2754 = vadd.f32 %v2692, %v2694
        %2755 = vadd.xlane.f32.xlu0 %v2754
        %v2756 = vpop.xlane.xlu0 %2755
        %v2757 = vadd.f32 %v2696, %v2698
        %2758 = vadd.xlane.f32.xlu0 %v2757
        %v2759 = vpop.xlane.xlu0 %2758
        %v2760 = vadd.f32 %v2700, %v2702
        %2761 = vadd.xlane.f32.xlu0 %v2760
        %v2762 = vpop.xlane.xlu0 %2761
        %v2763 = vadd.f32 %v2704, %v2706
        %2764 = vadd.xlane.f32.xlu0 %v2763
        %v2765 = vpop.xlane.xlu0 %2764
        %v2766 = vadd.f32 %v2708, %v2710
        %2767 = vadd.xlane.f32.xlu0 %v2766
        %v2768 = vpop.xlane.xlu0 %2767
        %v2769 = vadd.f32 %v2712, %v2714
        %2770 = vadd.xlane.f32.xlu0 %v2769
        %v2771 = vpop.xlane.xlu0 %2770
        %v2772 = vadd.f32 %v2716, %v2718
        %2773 = vadd.xlane.f32.xlu0 %v2772
        %v2774 = vpop.xlane.xlu0 %2773
        %v2775 = vadd.f32 %v2720, %v2722
        %2776 = vadd.xlane.f32.xlu0 %v2775
        %v2777 = vpop.xlane.xlu0 %2776
        %v2778 = vadd.f32 %v2724, %v2726
        %2779 = vadd.xlane.f32.xlu0 %v2778
        %v2780 = vpop.xlane.xlu0 %2779
        %v2781 = vadd.f32 %v2728, %v2730
        %2782 = vadd.xlane.f32.xlu0 %v2781
        %v2783 = vpop.xlane.xlu0 %2782
        %v2784 = vadd.f32 %v2732, %v2734
        %2785 = vadd.xlane.f32.xlu0 %v2784
        %v2786 = vpop.xlane.xlu0 %2785
        %v2787 = vadd.f32 %v2736, %v2738
        %2788 = vadd.xlane.f32.xlu0 %v2787
        %v2789 = vpop.xlane.xlu0 %2788
        %v2790 = vadd.f32 %v2740, %v2742
        %2791 = vadd.xlane.f32.xlu0 %v2790
        %v2792 = vpop.xlane.xlu0 %2791
        %v2793 = vadd.f32 %v2744, %v2746
        %2794 = vadd.xlane.f32.xlu0 %v2793
        %v2795 = vpop.xlane.xlu0 %2794
        %v2796 = vadd.f32 %v2748, %v2750
        %2797 = vadd.xlane.f32.xlu0 %v2796
        %v2798 = vpop.xlane.xlu0 %2797
        %vm2799 = vcmp.gt.f32.partialorder %v2609, -5e+29
        %vm2800 = vcmp.gt.f32.partialorder %v2612, -5e+29
        %vm2801 = vcmp.gt.f32.partialorder %v2615, -5e+29
        %vm2802 = vcmp.gt.f32.partialorder %v2618, -5e+29
        %vm2803 = vcmp.gt.f32.partialorder %v2621, -5e+29
        %vm2804 = vcmp.gt.f32.partialorder %v2624, -5e+29
        %vm2805 = vcmp.gt.f32.partialorder %v2627, -5e+29
        %vm2806 = vcmp.gt.f32.partialorder %v2630, -5e+29
        %vm2807 = vcmp.gt.f32.partialorder %v2633, -5e+29
        %vm2808 = vcmp.gt.f32.partialorder %v2636, -5e+29
        %vm2809 = vcmp.gt.f32.partialorder %v2639, -5e+29
        %vm2810 = vcmp.gt.f32.partialorder %v2642, -5e+29
        %vm2811 = vcmp.gt.f32.partialorder %v2645, -5e+29
        %vm2812 = vcmp.gt.f32.partialorder %v2648, -5e+29
        %vm2813 = vcmp.gt.f32.partialorder %v2651, -5e+29
        %vm2814 = vcmp.gt.f32.partialorder %v2654, -5e+29
        %v2815 = vsel %vm2799, 1, 0
        %v2816 = vsel %vm2800, 1, 0
        %v2817 = vsel %vm2801, 1, 0
        %v2818 = vsel %vm2802, 1, 0
        %v2819 = vsel %vm2803, 1, 0
        %v2820 = vsel %vm2804, 1, 0
        %v2821 = vsel %vm2805, 1, 0
        %v2822 = vsel %vm2806, 1, 0
        %v2823 = vsel %vm2807, 1, 0
        %v2824 = vsel %vm2808, 1, 0
        %v2825 = vsel %vm2809, 1, 0
        %v2826 = vsel %vm2810, 1, 0
        %v2827 = vsel %vm2811, 1, 0
        %v2828 = vsel %vm2812, 1, 0
        %v2829 = vsel %vm2813, 1, 0
        %v2830 = vsel %vm2814, 1, 0
        %v2831 = vcvt.s32.f32 %v2815
        %v2832 = vcvt.s32.f32 %v2816
        %v2833 = vcvt.s32.f32 %v2817
        %v2834 = vcvt.s32.f32 %v2818
        %v2835 = vcvt.s32.f32 %v2819
        %v2836 = vcvt.s32.f32 %v2820
        %v2837 = vcvt.s32.f32 %v2821
        %v2838 = vcvt.s32.f32 %v2822
        %v2839 = vcvt.s32.f32 %v2823
        %v2840 = vcvt.s32.f32 %v2824
        %v2841 = vcvt.s32.f32 %v2825
        %v2842 = vcvt.s32.f32 %v2826
        %v2843 = vcvt.s32.f32 %v2827
        %v2844 = vcvt.s32.f32 %v2828
        %v2845 = vcvt.s32.f32 %v2829
        %v2846 = vcvt.s32.f32 %v2830
        %v2847 = vrcp.pop %v2753
        %v2848 = vrcp.pop %v2756
        %v2849 = vrcp.pop %v2759
        %v2850 = vrcp.pop %v2762
        %v2851 = vrcp.pop %v2765
        %v2852 = vrcp.pop %v2768
        %v2853 = vrcp.pop %v2771
        %v2854 = vrcp.pop %v2774
        %v2855 = vrcp.pop %v2777
        %v2856 = vrcp.pop %v2780
        %v2857 = vrcp.pop %v2783
        %v2858 = vrcp.pop %v2786
        %v2859 = vrcp.pop %v2789
        %v2860 = vrcp.pop %v2792
        %v2861 = vrcp.pop %v2795
        %v2862 = vrcp.pop %v2798
        %v2863 = vmul.f32 %v2847, %v2831
        %v2864 = vmul.f32 %v2848, %v2832
        %v2865 = vmul.f32 %v2849, %v2833
        %v2866 = vmul.f32 %v2850, %v2834
        %v2867 = vmul.f32 %v2851, %v2835
        %v2868 = vmul.f32 %v2852, %v2836
        %v2869 = vmul.f32 %v2853, %v2837
        %v2870 = vmul.f32 %v2854, %v2838
        %v2871 = vmul.f32 %v2855, %v2839
        %v2872 = vmul.f32 %v2856, %v2840
        %v2873 = vmul.f32 %v2857, %v2841
        %v2874 = vmul.f32 %v2858, %v2842
        %v2875 = vmul.f32 %v2859, %v2843
        %v2876 = vmul.f32 %v2860, %v2844
        %v2877 = vmul.f32 %v2861, %v2845
        %v2878 = vmul.f32 %v2862, %v2846
        %v2879 = vmul.f32 %v2688, %v2863
        %v2880 = vmul.f32 %v2690, %v2863
        %v2881 = vmul.f32 %v2692, %v2864
        %v2882 = vmul.f32 %v2694, %v2864
        %v2883 = vmul.f32 %v2696, %v2865
        %v2884 = vmul.f32 %v2698, %v2865
        %v2885 = vmul.f32 %v2700, %v2866
        %v2886 = vmul.f32 %v2702, %v2866
        %v2887 = vmul.f32 %v2704, %v2867
        %v2888 = vmul.f32 %v2706, %v2867
        %v2889 = vmul.f32 %v2708, %v2868
        %v2890 = vmul.f32 %v2710, %v2868
        %v2891 = vmul.f32 %v2712, %v2869
        %v2892 = vmul.f32 %v2714, %v2869
        %v2893 = vmul.f32 %v2716, %v2870
        %v2894 = vmul.f32 %v2718, %v2870
        %v2895 = vmul.f32 %v2720, %v2871
        %v2896 = vmul.f32 %v2722, %v2871
        %v2897 = vmul.f32 %v2724, %v2872
        %v2898 = vmul.f32 %v2726, %v2872
        %v2899 = vmul.f32 %v2728, %v2873
        %v2900 = vmul.f32 %v2730, %v2873
        %v2901 = vmul.f32 %v2732, %v2874
        %v2902 = vmul.f32 %v2734, %v2874
        %v2903 = vmul.f32 %v2736, %v2875
        %v2904 = vmul.f32 %v2738, %v2875
        %v2905 = vmul.f32 %v2740, %v2876
        %v2906 = vmul.f32 %v2742, %v2876
        %v2907 = vmul.f32 %v2744, %v2877
        %v2908 = vmul.f32 %v2746, %v2877
        %v2909 = vmul.f32 %v2748, %v2878
        %v2910 = vmul.f32 %v2750, %v2878
        %v2911 = vpack.c.bf16 %v2881, %v2879
        %v2912 = vpack.c.bf16 %v2882, %v2880
        %v2913 = vpack.c.bf16 %v2885, %v2883
        %v2914 = vpack.c.bf16 %v2886, %v2884
        %v2915 = vpack.c.bf16 %v2889, %v2887
        %v2916 = vpack.c.bf16 %v2890, %v2888
        %v2917 = vpack.c.bf16 %v2893, %v2891
        %v2918 = vpack.c.bf16 %v2894, %v2892
        %v2919 = vpack.c.bf16 %v2897, %v2895
        %v2920 = vpack.c.bf16 %v2898, %v2896
        %v2921 = vpack.c.bf16 %v2901, %v2899
        %v2922 = vpack.c.bf16 %v2902, %v2900
        %v2923 = vpack.c.bf16 %v2905, %v2903
        %v2924 = vpack.c.bf16 %v2906, %v2904
        %v2925 = vpack.c.bf16 %v2909, %v2907
        %v2926 = vpack.c.bf16 %v2910, %v2908
        %2927 = vmatprep.subr.bf16.mxu0 0
        %2928 = vmatpush1.bf16.msra.mxu0 %v1477
        %2929 = vmatprep.subr.bf16.mxu0 0
        %2930 = vmatpush1.bf16.msra.mxu0 %v1478
        %2931 = vmatprep.subr.bf16.mxu0 0
        %2932 = vmatpush1.bf16.msra.mxu0 %v1479
        %2933 = vmatprep.subr.bf16.mxu0 0
        %2934 = vmatpush1.bf16.msra.mxu0 %v1480
        %2935 = vmatprep.subr.bf16.mxu0 0
        %2936 = vmatpush1.bf16.msra.mxu0 %v1481
        %2937 = vmatprep.subr.bf16.mxu0 0
        %2938 = vmatpush1.bf16.msra.mxu0 %v1482
        %2939 = vmatprep.subr.bf16.mxu0 0
        %2940 = vmatpush1.bf16.msra.mxu0 %v1483
        %2941 = vmatprep.subr.bf16.mxu0 0
        %2942 = vmatpush1.bf16.msra.mxu0 %v1484
        %2943 = vmatprep.subr.bf16.mxu0 0
        %2944 = vmatpush1.bf16.msra.mxu0 %v1485
        %2945 = vmatprep.subr.bf16.mxu0 0
        %2946 = vmatpush1.bf16.msra.mxu0 %v1486
        %2947 = vmatprep.subr.bf16.mxu0 0
        %2948 = vmatpush1.bf16.msra.mxu0 %v1487
        %2949 = vmatprep.subr.bf16.mxu0 0
        %2950 = vmatpush1.bf16.msra.mxu0 %v1488
        %2951 = vmatprep.subr.bf16.mxu0 0
        %2952 = vmatpush1.bf16.msra.mxu0 %v1489
        %2953 = vmatprep.subr.bf16.mxu0 0
        %2954 = vmatpush1.bf16.msra.mxu0 %v1490
        %2955 = vmatprep.subr.bf16.mxu0 0
        %2956 = vmatpush1.bf16.msra.mxu0 %v1491
        %2957 = vmatprep.subr.bf16.mxu0 0
        %2958 = vmatpush1.bf16.msra.mxu0 %v1492
        %2959 = vmatprep.mubr.bf16.mxu0 %v2912
        %2960 = vmatmul.mubr.bf16.gmra.mrb[0].mxu0 %v2911
        %v2961 = vpop.f32.mrb[0].mxu0
        %v2962 = vadd.f32 0.0, %v2961
        %v2963 = vpop.f32.mrb[0].mxu0
        %v2964 = vpop.f32.mrb[0].mxu0
        %v2965 = vadd.f32 0.0, %v2964
        %v2966 = vpop.f32.mrb[0].mxu0
        %2967 = vmatprep.mubr.bf16.mxu0 %v2914
        %2968 = vmatmul.mubr.bf16.gmra.mrb[0].mxu0 %v2913
        %v2969 = vpop.f32.mrb[0].mxu0
        %v2970 = vadd.f32 0.0, %v2969
        %v2971 = vpop.f32.mrb[0].mxu0
        %v2972 = vpop.f32.mrb[0].mxu0
        %v2973 = vadd.f32 0.0, %v2972
        %v2974 = vpop.f32.mrb[0].mxu0
        %2975 = vmatprep.mubr.bf16.mxu0 %v2916
        %2976 = vmatmul.mubr.bf16.gmra.mrb[0].mxu0 %v2915
        %v2977 = vpop.f32.mrb[0].mxu0
        %v2978 = vadd.f32 0.0, %v2977
        %v2979 = vpop.f32.mrb[0].mxu0
        %v2980 = vpop.f32.mrb[0].mxu0
        %v2981 = vadd.f32 0.0, %v2980
        %v2982 = vpop.f32.mrb[0].mxu0
        %2983 = vmatprep.mubr.bf16.mxu0 %v2918
        %2984 = vmatmul.mubr.bf16.gmra.mrb[0].mxu0 %v2917
        %v2985 = vpop.f32.mrb[0].mxu0
        %v2986 = vadd.f32 0.0, %v2985
        %v2987 = vpop.f32.mrb[0].mxu0
        %v2988 = vpop.f32.mrb[0].mxu0
        %v2989 = vadd.f32 0.0, %v2988
        %v2990 = vpop.f32.mrb[0].mxu0
        %2991 = vmatprep.mubr.bf16.mxu0 %v2920
        %2992 = vmatmul.mubr.bf16.gmra.mrb[0].mxu0 %v2919
        %v2993 = vpop.f32.mrb[0].mxu0
        %v2994 = vadd.f32 0.0, %v2993
        %v2995 = vpop.f32.mrb[0].mxu0
        %v2996 = vpop.f32.mrb[0].mxu0
        %v2997 = vadd.f32 0.0, %v2996
        %v2998 = vpop.f32.mrb[0].mxu0
        %2999 = vmatprep.mubr.bf16.mxu0 %v2922
        %3000 = vmatmul.mubr.bf16.gmra.mrb[0].mxu0 %v2921
        %v3001 = vpop.f32.mrb[0].mxu0
        %v3002 = vadd.f32 0.0, %v3001
        %v3003 = vpop.f32.mrb[0].mxu0
        %v3004 = vpop.f32.mrb[0].mxu0
        %v3005 = vadd.f32 0.0, %v3004
        %v3006 = vpop.f32.mrb[0].mxu0
        %3007 = vmatprep.mubr.bf16.mxu0 %v2924
        %3008 = vmatmul.mubr.bf16.gmra.mrb[0].mxu0 %v2923
        %v3009 = vpop.f32.mrb[0].mxu0
        %v3010 = vadd.f32 0.0, %v3009
        %v3011 = vpop.f32.mrb[0].mxu0
        %v3012 = vpop.f32.mrb[0].mxu0
        %v3013 = vadd.f32 0.0, %v3012
        %v3014 = vpop.f32.mrb[0].mxu0
        %3015 = vmatprep.mubr.bf16.mxu0 %v2926
        %3016 = vmatmul.mubr.bf16.gmra.mrb[0].mxu0 %v2925
        %v3017 = vpop.f32.mrb[0].mxu0
        %v3018 = vadd.f32 0.0, %v3017
        %v3019 = vpop.f32.mrb[0].mxu0
        %v3020 = vpop.f32.mrb[0].mxu0
        %v3021 = vadd.f32 0.0, %v3020
        %v3022 = vpop.f32.mrb[0].mxu0
        %3023 = vdwg.mxu0
        %v3024 = vunpack.c.l.bf16 %v2353
        %v3025 = vlaneseq
        %v3026 = vshrl.u32 %v3025, 7
        %v3027 = vsub.s32 0, %v3026
        %v3028 = vrot.slane %v3024, %v3027
        %v3029 = vmul.f32 %v2962, %v3028
        %v3030 = vmul.f32 %v2965, %v3028
        %v3031 = vmul.f32 %v2970, %v3028
        %v3032 = vmul.f32 %v2973, %v3028
        %v3033 = vmul.f32 %v2978, %v3028
        %v3034 = vmul.f32 %v2981, %v3028
        %v3035 = vmul.f32 %v2986, %v3028
        %v3036 = vmul.f32 %v2989, %v3028
        %v3037 = vmul.f32 %v2994, %v3028
        %v3038 = vmul.f32 %v2997, %v3028
        %v3039 = vmul.f32 %v3002, %v3028
        %v3040 = vmul.f32 %v3005, %v3028
        %v3041 = vmul.f32 %v3010, %v3028
        %v3042 = vmul.f32 %v3013, %v3028
        %v3043 = vmul.f32 %v3018, %v3028
        %v3044 = vmul.f32 %v3021, %v3028
        %v3045 = vadd.f32 %v2336, %v3029
        %v3046 = vadd.f32 %v2337, %v3030
        %v3047 = vadd.f32 %v2338, %v3031
        %v3048 = vadd.f32 %v2339, %v3032
        %v3049 = vadd.f32 %v2340, %v3033
        %v3050 = vadd.f32 %v2341, %v3034
        %v3051 = vadd.f32 %v2342, %v3035
        %v3052 = vadd.f32 %v2343, %v3036
        %v3053 = vadd.f32 %v2344, %v3037
        %v3054 = vadd.f32 %v2345, %v3038
        %v3055 = vadd.f32 %v2346, %v3039
        %v3056 = vadd.f32 %v2347, %v3040
        %v3057 = vadd.f32 %v2348, %v3041
        %v3058 = vadd.f32 %v2349, %v3042
        %v3059 = vadd.f32 %v2350, %v3043
        %v3060 = vadd.f32 %v2351, %v3044
        %s3061 = scalar_lea.vmem %s5, 3
        %v3062 = vld [vmem:[%s3061] sm:$0x1]
        %v3064 = vpack.i.b16 %v3062, %v3062
        %v3066 = vlaneseq
        %v3067 = vshrl.u32 %v3066, 7
        %v3068 = vsub.s32 0, %v3067
        %v3069 = vrot.slane %v3064, %v3068
        %v3071 = vunpack.c.l.b16 %v3069
        %v3072 = vpack.c.b16 %v3071, %v3071
        %v3074 = vmul.bf16 %v631, %v3072
        %v3075 = vmul.bf16 %v632, %v3072
        %v3076 = vmul.bf16 %v633, %v3072
        %v3077 = vmul.bf16 %v634, %v3072
        %v3078 = vmul.bf16 %v635, %v3072
        %v3079 = vmul.bf16 %v636, %v3072
        %v3080 = vmul.bf16 %v637, %v3072
        %v3081 = vmul.bf16 %v638, %v3072
        %v3082 = vmul.bf16 %v639, %v3072
        %v3083 = vmul.bf16 %v640, %v3072
        %v3084 = vmul.bf16 %v641, %v3072
        %v3085 = vmul.bf16 %v642, %v3072
        %v3086 = vmul.bf16 %v643, %v3072
        %v3087 = vmul.bf16 %v644, %v3072
        %v3088 = vmul.bf16 %v645, %v3072
        %v3089 = vmul.bf16 %v646, %v3072
        %s3090 = scalar_lea.vmem %s536, 384 [#allocation2]
        %v3091 = vld [vmem:[%s3090] sm:$0xff]
        %v3092 = vld [vmem:[%s3090 + $0x8] sm:$0xff]
        %v3093 = vld [vmem:[%s3090 + $0x10] sm:$0xff]
        %v3094 = vld [vmem:[%s3090 + $0x18] sm:$0xff]
        %v3095 = vld [vmem:[%s3090 + $0x20] sm:$0xff]
        %v3096 = vld [vmem:[%s3090 + $0x28] sm:$0xff]
        %v3097 = vld [vmem:[%s3090 + $0x30] sm:$0xff]
        %v3098 = vld [vmem:[%s3090 + $0x38] sm:$0xff]
        %v3099 = vld [vmem:[%s3090 + $0x40] sm:$0xff]
        %v3100 = vld [vmem:[%s3090 + $0x48] sm:$0xff]
        %v3101 = vld [vmem:[%s3090 + $0x50] sm:$0xff]
        %v3102 = vld [vmem:[%s3090 + $0x58] sm:$0xff]
        %v3103 = vld [vmem:[%s3090 + $0x60] sm:$0xff]
        %v3104 = vld [vmem:[%s3090 + $0x68] sm:$0xff]
        %v3105 = vld [vmem:[%s3090 + $0x70] sm:$0xff]
        %v3106 = vld [vmem:[%s3090 + $0x78] sm:$0xff]
        %v3107 = vunpack.c.l.bf16 %v3091
        %v3108 = vunpack.c.h.bf16 %v3091
        %v3109 = vunpack.c.l.bf16 %v3092
        %v3110 = vunpack.c.h.bf16 %v3092
        %v3111 = vunpack.c.l.bf16 %v3093
        %v3112 = vunpack.c.h.bf16 %v3093
        %v3113 = vunpack.c.l.bf16 %v3094
        %v3114 = vunpack.c.h.bf16 %v3094
        %v3115 = vunpack.c.l.bf16 %v3095
        %v3116 = vunpack.c.h.bf16 %v3095
        %v3117 = vunpack.c.l.bf16 %v3096
        %v3118 = vunpack.c.h.bf16 %v3096
        %v3119 = vunpack.c.l.bf16 %v3097
        %v3120 = vunpack.c.h.bf16 %v3097
        %v3121 = vunpack.c.l.bf16 %v3098
        %v3122 = vunpack.c.h.bf16 %v3098
        %v3123 = vunpack.c.l.bf16 %v3099
        %v3124 = vunpack.c.h.bf16 %v3099
        %v3125 = vunpack.c.l.bf16 %v3100
        %v3126 = vunpack.c.h.bf16 %v3100
        %v3127 = vunpack.c.l.bf16 %v3101
        %v3128 = vunpack.c.h.bf16 %v3101
        %v3129 = vunpack.c.l.bf16 %v3102
        %v3130 = vunpack.c.h.bf16 %v3102
        %v3131 = vunpack.c.l.bf16 %v3103
        %v3132 = vunpack.c.h.bf16 %v3103
        %v3133 = vunpack.c.l.bf16 %v3104
        %v3134 = vunpack.c.h.bf16 %v3104
        %v3135 = vunpack.c.l.bf16 %v3105
        %v3136 = vunpack.c.h.bf16 %v3105
        %v3137 = vunpack.c.l.bf16 %v3106
        %v3138 = vunpack.c.h.bf16 %v3106
        %v3155 = vunpack.c.l.b16 %v3074
        %v3156 = vunpack.c.l.b16 %v3075
        %v3157 = vunpack.c.l.b16 %v3076
        %v3158 = vunpack.c.l.b16 %v3077
        %v3159 = vunpack.c.l.b16 %v3078
        %v3160 = vunpack.c.l.b16 %v3079
        %v3161 = vunpack.c.l.b16 %v3080
        %v3162 = vunpack.c.l.b16 %v3081
        %v3163 = vunpack.c.l.b16 %v3082
        %v3164 = vunpack.c.l.b16 %v3083
        %v3165 = vunpack.c.l.b16 %v3084
        %v3166 = vunpack.c.l.b16 %v3085
        %v3167 = vunpack.c.l.b16 %v3086
        %v3168 = vunpack.c.l.b16 %v3087
        %v3169 = vunpack.c.l.b16 %v3088
        %v3170 = vunpack.c.l.b16 %v3089
        %v3171 = vpack.c.b16 %v3156, %v3155
        %v3172 = vpack.c.b16 %v3158, %v3157
        %v3173 = vpack.c.b16 %v3160, %v3159
        %v3174 = vpack.c.b16 %v3162, %v3161
        %v3175 = vpack.c.b16 %v3164, %v3163
        %v3176 = vpack.c.b16 %v3166, %v3165
        %v3177 = vpack.c.b16 %v3168, %v3167
        %v3178 = vpack.c.b16 %v3170, %v3169
        %v3180 = vsel %vm907, %v3171, 0
        %v3183 = vsel %vm907, %v3172, 0
        %v3186 = vsel %vm907, %v3173, 0
        %v3189 = vsel %vm907, %v3174, 0
        %v3192 = vsel %vm907, %v3175, 0
        %v3195 = vsel %vm907, %v3176, 0
        %v3198 = vsel %vm907, %v3177, 0
        %v3201 = vsel %vm907, %v3178, 0
        %3203 = vmatprep.subr.bf16.mxu0 0
        %3204 = vmatpush1.bf16.xpose.msra.mxu0 %v933
        %3205 = vmatprep.subr.bf16.mxu0 0
        %3206 = vmatpush1.bf16.xpose.msra.mxu0 %v936
        %3207 = vmatprep.subr.bf16.mxu0 0
        %3208 = vmatpush1.bf16.xpose.msra.mxu0 %v939
        %3209 = vmatprep.subr.bf16.mxu0 0
        %3210 = vmatpush1.bf16.xpose.msra.mxu0 %v942
        %3211 = vmatprep.subr.bf16.mxu0 0
        %3212 = vmatpush1.bf16.xpose.msra.mxu0 %v945
        %3213 = vmatprep.subr.bf16.mxu0 0
        %3214 = vmatpush1.bf16.xpose.msra.mxu0 %v948
        %3215 = vmatprep.subr.bf16.mxu0 0
        %3216 = vmatpush1.bf16.xpose.msra.mxu0 %v951
        %3217 = vmatprep.subr.bf16.mxu0 0
        %3218 = vmatpush1.bf16.xpose.msra.mxu0 %v954
        %3219 = vmatprep.subr.bf16.mxu0 0
        %3220 = vmatpush1.bf16.xpose.msra.mxu0 %v957
        %3221 = vmatprep.subr.bf16.mxu0 0
        %3222 = vmatpush1.bf16.xpose.msra.mxu0 %v960
        %3223 = vmatprep.subr.bf16.mxu0 0
        %3224 = vmatpush1.bf16.xpose.msra.mxu0 %v963
        %3225 = vmatprep.subr.bf16.mxu0 0
        %3226 = vmatpush1.bf16.xpose.msra.mxu0 %v966
        %3227 = vmatprep.subr.bf16.mxu0 0
        %3228 = vmatpush1.bf16.xpose.msra.mxu0 %v969
        %3229 = vmatprep.subr.bf16.mxu0 0
        %3230 = vmatpush1.bf16.xpose.msra.mxu0 %v972
        %3231 = vmatprep.subr.bf16.mxu0 0
        %3232 = vmatpush1.bf16.xpose.msra.mxu0 %v975
        %3233 = vmatprep.subr.bf16.mxu0 0
        %3234 = vmatpush1.bf16.xpose.msra.mxu0 %v978
        %3235 = vmatprep.mubr.bf16.mxu0 0
        %3236 = vmatmul.mubr.bf16.gmra.mrb[0].mxu0 %v3180
        %v3237 = vpop.f32.mrb[0].mxu0
        %v3238 = vadd.f32 %v3107, %v3237
        %v3239 = vpop.f32.mrb[0].mxu0
        %v3240 = vadd.f32 %v3108, %v3239
        %v3241 = vpop.f32.mrb[0].mxu0
        %v3242 = vadd.f32 %v3109, %v3241
        %v3243 = vpop.f32.mrb[0].mxu0
        %v3244 = vadd.f32 %v3110, %v3243
        %3245 = vmatprep.mubr.bf16.mxu0 0
        %3246 = vmatmul.mubr.bf16.gmra.mrb[0].mxu0 %v3183
        %v3247 = vpop.f32.mrb[0].mxu0
        %v3248 = vadd.f32 %v3111, %v3247
        %v3249 = vpop.f32.mrb[0].mxu0
        %v3250 = vadd.f32 %v3112, %v3249
        %v3251 = vpop.f32.mrb[0].mxu0
        %v3252 = vadd.f32 %v3113, %v3251
        %v3253 = vpop.f32.mrb[0].mxu0
        %v3254 = vadd.f32 %v3114, %v3253
        %3255 = vmatprep.mubr.bf16.mxu0 0
        %3256 = vmatmul.mubr.bf16.gmra.mrb[0].mxu0 %v3186
        %v3257 = vpop.f32.mrb[0].mxu0
        %v3258 = vadd.f32 %v3115, %v3257
        %v3259 = vpop.f32.mrb[0].mxu0
        %v3260 = vadd.f32 %v3116, %v3259
        %v3261 = vpop.f32.mrb[0].mxu0
        %v3262 = vadd.f32 %v3117, %v3261
        %v3263 = vpop.f32.mrb[0].mxu0
        %v3264 = vadd.f32 %v3118, %v3263
        %3265 = vmatprep.mubr.bf16.mxu0 0
        %3266 = vmatmul.mubr.bf16.gmra.mrb[0].mxu0 %v3189
        %v3267 = vpop.f32.mrb[0].mxu0
        %v3268 = vadd.f32 %v3119, %v3267
        %v3269 = vpop.f32.mrb[0].mxu0
        %v3270 = vadd.f32 %v3120, %v3269
        %v3271 = vpop.f32.mrb[0].mxu0
        %v3272 = vadd.f32 %v3121, %v3271
        %v3273 = vpop.f32.mrb[0].mxu0
        %v3274 = vadd.f32 %v3122, %v3273
        %3275 = vmatprep.mubr.bf16.mxu0 0
        %3276 = vmatmul.mubr.bf16.gmra.mrb[0].mxu0 %v3192
        %v3277 = vpop.f32.mrb[0].mxu0
        %v3278 = vadd.f32 %v3123, %v3277
        %v3279 = vpop.f32.mrb[0].mxu0
        %v3280 = vadd.f32 %v3124, %v3279
        %v3281 = vpop.f32.mrb[0].mxu0
        %v3282 = vadd.f32 %v3125, %v3281
        %v3283 = vpop.f32.mrb[0].mxu0
        %v3284 = vadd.f32 %v3126, %v3283
        %3285 = vmatprep.mubr.bf16.mxu0 0
        %3286 = vmatmul.mubr.bf16.gmra.mrb[0].mxu0 %v3195
        %v3287 = vpop.f32.mrb[0].mxu0
        %v3288 = vadd.f32 %v3127, %v3287
        %v3289 = vpop.f32.mrb[0].mxu0
        %v3290 = vadd.f32 %v3128, %v3289
        %v3291 = vpop.f32.mrb[0].mxu0
        %v3292 = vadd.f32 %v3129, %v3291
        %v3293 = vpop.f32.mrb[0].mxu0
        %v3294 = vadd.f32 %v3130, %v3293
        %3295 = vmatprep.mubr.bf16.mxu0 0
        %3296 = vmatmul.mubr.bf16.gmra.mrb[0].mxu0 %v3198
        %v3297 = vpop.f32.mrb[0].mxu0
        %v3298 = vadd.f32 %v3131, %v3297
        %v3299 = vpop.f32.mrb[0].mxu0
        %v3300 = vadd.f32 %v3132, %v3299
        %v3301 = vpop.f32.mrb[0].mxu0
        %v3302 = vadd.f32 %v3133, %v3301
        %v3303 = vpop.f32.mrb[0].mxu0
        %v3304 = vadd.f32 %v3134, %v3303
        %3305 = vmatprep.mubr.bf16.mxu0 0
        %3306 = vmatmul.mubr.bf16.gmra.mrb[0].mxu0 %v3201
        %v3307 = vpop.f32.mrb[0].mxu0
        %v3308 = vadd.f32 %v3135, %v3307
        %v3309 = vpop.f32.mrb[0].mxu0
        %v3310 = vadd.f32 %v3136, %v3309
        %v3311 = vpop.f32.mrb[0].mxu0
        %v3312 = vadd.f32 %v3137, %v3311
        %v3313 = vpop.f32.mrb[0].mxu0
        %v3314 = vadd.f32 %v3138, %v3313
        %3315 = vdwg.mxu0
        %v3316 = vmax.f32 %v3238, %v3240
        %3317 = vmax.xlane.f32.xlu0 %v3316
        %v3318 = vpop.xlane.xlu0 %3317
        %v3319 = vmax.f32 %v3242, %v3244
        %3320 = vmax.xlane.f32.xlu0 %v3319
        %v3321 = vpop.xlane.xlu0 %3320
        %v3322 = vmax.f32 %v3248, %v3250
        %3323 = vmax.xlane.f32.xlu0 %v3322
        %v3324 = vpop.xlane.xlu0 %3323
        %v3325 = vmax.f32 %v3252, %v3254
        %3326 = vmax.xlane.f32.xlu0 %v3325
        %v3327 = vpop.xlane.xlu0 %3326
        %v3328 = vmax.f32 %v3258, %v3260
        %3329 = vmax.xlane.f32.xlu0 %v3328
        %v3330 = vpop.xlane.xlu0 %3329
        %v3331 = vmax.f32 %v3262, %v3264
        %3332 = vmax.xlane.f32.xlu0 %v3331
        %v3333 = vpop.xlane.xlu0 %3332
        %v3334 = vmax.f32 %v3268, %v3270
        %3335 = vmax.xlane.f32.xlu0 %v3334
        %v3336 = vpop.xlane.xlu0 %3335
        %v3337 = vmax.f32 %v3272, %v3274
        %3338 = vmax.xlane.f32.xlu0 %v3337
        %v3339 = vpop.xlane.xlu0 %3338
        %v3340 = vmax.f32 %v3278, %v3280
        %3341 = vmax.xlane.f32.xlu0 %v3340
        %v3342 = vpop.xlane.xlu0 %3341
        %v3343 = vmax.f32 %v3282, %v3284
        %3344 = vmax.xlane.f32.xlu0 %v3343
        %v3345 = vpop.xlane.xlu0 %3344
        %v3346 = vmax.f32 %v3288, %v3290
        %3347 = vmax.xlane.f32.xlu0 %v3346
        %v3348 = vpop.xlane.xlu0 %3347
        %v3349 = vmax.f32 %v3292, %v3294
        %3350 = vmax.xlane.f32.xlu0 %v3349
        %v3351 = vpop.xlane.xlu0 %3350
        %v3352 = vmax.f32 %v3298, %v3300
        %3353 = vmax.xlane.f32.xlu0 %v3352
        %v3354 = vpop.xlane.xlu0 %3353
        %v3355 = vmax.f32 %v3302, %v3304
        %3356 = vmax.xlane.f32.xlu0 %v3355
        %v3357 = vpop.xlane.xlu0 %3356
        %v3358 = vmax.f32 %v3308, %v3310
        %3359 = vmax.xlane.f32.xlu0 %v3358
        %v3360 = vpop.xlane.xlu0 %3359
        %v3361 = vmax.f32 %v3312, %v3314
        %3362 = vmax.xlane.f32.xlu0 %v3361
        %v3363 = vpop.xlane.xlu0 %3362
        %v3364 = vsub.f32 %v3238, %v3318
        %v3365 = vsub.f32 %v3240, %v3318
        %v3366 = vsub.f32 %v3242, %v3321
        %v3367 = vsub.f32 %v3244, %v3321
        %v3368 = vsub.f32 %v3248, %v3324
        %v3369 = vsub.f32 %v3250, %v3324
        %v3370 = vsub.f32 %v3252, %v3327
        %v3371 = vsub.f32 %v3254, %v3327
        %v3372 = vsub.f32 %v3258, %v3330
        %v3373 = vsub.f32 %v3260, %v3330
        %v3374 = vsub.f32 %v3262, %v3333
        %v3375 = vsub.f32 %v3264, %v3333
        %v3376 = vsub.f32 %v3268, %v3336
        %v3377 = vsub.f32 %v3270, %v3336
        %v3378 = vsub.f32 %v3272, %v3339
        %v3379 = vsub.f32 %v3274, %v3339
        %v3380 = vsub.f32 %v3278, %v3342
        %v3381 = vsub.f32 %v3280, %v3342
        %v3382 = vsub.f32 %v3282, %v3345
        %v3383 = vsub.f32 %v3284, %v3345
        %v3384 = vsub.f32 %v3288, %v3348
        %v3385 = vsub.f32 %v3290, %v3348
        %v3386 = vsub.f32 %v3292, %v3351
        %v3387 = vsub.f32 %v3294, %v3351
        %v3388 = vsub.f32 %v3298, %v3354
        %v3389 = vsub.f32 %v3300, %v3354
        %v3390 = vsub.f32 %v3302, %v3357
        %v3391 = vsub.f32 %v3304, %v3357
        %v3392 = vsub.f32 %v3308, %v3360
        %v3393 = vsub.f32 %v3310, %v3360
        %v3394 = vsub.f32 %v3312, %v3363
        %v3395 = vsub.f32 %v3314, %v3363
        %v3396 = vmul.f32 %v3364, 1.442695
        %v3397 = vpow.pop %v3396
        %v3398 = vmul.f32 %v3365, 1.442695
        %v3399 = vpow.pop %v3398
        %v3400 = vmul.f32 %v3366, 1.442695
        %v3401 = vpow.pop %v3400
        %v3402 = vmul.f32 %v3367, 1.442695
        %v3403 = vpow.pop %v3402
        %v3404 = vmul.f32 %v3368, 1.442695
        %v3405 = vpow.pop %v3404
        %v3406 = vmul.f32 %v3369, 1.442695
        %v3407 = vpow.pop %v3406
        %v3408 = vmul.f32 %v3370, 1.442695
        %v3409 = vpow.pop %v3408
        %v3410 = vmul.f32 %v3371, 1.442695
        %v3411 = vpow.pop %v3410
        %v3412 = vmul.f32 %v3372, 1.442695
        %v3413 = vpow.pop %v3412
        %v3414 = vmul.f32 %v3373, 1.442695
        %v3415 = vpow.pop %v3414
        %v3416 = vmul.f32 %v3374, 1.442695
        %v3417 = vpow.pop %v3416
        %v3418 = vmul.f32 %v3375, 1.442695
        %v3419 = vpow.pop %v3418
        %v3420 = vmul.f32 %v3376, 1.442695
        %v3421 = vpow.pop %v3420
        %v3422 = vmul.f32 %v3377, 1.442695
        %v3423 = vpow.pop %v3422
        %v3424 = vmul.f32 %v3378, 1.442695
        %v3425 = vpow.pop %v3424
        %v3426 = vmul.f32 %v3379, 1.442695
        %v3427 = vpow.pop %v3426
        %v3428 = vmul.f32 %v3380, 1.442695
        %v3429 = vpow.pop %v3428
        %v3430 = vmul.f32 %v3381, 1.442695
        %v3431 = vpow.pop %v3430
        %v3432 = vmul.f32 %v3382, 1.442695
        %v3433 = vpow.pop %v3432
        %v3434 = vmul.f32 %v3383, 1.442695
        %v3435 = vpow.pop %v3434
        %v3436 = vmul.f32 %v3384, 1.442695
        %v3437 = vpow.pop %v3436
        %v3438 = vmul.f32 %v3385, 1.442695
        %v3439 = vpow.pop %v3438
        %v3440 = vmul.f32 %v3386, 1.442695
        %v3441 = vpow.pop %v3440
        %v3442 = vmul.f32 %v3387, 1.442695
        %v3443 = vpow.pop %v3442
        %v3444 = vmul.f32 %v3388, 1.442695
        %v3445 = vpow.pop %v3444
        %v3446 = vmul.f32 %v3389, 1.442695
        %v3447 = vpow.pop %v3446
        %v3448 = vmul.f32 %v3390, 1.442695
        %v3449 = vpow.pop %v3448
        %v3450 = vmul.f32 %v3391, 1.442695
        %v3451 = vpow.pop %v3450
        %v3452 = vmul.f32 %v3392, 1.442695
        %v3453 = vpow.pop %v3452
        %v3454 = vmul.f32 %v3393, 1.442695
        %v3455 = vpow.pop %v3454
        %v3456 = vmul.f32 %v3394, 1.442695
        %v3457 = vpow.pop %v3456
        %v3458 = vmul.f32 %v3395, 1.442695
        %v3459 = vpow.pop %v3458
        %v3460 = vadd.f32 %v3397, %v3399
        %3461 = vadd.xlane.f32.xlu0 %v3460
        %v3462 = vpop.xlane.xlu0 %3461
        %v3463 = vadd.f32 %v3401, %v3403
        %3464 = vadd.xlane.f32.xlu0 %v3463
        %v3465 = vpop.xlane.xlu0 %3464
        %v3466 = vadd.f32 %v3405, %v3407
        %3467 = vadd.xlane.f32.xlu0 %v3466
        %v3468 = vpop.xlane.xlu0 %3467
        %v3469 = vadd.f32 %v3409, %v3411
        %3470 = vadd.xlane.f32.xlu0 %v3469
        %v3471 = vpop.xlane.xlu0 %3470
        %v3472 = vadd.f32 %v3413, %v3415
        %3473 = vadd.xlane.f32.xlu0 %v3472
        %v3474 = vpop.xlane.xlu0 %3473
        %v3475 = vadd.f32 %v3417, %v3419
        %3476 = vadd.xlane.f32.xlu0 %v3475
        %v3477 = vpop.xlane.xlu0 %3476
        %v3478 = vadd.f32 %v3421, %v3423
        %3479 = vadd.xlane.f32.xlu0 %v3478
        %v3480 = vpop.xlane.xlu0 %3479
        %v3481 = vadd.f32 %v3425, %v3427
        %3482 = vadd.xlane.f32.xlu0 %v3481
        %v3483 = vpop.xlane.xlu0 %3482
        %v3484 = vadd.f32 %v3429, %v3431
        %3485 = vadd.xlane.f32.xlu0 %v3484
        %v3486 = vpop.xlane.xlu0 %3485
        %v3487 = vadd.f32 %v3433, %v3435
        %3488 = vadd.xlane.f32.xlu0 %v3487
        %v3489 = vpop.xlane.xlu0 %3488
        %v3490 = vadd.f32 %v3437, %v3439
        %3491 = vadd.xlane.f32.xlu0 %v3490
        %v3492 = vpop.xlane.xlu0 %3491
        %v3493 = vadd.f32 %v3441, %v3443
        %3494 = vadd.xlane.f32.xlu0 %v3493
        %v3495 = vpop.xlane.xlu0 %3494
        %v3496 = vadd.f32 %v3445, %v3447
        %3497 = vadd.xlane.f32.xlu0 %v3496
        %v3498 = vpop.xlane.xlu0 %3497
        %v3499 = vadd.f32 %v3449, %v3451
        %3500 = vadd.xlane.f32.xlu0 %v3499
        %v3501 = vpop.xlane.xlu0 %3500
        %v3502 = vadd.f32 %v3453, %v3455
        %3503 = vadd.xlane.f32.xlu0 %v3502
        %v3504 = vpop.xlane.xlu0 %3503
        %v3505 = vadd.f32 %v3457, %v3459
        %3506 = vadd.xlane.f32.xlu0 %v3505
        %v3507 = vpop.xlane.xlu0 %3506
        %vm3508 = vcmp.gt.f32.partialorder %v3318, -5e+29
        %vm3509 = vcmp.gt.f32.partialorder %v3321, -5e+29
        %vm3510 = vcmp.gt.f32.partialorder %v3324, -5e+29
        %vm3511 = vcmp.gt.f32.partialorder %v3327, -5e+29
        %vm3512 = vcmp.gt.f32.partialorder %v3330, -5e+29
        %vm3513 = vcmp.gt.f32.partialorder %v3333, -5e+29
        %vm3514 = vcmp.gt.f32.partialorder %v3336, -5e+29
        %vm3515 = vcmp.gt.f32.partialorder %v3339, -5e+29
        %vm3516 = vcmp.gt.f32.partialorder %v3342, -5e+29
        %vm3517 = vcmp.gt.f32.partialorder %v3345, -5e+29
        %vm3518 = vcmp.gt.f32.partialorder %v3348, -5e+29
        %vm3519 = vcmp.gt.f32.partialorder %v3351, -5e+29
        %vm3520 = vcmp.gt.f32.partialorder %v3354, -5e+29
        %vm3521 = vcmp.gt.f32.partialorder %v3357, -5e+29
        %vm3522 = vcmp.gt.f32.partialorder %v3360, -5e+29
        %vm3523 = vcmp.gt.f32.partialorder %v3363, -5e+29
        %v3524 = vsel %vm3508, 1, 0
        %v3525 = vsel %vm3509, 1, 0
        %v3526 = vsel %vm3510, 1, 0
        %v3527 = vsel %vm3511, 1, 0
        %v3528 = vsel %vm3512, 1, 0
        %v3529 = vsel %vm3513, 1, 0
        %v3530 = vsel %vm3514, 1, 0
        %v3531 = vsel %vm3515, 1, 0
        %v3532 = vsel %vm3516, 1, 0
        %v3533 = vsel %vm3517, 1, 0
        %v3534 = vsel %vm3518, 1, 0
        %v3535 = vsel %vm3519, 1, 0
        %v3536 = vsel %vm3520, 1, 0
        %v3537 = vsel %vm3521, 1, 0
        %v3538 = vsel %vm3522, 1, 0
        %v3539 = vsel %vm3523, 1, 0
        %v3540 = vcvt.s32.f32 %v3524
        %v3541 = vcvt.s32.f32 %v3525
        %v3542 = vcvt.s32.f32 %v3526
        %v3543 = vcvt.s32.f32 %v3527
        %v3544 = vcvt.s32.f32 %v3528
        %v3545 = vcvt.s32.f32 %v3529
        %v3546 = vcvt.s32.f32 %v3530
        %v3547 = vcvt.s32.f32 %v3531
        %v3548 = vcvt.s32.f32 %v3532
        %v3549 = vcvt.s32.f32 %v3533
        %v3550 = vcvt.s32.f32 %v3534
        %v3551 = vcvt.s32.f32 %v3535
        %v3552 = vcvt.s32.f32 %v3536
        %v3553 = vcvt.s32.f32 %v3537
        %v3554 = vcvt.s32.f32 %v3538
        %v3555 = vcvt.s32.f32 %v3539
        %v3556 = vrcp.pop %v3462
        %v3557 = vrcp.pop %v3465
        %v3558 = vrcp.pop %v3468
        %v3559 = vrcp.pop %v3471
        %v3560 = vrcp.pop %v3474
        %v3561 = vrcp.pop %v3477
        %v3562 = vrcp.pop %v3480
        %v3563 = vrcp.pop %v3483
        %v3564 = vrcp.pop %v3486
        %v3565 = vrcp.pop %v3489
        %v3566 = vrcp.pop %v3492
        %v3567 = vrcp.pop %v3495
        %v3568 = vrcp.pop %v3498
        %v3569 = vrcp.pop %v3501
        %v3570 = vrcp.pop %v3504
        %v3571 = vrcp.pop %v3507
        %v3572 = vmul.f32 %v3556, %v3540
        %v3573 = vmul.f32 %v3557, %v3541
        %v3574 = vmul.f32 %v3558, %v3542
        %v3575 = vmul.f32 %v3559, %v3543
        %v3576 = vmul.f32 %v3560, %v3544
        %v3577 = vmul.f32 %v3561, %v3545
        %v3578 = vmul.f32 %v3562, %v3546
        %v3579 = vmul.f32 %v3563, %v3547
        %v3580 = vmul.f32 %v3564, %v3548
        %v3581 = vmul.f32 %v3565, %v3549
        %v3582 = vmul.f32 %v3566, %v3550
        %v3583 = vmul.f32 %v3567, %v3551
        %v3584 = vmul.f32 %v3568, %v3552
        %v3585 = vmul.f32 %v3569, %v3553
        %v3586 = vmul.f32 %v3570, %v3554
        %v3587 = vmul.f32 %v3571, %v3555
        %v3588 = vmul.f32 %v3397, %v3572
        %v3589 = vmul.f32 %v3399, %v3572
        %v3590 = vmul.f32 %v3401, %v3573
        %v3591 = vmul.f32 %v3403, %v3573
        %v3592 = vmul.f32 %v3405, %v3574
        %v3593 = vmul.f32 %v3407, %v3574
        %v3594 = vmul.f32 %v3409, %v3575
        %v3595 = vmul.f32 %v3411, %v3575
        %v3596 = vmul.f32 %v3413, %v3576
        %v3597 = vmul.f32 %v3415, %v3576
        %v3598 = vmul.f32 %v3417, %v3577
        %v3599 = vmul.f32 %v3419, %v3577
        %v3600 = vmul.f32 %v3421, %v3578
        %v3601 = vmul.f32 %v3423, %v3578
        %v3602 = vmul.f32 %v3425, %v3579
        %v3603 = vmul.f32 %v3427, %v3579
        %v3604 = vmul.f32 %v3429, %v3580
        %v3605 = vmul.f32 %v3431, %v3580
        %v3606 = vmul.f32 %v3433, %v3581
        %v3607 = vmul.f32 %v3435, %v3581
        %v3608 = vmul.f32 %v3437, %v3582
        %v3609 = vmul.f32 %v3439, %v3582
        %v3610 = vmul.f32 %v3441, %v3583
        %v3611 = vmul.f32 %v3443, %v3583
        %v3612 = vmul.f32 %v3445, %v3584
        %v3613 = vmul.f32 %v3447, %v3584
        %v3614 = vmul.f32 %v3449, %v3585
        %v3615 = vmul.f32 %v3451, %v3585
        %v3616 = vmul.f32 %v3453, %v3586
        %v3617 = vmul.f32 %v3455, %v3586
        %v3618 = vmul.f32 %v3457, %v3587
        %v3619 = vmul.f32 %v3459, %v3587
        %v3620 = vpack.c.bf16 %v3590, %v3588
        %v3621 = vpack.c.bf16 %v3591, %v3589
        %v3622 = vpack.c.bf16 %v3594, %v3592
        %v3623 = vpack.c.bf16 %v3595, %v3593
        %v3624 = vpack.c.bf16 %v3598, %v3596
        %v3625 = vpack.c.bf16 %v3599, %v3597
        %v3626 = vpack.c.bf16 %v3602, %v3600
        %v3627 = vpack.c.bf16 %v3603, %v3601
        %v3628 = vpack.c.bf16 %v3606, %v3604
        %v3629 = vpack.c.bf16 %v3607, %v3605
        %v3630 = vpack.c.bf16 %v3610, %v3608
        %v3631 = vpack.c.bf16 %v3611, %v3609
        %v3632 = vpack.c.bf16 %v3614, %v3612
        %v3633 = vpack.c.bf16 %v3615, %v3613
        %v3634 = vpack.c.bf16 %v3618, %v3616
        %v3635 = vpack.c.bf16 %v3619, %v3617
        %3636 = vmatprep.subr.bf16.mxu0 0
        %3637 = vmatpush1.bf16.msra.mxu0 %v1477
        %3638 = vmatprep.subr.bf16.mxu0 0
        %3639 = vmatpush1.bf16.msra.mxu0 %v1478
        %3640 = vmatprep.subr.bf16.mxu0 0
        %3641 = vmatpush1.bf16.msra.mxu0 %v1479
        %3642 = vmatprep.subr.bf16.mxu0 0
        %3643 = vmatpush1.bf16.msra.mxu0 %v1480
        %3644 = vmatprep.subr.bf16.mxu0 0
        %3645 = vmatpush1.bf16.msra.mxu0 %v1481
        %3646 = vmatprep.subr.bf16.mxu0 0
        %3647 = vmatpush1.bf16.msra.mxu0 %v1482
        %3648 = vmatprep.subr.bf16.mxu0 0
        %3649 = vmatpush1.bf16.msra.mxu0 %v1483
        %3650 = vmatprep.subr.bf16.mxu0 0
        %3651 = vmatpush1.bf16.msra.mxu0 %v1484
        %3652 = vmatprep.subr.bf16.mxu0 0
        %3653 = vmatpush1.bf16.msra.mxu0 %v1485
        %3654 = vmatprep.subr.bf16.mxu0 0
        %3655 = vmatpush1.bf16.msra.mxu0 %v1486
        %3656 = vmatprep.subr.bf16.mxu0 0
        %3657 = vmatpush1.bf16.msra.mxu0 %v1487
        %3658 = vmatprep.subr.bf16.mxu0 0
        %3659 = vmatpush1.bf16.msra.mxu0 %v1488
        %3660 = vmatprep.subr.bf16.mxu0 0
        %3661 = vmatpush1.bf16.msra.mxu0 %v1489
        %3662 = vmatprep.subr.bf16.mxu0 0
        %3663 = vmatpush1.bf16.msra.mxu0 %v1490
        %3664 = vmatprep.subr.bf16.mxu0 0
        %3665 = vmatpush1.bf16.msra.mxu0 %v1491
        %3666 = vmatprep.subr.bf16.mxu0 0
        %3667 = vmatpush1.bf16.msra.mxu0 %v1492
        %3668 = vmatprep.mubr.bf16.mxu0 %v3621
        %3669 = vmatmul.mubr.bf16.gmra.mrb[0].mxu0 %v3620
        %v3670 = vpop.f32.mrb[0].mxu0
        %v3671 = vadd.f32 0.0, %v3670
        %v3672 = vpop.f32.mrb[0].mxu0
        %v3673 = vpop.f32.mrb[0].mxu0
        %v3674 = vadd.f32 0.0, %v3673
        %v3675 = vpop.f32.mrb[0].mxu0
        %3676 = vmatprep.mubr.bf16.mxu0 %v3623
        %3677 = vmatmul.mubr.bf16.gmra.mrb[0].mxu0 %v3622
        %v3678 = vpop.f32.mrb[0].mxu0
        %v3679 = vadd.f32 0.0, %v3678
        %v3680 = vpop.f32.mrb[0].mxu0
        %v3681 = vpop.f32.mrb[0].mxu0
        %v3682 = vadd.f32 0.0, %v3681
        %v3683 = vpop.f32.mrb[0].mxu0
        %3684 = vmatprep.mubr.bf16.mxu0 %v3625
        %3685 = vmatmul.mubr.bf16.gmra.mrb[0].mxu0 %v3624
        %v3686 = vpop.f32.mrb[0].mxu0
        %v3687 = vadd.f32 0.0, %v3686
        %v3688 = vpop.f32.mrb[0].mxu0
        %v3689 = vpop.f32.mrb[0].mxu0
        %v3690 = vadd.f32 0.0, %v3689
        %v3691 = vpop.f32.mrb[0].mxu0
        %3692 = vmatprep.mubr.bf16.mxu0 %v3627
        %3693 = vmatmul.mubr.bf16.gmra.mrb[0].mxu0 %v3626
        %v3694 = vpop.f32.mrb[0].mxu0
        %v3695 = vadd.f32 0.0, %v3694
        %v3696 = vpop.f32.mrb[0].mxu0
        %v3697 = vpop.f32.mrb[0].mxu0
        %v3698 = vadd.f32 0.0, %v3697
        %v3699 = vpop.f32.mrb[0].mxu0
        %3700 = vmatprep.mubr.bf16.mxu0 %v3629
        %3701 = vmatmul.mubr.bf16.gmra.mrb[0].mxu0 %v3628
        %v3702 = vpop.f32.mrb[0].mxu0
        %v3703 = vadd.f32 0.0, %v3702
        %v3704 = vpop.f32.mrb[0].mxu0
        %v3705 = vpop.f32.mrb[0].mxu0
        %v3706 = vadd.f32 0.0, %v3705
        %v3707 = vpop.f32.mrb[0].mxu0
        %3708 = vmatprep.mubr.bf16.mxu0 %v3631
        %3709 = vmatmul.mubr.bf16.gmra.mrb[0].mxu0 %v3630
        %v3710 = vpop.f32.mrb[0].mxu0
        %v3711 = vadd.f32 0.0, %v3710
        %v3712 = vpop.f32.mrb[0].mxu0
        %v3713 = vpop.f32.mrb[0].mxu0
        %v3714 = vadd.f32 0.0, %v3713
        %v3715 = vpop.f32.mrb[0].mxu0
        %3716 = vmatprep.mubr.bf16.mxu0 %v3633
        %3717 = vmatmul.mubr.bf16.gmra.mrb[0].mxu0 %v3632
        %v3718 = vpop.f32.mrb[0].mxu0
        %v3719 = vadd.f32 0.0, %v3718
        %v3720 = vpop.f32.mrb[0].mxu0
        %v3721 = vpop.f32.mrb[0].mxu0
        %v3722 = vadd.f32 0.0, %v3721
        %v3723 = vpop.f32.mrb[0].mxu0
        %3724 = vmatprep.mubr.bf16.mxu0 %v3635
        %3725 = vmatmul.mubr.bf16.gmra.mrb[0].mxu0 %v3634
        %v3726 = vpop.f32.mrb[0].mxu0
        %v3727 = vadd.f32 0.0, %v3726
        %v3728 = vpop.f32.mrb[0].mxu0
        %v3729 = vpop.f32.mrb[0].mxu0
        %v3730 = vadd.f32 0.0, %v3729
        %v3731 = vpop.f32.mrb[0].mxu0
        %3732 = vdwg.mxu0
        %v3733 = vunpack.c.l.bf16 %v3062
        %v3734 = vlaneseq
        %v3735 = vshrl.u32 %v3734, 7
        %v3736 = vsub.s32 0, %v3735
        %v3737 = vrot.slane %v3733, %v3736
        %v3738 = vmul.f32 %v3671, %v3737
        %v3739 = vmul.f32 %v3674, %v3737
        %v3740 = vmul.f32 %v3679, %v3737
        %v3741 = vmul.f32 %v3682, %v3737
        %v3742 = vmul.f32 %v3687, %v3737
        %v3743 = vmul.f32 %v3690, %v3737
        %v3744 = vmul.f32 %v3695, %v3737
        %v3745 = vmul.f32 %v3698, %v3737
        %v3746 = vmul.f32 %v3703, %v3737
        %v3747 = vmul.f32 %v3706, %v3737
        %v3748 = vmul.f32 %v3711, %v3737
        %v3749 = vmul.f32 %v3714, %v3737
        %v3750 = vmul.f32 %v3719, %v3737
        %v3751 = vmul.f32 %v3722, %v3737
        %v3752 = vmul.f32 %v3727, %v3737
        %v3753 = vmul.f32 %v3730, %v3737
        %v3754 = vadd.f32 %v3045, %v3738
        %v3755 = vadd.f32 %v3046, %v3739
        %v3756 = vadd.f32 %v3047, %v3740
        %v3757 = vadd.f32 %v3048, %v3741
        %v3758 = vadd.f32 %v3049, %v3742
        %v3759 = vadd.f32 %v3050, %v3743
        %v3760 = vadd.f32 %v3051, %v3744
        %v3761 = vadd.f32 %v3052, %v3745
        %v3762 = vadd.f32 %v3053, %v3746
        %v3763 = vadd.f32 %v3054, %v3747
        %v3764 = vadd.f32 %v3055, %v3748
        %v3765 = vadd.f32 %v3056, %v3749
        %v3766 = vadd.f32 %v3057, %v3750
        %v3767 = vadd.f32 %v3058, %v3751
        %v3768 = vadd.f32 %v3059, %v3752
        %v3769 = vadd.f32 %v3060, %v3753
        %v3770 = vld [vmem:[%s8] sm:$0xff]
        %v3771 = vld [vmem:[%s8 + $0x8] sm:$0xff]
        %v3772 = vld [vmem:[%s8 + $0x10] sm:$0xff]
        %v3773 = vld [vmem:[%s8 + $0x18] sm:$0xff]
        %v3775 = vsel %vm907, %v3754, 0
        %v3778 = vsel %vm907, %v3755, 0
        %v3781 = vsel %vm907, %v3756, 0
        %v3784 = vsel %vm907, %v3757, 0
        %v3787 = vsel %vm907, %v3758, 0
        %v3790 = vsel %vm907, %v3759, 0
        %v3793 = vsel %vm907, %v3760, 0
        %v3796 = vsel %vm907, %v3761, 0
        %v3799 = vsel %vm907, %v3762, 0
        %v3802 = vsel %vm907, %v3763, 0
        %v3805 = vsel %vm907, %v3764, 0
        %v3808 = vsel %vm907, %v3765, 0
        %v3811 = vsel %vm907, %v3766, 0
        %v3814 = vsel %vm907, %v3767, 0
        %v3817 = vsel %vm907, %v3768, 0
        %v3820 = vsel %vm907, %v3769, 0
        %3822 = vmatprep.subr.mxu0 0.0
        %3823 = vmatpush1.msra.mxu0 %v3770
        %3824 = vmatprep.subr.mxu0 0.0
        %3825 = vmatpush1.msra.mxu0 %v3771
        %3826 = vmatprep.subr.mxu0 0.0
        %3827 = vmatpush1.msra.mxu0 %v3772
        %3828 = vmatprep.subr.mxu0 0.0
        %3829 = vmatpush1.msra.mxu0 %v3773
        %3830 = vmatprep.subr.mxu0 0.0
        %3831 = vmatpush1.msra.mxu0 0.0
        %3832 = vmatprep.subr.mxu0 0.0
        %3833 = vmatpush1.msra.mxu0 0.0
        %3834 = vmatprep.subr.mxu0 0.0
        %3835 = vmatpush1.msra.mxu0 0.0
        %3836 = vmatprep.subr.mxu0 0.0
        %3837 = vmatpush1.msra.mxu0 0.0
        %3838 = vmatprep.subr.mxu0 0.0
        %3839 = vmatpush1.msra.mxu0 0.0
        %3840 = vmatprep.subr.mxu0 0.0
        %3841 = vmatpush1.msra.mxu0 0.0
        %3842 = vmatprep.subr.mxu0 0.0
        %3843 = vmatpush1.msra.mxu0 0.0
        %3844 = vmatprep.subr.mxu0 0.0
        %3845 = vmatpush1.msra.mxu0 0.0
        %3846 = vmatprep.subr.mxu0 0.0
        %3847 = vmatpush1.msra.mxu0 0.0
        %3848 = vmatprep.subr.mxu0 0.0
        %3849 = vmatpush1.msra.mxu0 0.0
        %3850 = vmatprep.subr.mxu0 0.0
        %3851 = vmatpush1.msra.mxu0 0.0
        %3852 = vmatprep.subr.mxu0 0.0
        %3853 = vmatpush1.msra.mxu0 0.0
        %3854 = vmatprep.subr.mxu0 0.0
        %3855 = vmatpush1.msra.mxu0 0.0
        %3856 = vmatprep.subr.mxu0 0.0
        %3857 = vmatpush1.msra.mxu0 0.0
        %3858 = vmatprep.subr.mxu0 0.0
        %3859 = vmatpush1.msra.mxu0 0.0
        %3860 = vmatprep.subr.mxu0 0.0
        %3861 = vmatpush1.msra.mxu0 0.0
        %3862 = vmatprep.subr.mxu0 0.0
        %3863 = vmatpush1.msra.mxu0 0.0
        %3864 = vmatprep.subr.mxu0 0.0
        %3865 = vmatpush1.msra.mxu0 0.0
        %3866 = vmatprep.subr.mxu0 0.0
        %3867 = vmatpush1.msra.mxu0 0.0
        %3868 = vmatprep.subr.mxu0 0.0
        %3869 = vmatpush1.msra.mxu0 0.0
        %3870 = vmatprep.subr.mxu0 0.0
        %3871 = vmatpush1.msra.mxu0 0.0
        %3872 = vmatprep.subr.mxu0 0.0
        %3873 = vmatpush1.msra.mxu0 0.0
        %3874 = vmatprep.subr.mxu0 0.0
        %3875 = vmatpush1.msra.mxu0 0.0
        %3876 = vmatprep.subr.mxu0 0.0
        %3877 = vmatpush1.msra.mxu0 0.0
        %3878 = vmatprep.subr.mxu0 0.0
        %3879 = vmatpush1.msra.mxu0 0.0
        %3880 = vmatprep.subr.mxu0 0.0
        %3881 = vmatpush1.msra.mxu0 0.0
        %3882 = vmatprep.subr.mxu0 0.0
        %3883 = vmatpush1.msra.mxu0 0.0
        %3884 = vmatprep.subr.mxu0 0.0
        %3885 = vmatpush1.msra.mxu0 0.0
        %3886 = vmatprep.mubr.f32.mxu0 0.0
        %3887 = vmatmul.mubr.f32.gmra.mrb[0].mxu0 %v3775
        %v3888 = vpop.f32.mrb[0].mxu0
        %v3889 = vadd.f32 0.0, %v3888
        %v3890 = vpop.f32.mrb[0].mxu0
        %3891 = vmatprep.mubr.f32.mxu0 0.0
        %3892 = vmatmul.mubr.f32.gmra.mrb[0].mxu0 %v3778
        %v3893 = vpop.f32.mrb[0].mxu0
        %v3894 = vadd.f32 0.0, %v3893
        %v3895 = vpop.f32.mrb[0].mxu0
        %3896 = vmatprep.mubr.f32.mxu0 0.0
        %3897 = vmatmul.mubr.f32.gmra.mrb[0].mxu0 %v3781
        %v3898 = vpop.f32.mrb[0].mxu0
        %v3899 = vadd.f32 0.0, %v3898
        %v3900 = vpop.f32.mrb[0].mxu0
        %3901 = vmatprep.mubr.f32.mxu0 0.0
        %3902 = vmatmul.mubr.f32.gmra.mrb[0].mxu0 %v3784
        %v3903 = vpop.f32.mrb[0].mxu0
        %v3904 = vadd.f32 0.0, %v3903
        %v3905 = vpop.f32.mrb[0].mxu0
        %3906 = vmatprep.mubr.f32.mxu0 0.0
        %3907 = vmatmul.mubr.f32.gmra.mrb[0].mxu0 %v3787
        %v3908 = vpop.f32.mrb[0].mxu0
        %v3909 = vadd.f32 0.0, %v3908
        %v3910 = vpop.f32.mrb[0].mxu0
        %3911 = vmatprep.mubr.f32.mxu0 0.0
        %3912 = vmatmul.mubr.f32.gmra.mrb[0].mxu0 %v3790
        %v3913 = vpop.f32.mrb[0].mxu0
        %v3914 = vadd.f32 0.0, %v3913
        %v3915 = vpop.f32.mrb[0].mxu0
        %3916 = vmatprep.mubr.f32.mxu0 0.0
        %3917 = vmatmul.mubr.f32.gmra.mrb[0].mxu0 %v3793
        %v3918 = vpop.f32.mrb[0].mxu0
        %v3919 = vadd.f32 0.0, %v3918
        %v3920 = vpop.f32.mrb[0].mxu0
        %3921 = vmatprep.mubr.f32.mxu0 0.0
        %3922 = vmatmul.mubr.f32.gmra.mrb[0].mxu0 %v3796
        %v3923 = vpop.f32.mrb[0].mxu0
        %v3924 = vadd.f32 0.0, %v3923
        %v3925 = vpop.f32.mrb[0].mxu0
        %3926 = vmatprep.mubr.f32.mxu0 0.0
        %3927 = vmatmul.mubr.f32.gmra.mrb[0].mxu0 %v3799
        %v3928 = vpop.f32.mrb[0].mxu0
        %v3929 = vadd.f32 0.0, %v3928
        %v3930 = vpop.f32.mrb[0].mxu0
        %3931 = vmatprep.mubr.f32.mxu0 0.0
        %3932 = vmatmul.mubr.f32.gmra.mrb[0].mxu0 %v3802
        %v3933 = vpop.f32.mrb[0].mxu0
        %v3934 = vadd.f32 0.0, %v3933
        %v3935 = vpop.f32.mrb[0].mxu0
        %3936 = vmatprep.mubr.f32.mxu0 0.0
        %3937 = vmatmul.mubr.f32.gmra.mrb[0].mxu0 %v3805
        %v3938 = vpop.f32.mrb[0].mxu0
        %v3939 = vadd.f32 0.0, %v3938
        %v3940 = vpop.f32.mrb[0].mxu0
        %3941 = vmatprep.mubr.f32.mxu0 0.0
        %3942 = vmatmul.mubr.f32.gmra.mrb[0].mxu0 %v3808
        %v3943 = vpop.f32.mrb[0].mxu0
        %v3944 = vadd.f32 0.0, %v3943
        %v3945 = vpop.f32.mrb[0].mxu0
        %3946 = vmatprep.mubr.f32.mxu0 0.0
        %3947 = vmatmul.mubr.f32.gmra.mrb[0].mxu0 %v3811
        %v3948 = vpop.f32.mrb[0].mxu0
        %v3949 = vadd.f32 0.0, %v3948
        %v3950 = vpop.f32.mrb[0].mxu0
        %3951 = vmatprep.mubr.f32.mxu0 0.0
        %3952 = vmatmul.mubr.f32.gmra.mrb[0].mxu0 %v3814
        %v3953 = vpop.f32.mrb[0].mxu0
        %v3954 = vadd.f32 0.0, %v3953
        %v3955 = vpop.f32.mrb[0].mxu0
        %3956 = vmatprep.mubr.f32.mxu0 0.0
        %3957 = vmatmul.mubr.f32.gmra.mrb[0].mxu0 %v3817
        %v3958 = vpop.f32.mrb[0].mxu0
        %v3959 = vadd.f32 0.0, %v3958
        %v3960 = vpop.f32.mrb[0].mxu0
        %3961 = vmatprep.mubr.f32.mxu0 0.0
        %3962 = vmatmul.mubr.f32.gmra.mrb[0].mxu0 %v3820
        %v3963 = vpop.f32.mrb[0].mxu0
        %v3964 = vadd.f32 0.0, %v3963
        %v3965 = vpop.f32.mrb[0].mxu0
        %3966 = vdwg.mxu0
        %v3967 = vadd.f32 %v615, %v3889
        %v3968 = vadd.f32 %v616, %v3894
        %v3969 = vadd.f32 %v617, %v3899
        %v3970 = vadd.f32 %v618, %v3904
        %v3971 = vadd.f32 %v619, %v3909
        %v3972 = vadd.f32 %v620, %v3914
        %v3973 = vadd.f32 %v621, %v3919
        %v3974 = vadd.f32 %v622, %v3924
        %v3975 = vadd.f32 %v623, %v3929
        %v3976 = vadd.f32 %v624, %v3934
        %v3977 = vadd.f32 %v625, %v3939
        %v3978 = vadd.f32 %v626, %v3944
        %v3979 = vadd.f32 %v627, %v3949
        %v3980 = vadd.f32 %v628, %v3954
        %v3981 = vadd.f32 %v629, %v3959
        %v3982 = vadd.f32 %v630, %v3964
        %v3983 = vld [vmem:[%s9] sm:$0x1]
        %v3985 = vlaneseq
        %v3986 = vshrl.u32 %v3985, 7
        %v3987 = vsub.s32 0, %v3986
        %v3988 = vrot.slane %v3983, %v3987
        %v3990 = vadd.f32 %v3967, %v3988
        %v3991 = vadd.f32 %v3968, %v3988
        %v3992 = vadd.f32 %v3969, %v3988
        %v3993 = vadd.f32 %v3970, %v3988
        %v3994 = vadd.f32 %v3971, %v3988
        %v3995 = vadd.f32 %v3972, %v3988
        %v3996 = vadd.f32 %v3973, %v3988
        %v3997 = vadd.f32 %v3974, %v3988
        %v3998 = vadd.f32 %v3975, %v3988
        %v3999 = vadd.f32 %v3976, %v3988
        %v4000 = vadd.f32 %v3977, %v3988
        %v4001 = vadd.f32 %v3978, %v3988
        %v4002 = vadd.f32 %v3979, %v3988
        %v4003 = vadd.f32 %v3980, %v3988
        %v4004 = vadd.f32 %v3981, %v3988
        %v4005 = vadd.f32 %v3982, %v3988
        %v4006 = vld [vmem:[%s6] sm:$0x1]
        %v4007 = vld [vmem:[%s7] sm:$0x1]
        %v4008 = vsel %vm907, %v3990, 0.0
        %4009 = vadd.xlane.f32.xlu0 %v4008
        %v4010 = vpop.xlane.xlu0 %4009
        %v4011 = vsel %vm907, %v3991, 0.0
        %4012 = vadd.xlane.f32.xlu0 %v4011
        %v4013 = vpop.xlane.xlu0 %4012
        %v4014 = vsel %vm907, %v3992, 0.0
        %4015 = vadd.xlane.f32.xlu0 %v4014
        %v4016 = vpop.xlane.xlu0 %4015
        %v4017 = vsel %vm907, %v3993, 0.0
        %4018 = vadd.xlane.f32.xlu0 %v4017
        %v4019 = vpop.xlane.xlu0 %4018
        %v4020 = vsel %vm907, %v3994, 0.0
        %4021 = vadd.xlane.f32.xlu0 %v4020
        %v4022 = vpop.xlane.xlu0 %4021
        %v4023 = vsel %vm907, %v3995, 0.0
        %4024 = vadd.xlane.f32.xlu0 %v4023
        %v4025 = vpop.xlane.xlu0 %4024
        %v4026 = vsel %vm907, %v3996, 0.0
        %4027 = vadd.xlane.f32.xlu0 %v4026
        %v4028 = vpop.xlane.xlu0 %4027
        %v4029 = vsel %vm907, %v3997, 0.0
        %4030 = vadd.xlane.f32.xlu0 %v4029
        %v4031 = vpop.xlane.xlu0 %4030
        %v4032 = vsel %vm907, %v3998, 0.0
        %4033 = vadd.xlane.f32.xlu0 %v4032
        %v4034 = vpop.xlane.xlu0 %4033
        %v4035 = vsel %vm907, %v3999, 0.0
        %4036 = vadd.xlane.f32.xlu0 %v4035
        %v4037 = vpop.xlane.xlu0 %4036
        %v4038 = vsel %vm907, %v4000, 0.0
        %4039 = vadd.xlane.f32.xlu0 %v4038
        %v4040 = vpop.xlane.xlu0 %4039
        %v4041 = vsel %vm907, %v4001, 0.0
        %4042 = vadd.xlane.f32.xlu0 %v4041
        %v4043 = vpop.xlane.xlu0 %4042
        %v4044 = vsel %vm907, %v4002, 0.0
        %4045 = vadd.xlane.f32.xlu0 %v4044
        %v4046 = vpop.xlane.xlu0 %4045
        %v4047 = vsel %vm907, %v4003, 0.0
        %4048 = vadd.xlane.f32.xlu0 %v4047
        %v4049 = vpop.xlane.xlu0 %4048
        %v4050 = vsel %vm907, %v4004, 0.0
        %4051 = vadd.xlane.f32.xlu0 %v4050
        %v4052 = vpop.xlane.xlu0 %4051
        %v4053 = vsel %vm907, %v4005, 0.0
        %4054 = vadd.xlane.f32.xlu0 %v4053
        %v4055 = vpop.xlane.xlu0 %4054
        %v4056 = vrcp.pop 32.0
        %v4057 = vmul.f32 %v4010, %v4056
        %v4058 = vmul.f32 %v4013, %v4056
        %v4059 = vmul.f32 %v4016, %v4056
        %v4060 = vmul.f32 %v4019, %v4056
        %v4061 = vmul.f32 %v4022, %v4056
        %v4062 = vmul.f32 %v4025, %v4056
        %v4063 = vmul.f32 %v4028, %v4056
        %v4064 = vmul.f32 %v4031, %v4056
        %v4065 = vmul.f32 %v4034, %v4056
        %v4066 = vmul.f32 %v4037, %v4056
        %v4067 = vmul.f32 %v4040, %v4056
        %v4068 = vmul.f32 %v4043, %v4056
        %v4069 = vmul.f32 %v4046, %v4056
        %v4070 = vmul.f32 %v4049, %v4056
        %v4071 = vmul.f32 %v4052, %v4056
        %v4072 = vmul.f32 %v4055, %v4056
        %v4073 = vsub.f32 %v3990, %v4057
        %v4074 = vsub.f32 %v3991, %v4058
        %v4075 = vsub.f32 %v3992, %v4059
        %v4076 = vsub.f32 %v3993, %v4060
        %v4077 = vsub.f32 %v3994, %v4061
        %v4078 = vsub.f32 %v3995, %v4062
        %v4079 = vsub.f32 %v3996, %v4063
        %v4080 = vsub.f32 %v3997, %v4064
        %v4081 = vsub.f32 %v3998, %v4065
        %v4082 = vsub.f32 %v3999, %v4066
        %v4083 = vsub.f32 %v4000, %v4067
        %v4084 = vsub.f32 %v4001, %v4068
        %v4085 = vsub.f32 %v4002, %v4069
        %v4086 = vsub.f32 %v4003, %v4070
        %v4087 = vsub.f32 %v4004, %v4071
        %v4088 = vsub.f32 %v4005, %v4072
        %v4089 = vmul.f32 %v4073, %v4073
        %v4090 = vmul.f32 %v4074, %v4074
        %v4091 = vmul.f32 %v4075, %v4075
        %v4092 = vmul.f32 %v4076, %v4076
        %v4093 = vmul.f32 %v4077, %v4077
        %v4094 = vmul.f32 %v4078, %v4078
        %v4095 = vmul.f32 %v4079, %v4079
        %v4096 = vmul.f32 %v4080, %v4080
        %v4097 = vmul.f32 %v4081, %v4081
        %v4098 = vmul.f32 %v4082, %v4082
        %v4099 = vmul.f32 %v4083, %v4083
        %v4100 = vmul.f32 %v4084, %v4084
        %v4101 = vmul.f32 %v4085, %v4085
        %v4102 = vmul.f32 %v4086, %v4086
        %v4103 = vmul.f32 %v4087, %v4087
        %v4104 = vmul.f32 %v4088, %v4088
        %v4105 = vsel %vm907, %v4089, 0.0
        %4106 = vadd.xlane.f32.xlu0 %v4105
        %v4107 = vpop.xlane.xlu0 %4106
        %v4108 = vsel %vm907, %v4090, 0.0
        %4109 = vadd.xlane.f32.xlu0 %v4108
        %v4110 = vpop.xlane.xlu0 %4109
        %v4111 = vsel %vm907, %v4091, 0.0
        %4112 = vadd.xlane.f32.xlu0 %v4111
        %v4113 = vpop.xlane.xlu0 %4112
        %v4114 = vsel %vm907, %v4092, 0.0
        %4115 = vadd.xlane.f32.xlu0 %v4114
        %v4116 = vpop.xlane.xlu0 %4115
        %v4117 = vsel %vm907, %v4093, 0.0
        %4118 = vadd.xlane.f32.xlu0 %v4117
        %v4119 = vpop.xlane.xlu0 %4118
        %v4120 = vsel %vm907, %v4094, 0.0
        %4121 = vadd.xlane.f32.xlu0 %v4120
        %v4122 = vpop.xlane.xlu0 %4121
        %v4123 = vsel %vm907, %v4095, 0.0
        %4124 = vadd.xlane.f32.xlu0 %v4123
        %v4125 = vpop.xlane.xlu0 %4124
        %v4126 = vsel %vm907, %v4096, 0.0
        %4127 = vadd.xlane.f32.xlu0 %v4126
        %v4128 = vpop.xlane.xlu0 %4127
        %v4129 = vsel %vm907, %v4097, 0.0
        %4130 = vadd.xlane.f32.xlu0 %v4129
        %v4131 = vpop.xlane.xlu0 %4130
        %v4132 = vsel %vm907, %v4098, 0.0
        %4133 = vadd.xlane.f32.xlu0 %v4132
        %v4134 = vpop.xlane.xlu0 %4133
        %v4135 = vsel %vm907, %v4099, 0.0
        %4136 = vadd.xlane.f32.xlu0 %v4135
        %v4137 = vpop.xlane.xlu0 %4136
        %v4138 = vsel %vm907, %v4100, 0.0
        %4139 = vadd.xlane.f32.xlu0 %v4138
        %v4140 = vpop.xlane.xlu0 %4139
        %v4141 = vsel %vm907, %v4101, 0.0
        %4142 = vadd.xlane.f32.xlu0 %v4141
        %v4143 = vpop.xlane.xlu0 %4142
        %v4144 = vsel %vm907, %v4102, 0.0
        %4145 = vadd.xlane.f32.xlu0 %v4144
        %v4146 = vpop.xlane.xlu0 %4145
        %v4147 = vsel %vm907, %v4103, 0.0
        %4148 = vadd.xlane.f32.xlu0 %v4147
        %v4149 = vpop.xlane.xlu0 %4148
        %v4150 = vsel %vm907, %v4104, 0.0
        %4151 = vadd.xlane.f32.xlu0 %v4150
        %v4152 = vpop.xlane.xlu0 %4151
        %v4153 = vmul.f32 %v4107, %v4056
        %v4154 = vmul.f32 %v4110, %v4056
        %v4155 = vmul.f32 %v4113, %v4056
        %v4156 = vmul.f32 %v4116, %v4056
        %v4157 = vmul.f32 %v4119, %v4056
        %v4158 = vmul.f32 %v4122, %v4056
        %v4159 = vmul.f32 %v4125, %v4056
        %v4160 = vmul.f32 %v4128, %v4056
        %v4161 = vmul.f32 %v4131, %v4056
        %v4162 = vmul.f32 %v4134, %v4056
        %v4163 = vmul.f32 %v4137, %v4056
        %v4164 = vmul.f32 %v4140, %v4056
        %v4165 = vmul.f32 %v4143, %v4056
        %v4166 = vmul.f32 %v4146, %v4056
        %v4167 = vmul.f32 %v4149, %v4056
        %v4168 = vmul.f32 %v4152, %v4056
        %v4169 = vadd.f32 %v4153, 1e-05
        %v4170 = vadd.f32 %v4154, 1e-05
        %v4171 = vadd.f32 %v4155, 1e-05
        %v4172 = vadd.f32 %v4156, 1e-05
        %v4173 = vadd.f32 %v4157, 1e-05
        %v4174 = vadd.f32 %v4158, 1e-05
        %v4175 = vadd.f32 %v4159, 1e-05
        %v4176 = vadd.f32 %v4160, 1e-05
        %v4177 = vadd.f32 %v4161, 1e-05
        %v4178 = vadd.f32 %v4162, 1e-05
        %v4179 = vadd.f32 %v4163, 1e-05
        %v4180 = vadd.f32 %v4164, 1e-05
        %v4181 = vadd.f32 %v4165, 1e-05
        %v4182 = vadd.f32 %v4166, 1e-05
        %v4183 = vadd.f32 %v4167, 1e-05
        %v4184 = vadd.f32 %v4168, 1e-05
        %v4185 = vrsqrt.pop %v4169
        %v4186 = vrsqrt.pop %v4170
        %v4187 = vrsqrt.pop %v4171
        %v4188 = vrsqrt.pop %v4172
        %v4189 = vrsqrt.pop %v4173
        %v4190 = vrsqrt.pop %v4174
        %v4191 = vrsqrt.pop %v4175
        %v4192 = vrsqrt.pop %v4176
        %v4193 = vrsqrt.pop %v4177
        %v4194 = vrsqrt.pop %v4178
        %v4195 = vrsqrt.pop %v4179
        %v4196 = vrsqrt.pop %v4180
        %v4197 = vrsqrt.pop %v4181
        %v4198 = vrsqrt.pop %v4182
        %v4199 = vrsqrt.pop %v4183
        %v4200 = vrsqrt.pop %v4184
        %v4201 = vmul.f32 %v4073, %v4185
        %v4202 = vmul.f32 %v4074, %v4186
        %v4203 = vmul.f32 %v4075, %v4187
        %v4204 = vmul.f32 %v4076, %v4188
        %v4205 = vmul.f32 %v4077, %v4189
        %v4206 = vmul.f32 %v4078, %v4190
        %v4207 = vmul.f32 %v4079, %v4191
        %v4208 = vmul.f32 %v4080, %v4192
        %v4209 = vmul.f32 %v4081, %v4193
        %v4210 = vmul.f32 %v4082, %v4194
        %v4211 = vmul.f32 %v4083, %v4195
        %v4212 = vmul.f32 %v4084, %v4196
        %v4213 = vmul.f32 %v4085, %v4197
        %v4214 = vmul.f32 %v4086, %v4198
        %v4215 = vmul.f32 %v4087, %v4199
        %v4216 = vmul.f32 %v4088, %v4200
        %v4218 = vlaneseq
        %v4219 = vshrl.u32 %v4218, 7
        %v4220 = vsub.s32 0, %v4219
        %v4221 = vrot.slane %v4006, %v4220
        %v4223 = vmul.f32 %v4201, %v4221
        %v4224 = vmul.f32 %v4202, %v4221
        %v4225 = vmul.f32 %v4203, %v4221
        %v4226 = vmul.f32 %v4204, %v4221
        %v4227 = vmul.f32 %v4205, %v4221
        %v4228 = vmul.f32 %v4206, %v4221
        %v4229 = vmul.f32 %v4207, %v4221
        %v4230 = vmul.f32 %v4208, %v4221
        %v4231 = vmul.f32 %v4209, %v4221
        %v4232 = vmul.f32 %v4210, %v4221
        %v4233 = vmul.f32 %v4211, %v4221
        %v4234 = vmul.f32 %v4212, %v4221
        %v4235 = vmul.f32 %v4213, %v4221
        %v4236 = vmul.f32 %v4214, %v4221
        %v4237 = vmul.f32 %v4215, %v4221
        %v4238 = vmul.f32 %v4216, %v4221
        %v4240 = vlaneseq
        %v4241 = vshrl.u32 %v4240, 7
        %v4242 = vsub.s32 0, %v4241
        %v4243 = vrot.slane %v4007, %v4242
        %v4245 = vadd.f32 %v4223, %v4243
        %v4246 = vadd.f32 %v4224, %v4243
        %v4247 = vadd.f32 %v4225, %v4243
        %v4248 = vadd.f32 %v4226, %v4243
        %v4249 = vadd.f32 %v4227, %v4243
        %v4250 = vadd.f32 %v4228, %v4243
        %v4251 = vadd.f32 %v4229, %v4243
        %v4252 = vadd.f32 %v4230, %v4243
        %v4253 = vadd.f32 %v4231, %v4243
        %v4254 = vadd.f32 %v4232, %v4243
        %v4255 = vadd.f32 %v4233, %v4243
        %v4256 = vadd.f32 %v4234, %v4243
        %v4257 = vadd.f32 %v4235, %v4243
        %v4258 = vadd.f32 %v4236, %v4243
        %v4259 = vadd.f32 %v4237, %v4243
        %v4260 = vadd.f32 %v4238, %v4243
        %v4261 = vld [vmem:[%s10] sm:$0xff]
        %v4262 = vld [vmem:[%s10 + $0x8] sm:$0xff]
        %v4263 = vld [vmem:[%s10 + $0x10] sm:$0xff]
        %v4264 = vld [vmem:[%s10 + $0x18] sm:$0xff]
        %v4265 = vld [vmem:[%s11] sm:$0x1]
        %v4267 = vlaneseq
        %v4268 = vshrl.u32 %v4267, 7
        %v4269 = vsub.s32 0, %v4268
        %v4270 = vrot.slane %v4265, %v4269
        %v4273 = vsel %vm907, %v4245, 0
        %v4276 = vsel %vm907, %v4246, 0
        %v4279 = vsel %vm907, %v4247, 0
        %v4282 = vsel %vm907, %v4248, 0
        %v4285 = vsel %vm907, %v4249, 0
        %v4288 = vsel %vm907, %v4250, 0
        %v4291 = vsel %vm907, %v4251, 0
        %v4294 = vsel %vm907, %v4252, 0
        %v4297 = vsel %vm907, %v4253, 0
        %v4300 = vsel %vm907, %v4254, 0
        %v4303 = vsel %vm907, %v4255, 0
        %v4306 = vsel %vm907, %v4256, 0
        %v4309 = vsel %vm907, %v4257, 0
        %v4312 = vsel %vm907, %v4258, 0
        %v4315 = vsel %vm907, %v4259, 0
        %v4318 = vsel %vm907, %v4260, 0
        %4320 = vmatprep.subr.mxu0 0.0
        %4321 = vmatpush1.msra.mxu0 %v4261
        %4322 = vmatprep.subr.mxu0 0.0
        %4323 = vmatpush1.msra.mxu0 %v4262
        %4324 = vmatprep.subr.mxu0 0.0
        %4325 = vmatpush1.msra.mxu0 %v4263
        %4326 = vmatprep.subr.mxu0 0.0
        %4327 = vmatpush1.msra.mxu0 %v4264
        %4328 = vmatprep.subr.mxu0 0.0
        %4329 = vmatpush1.msra.mxu0 0.0
        %4330 = vmatprep.subr.mxu0 0.0
        %4331 = vmatpush1.msra.mxu0 0.0
        %4332 = vmatprep.subr.mxu0 0.0
        %4333 = vmatpush1.msra.mxu0 0.0
        %4334 = vmatprep.subr.mxu0 0.0
        %4335 = vmatpush1.msra.mxu0 0.0
        %4336 = vmatprep.subr.mxu0 0.0
        %4337 = vmatpush1.msra.mxu0 0.0
        %4338 = vmatprep.subr.mxu0 0.0
        %4339 = vmatpush1.msra.mxu0 0.0
        %4340 = vmatprep.subr.mxu0 0.0
        %4341 = vmatpush1.msra.mxu0 0.0
        %4342 = vmatprep.subr.mxu0 0.0
        %4343 = vmatpush1.msra.mxu0 0.0
        %4344 = vmatprep.subr.mxu0 0.0
        %4345 = vmatpush1.msra.mxu0 0.0
        %4346 = vmatprep.subr.mxu0 0.0
        %4347 = vmatpush1.msra.mxu0 0.0
        %4348 = vmatprep.subr.mxu0 0.0
        %4349 = vmatpush1.msra.mxu0 0.0
        %4350 = vmatprep.subr.mxu0 0.0
        %4351 = vmatpush1.msra.mxu0 0.0
        %4352 = vmatprep.subr.mxu0 0.0
        %4353 = vmatpush1.msra.mxu0 0.0
        %4354 = vmatprep.subr.mxu0 0.0
        %4355 = vmatpush1.msra.mxu0 0.0
        %4356 = vmatprep.subr.mxu0 0.0
        %4357 = vmatpush1.msra.mxu0 0.0
        %4358 = vmatprep.subr.mxu0 0.0
        %4359 = vmatpush1.msra.mxu0 0.0
        %4360 = vmatprep.subr.mxu0 0.0
        %4361 = vmatpush1.msra.mxu0 0.0
        %4362 = vmatprep.subr.mxu0 0.0
        %4363 = vmatpush1.msra.mxu0 0.0
        %4364 = vmatprep.subr.mxu0 0.0
        %4365 = vmatpush1.msra.mxu0 0.0
        %4366 = vmatprep.subr.mxu0 0.0
        %4367 = vmatpush1.msra.mxu0 0.0
        %4368 = vmatprep.subr.mxu0 0.0
        %4369 = vmatpush1.msra.mxu0 0.0
        %4370 = vmatprep.subr.mxu0 0.0
        %4371 = vmatpush1.msra.mxu0 0.0
        %4372 = vmatprep.subr.mxu0 0.0
        %4373 = vmatpush1.msra.mxu0 0.0
        %4374 = vmatprep.subr.mxu0 0.0
        %4375 = vmatpush1.msra.mxu0 0.0
        %4376 = vmatprep.subr.mxu0 0.0
        %4377 = vmatpush1.msra.mxu0 0.0
        %4378 = vmatprep.subr.mxu0 0.0
        %4379 = vmatpush1.msra.mxu0 0.0
        %4380 = vmatprep.subr.mxu0 0.0
        %4381 = vmatpush1.msra.mxu0 0.0
        %4382 = vmatprep.subr.mxu0 0.0
        %4383 = vmatpush1.msra.mxu0 0.0
        %4384 = vmatprep.mubr.f32.mxu0 0.0
        %4385 = vmatmul.mubr.f32.gmra.mrb[0].mxu0 %v4273
        %v4386 = vpop.f32.mrb[0].mxu0
        %v4387 = vadd.f32 %v4270, %v4386
        %v4388 = vpop.f32.mrb[0].mxu0
        %4389 = vmatprep.mubr.f32.mxu0 0.0
        %4390 = vmatmul.mubr.f32.gmra.mrb[0].mxu0 %v4276
        %v4391 = vpop.f32.mrb[0].mxu0
        %v4392 = vadd.f32 %v4270, %v4391
        %v4393 = vpop.f32.mrb[0].mxu0
        %4394 = vmatprep.mubr.f32.mxu0 0.0
        %4395 = vmatmul.mubr.f32.gmra.mrb[0].mxu0 %v4279
        %v4396 = vpop.f32.mrb[0].mxu0
        %v4397 = vadd.f32 %v4270, %v4396
        %v4398 = vpop.f32.mrb[0].mxu0
        %4399 = vmatprep.mubr.f32.mxu0 0.0
        %4400 = vmatmul.mubr.f32.gmra.mrb[0].mxu0 %v4282
        %v4401 = vpop.f32.mrb[0].mxu0
        %v4402 = vadd.f32 %v4270, %v4401
        %v4403 = vpop.f32.mrb[0].mxu0
        %4404 = vmatprep.mubr.f32.mxu0 0.0
        %4405 = vmatmul.mubr.f32.gmra.mrb[0].mxu0 %v4285
        %v4406 = vpop.f32.mrb[0].mxu0
        %v4407 = vadd.f32 %v4270, %v4406
        %v4408 = vpop.f32.mrb[0].mxu0
        %4409 = vmatprep.mubr.f32.mxu0 0.0
        %4410 = vmatmul.mubr.f32.gmra.mrb[0].mxu0 %v4288
        %v4411 = vpop.f32.mrb[0].mxu0
        %v4412 = vadd.f32 %v4270, %v4411
        %v4413 = vpop.f32.mrb[0].mxu0
        %4414 = vmatprep.mubr.f32.mxu0 0.0
        %4415 = vmatmul.mubr.f32.gmra.mrb[0].mxu0 %v4291
        %v4416 = vpop.f32.mrb[0].mxu0
        %v4417 = vadd.f32 %v4270, %v4416
        %v4418 = vpop.f32.mrb[0].mxu0
        %4419 = vmatprep.mubr.f32.mxu0 0.0
        %4420 = vmatmul.mubr.f32.gmra.mrb[0].mxu0 %v4294
        %v4421 = vpop.f32.mrb[0].mxu0
        %v4422 = vadd.f32 %v4270, %v4421
        %v4423 = vpop.f32.mrb[0].mxu0
        %4424 = vmatprep.mubr.f32.mxu0 0.0
        %4425 = vmatmul.mubr.f32.gmra.mrb[0].mxu0 %v4297
        %v4426 = vpop.f32.mrb[0].mxu0
        %v4427 = vadd.f32 %v4270, %v4426
        %v4428 = vpop.f32.mrb[0].mxu0
        %4429 = vmatprep.mubr.f32.mxu0 0.0
        %4430 = vmatmul.mubr.f32.gmra.mrb[0].mxu0 %v4300
        %v4431 = vpop.f32.mrb[0].mxu0
        %v4432 = vadd.f32 %v4270, %v4431
        %v4433 = vpop.f32.mrb[0].mxu0
        %4434 = vmatprep.mubr.f32.mxu0 0.0
        %4435 = vmatmul.mubr.f32.gmra.mrb[0].mxu0 %v4303
        %v4436 = vpop.f32.mrb[0].mxu0
        %v4437 = vadd.f32 %v4270, %v4436
        %v4438 = vpop.f32.mrb[0].mxu0
        %4439 = vmatprep.mubr.f32.mxu0 0.0
        %4440 = vmatmul.mubr.f32.gmra.mrb[0].mxu0 %v4306
        %v4441 = vpop.f32.mrb[0].mxu0
        %v4442 = vadd.f32 %v4270, %v4441
        %v4443 = vpop.f32.mrb[0].mxu0
        %4444 = vmatprep.mubr.f32.mxu0 0.0
        %4445 = vmatmul.mubr.f32.gmra.mrb[0].mxu0 %v4309
        %v4446 = vpop.f32.mrb[0].mxu0
        %v4447 = vadd.f32 %v4270, %v4446
        %v4448 = vpop.f32.mrb[0].mxu0
        %4449 = vmatprep.mubr.f32.mxu0 0.0
        %4450 = vmatmul.mubr.f32.gmra.mrb[0].mxu0 %v4312
        %v4451 = vpop.f32.mrb[0].mxu0
        %v4452 = vadd.f32 %v4270, %v4451
        %v4453 = vpop.f32.mrb[0].mxu0
        %4454 = vmatprep.mubr.f32.mxu0 0.0
        %4455 = vmatmul.mubr.f32.gmra.mrb[0].mxu0 %v4315
        %v4456 = vpop.f32.mrb[0].mxu0
        %v4457 = vadd.f32 %v4270, %v4456
        %v4458 = vpop.f32.mrb[0].mxu0
        %4459 = vmatprep.mubr.f32.mxu0 0.0
        %4460 = vmatmul.mubr.f32.gmra.mrb[0].mxu0 %v4318
        %v4461 = vpop.f32.mrb[0].mxu0
        %v4462 = vadd.f32 %v4270, %v4461
        %v4463 = vpop.f32.mrb[0].mxu0
        %4464 = vdwg.mxu0
        %v4465 = vmul.f32 %v4387, 0.5
        %v4466 = vmul.f32 %v4392, 0.5
        %v4467 = vmul.f32 %v4397, 0.5
        %v4468 = vmul.f32 %v4402, 0.5
        %v4469 = vmul.f32 %v4407, 0.5
        %v4470 = vmul.f32 %v4412, 0.5
        %v4471 = vmul.f32 %v4417, 0.5
        %v4472 = vmul.f32 %v4422, 0.5
        %v4473 = vmul.f32 %v4427, 0.5
        %v4474 = vmul.f32 %v4432, 0.5
        %v4475 = vmul.f32 %v4437, 0.5
        %v4476 = vmul.f32 %v4442, 0.5
        %v4477 = vmul.f32 %v4447, 0.5
        %v4478 = vmul.f32 %v4452, 0.5
        %v4479 = vmul.f32 %v4457, 0.5
        %v4480 = vmul.f32 %v4462, 0.5
        %v4481 = vmul.f32 %v4387, 0.70710677
        %v4482 = vmul.f32 %v4392, 0.70710677
        %v4483 = vmul.f32 %v4397, 0.70710677
        %v4484 = vmul.f32 %v4402, 0.70710677
        %v4485 = vmul.f32 %v4407, 0.70710677
        %v4486 = vmul.f32 %v4412, 0.70710677
        %v4487 = vmul.f32 %v4417, 0.70710677
        %v4488 = vmul.f32 %v4422, 0.70710677
        %v4489 = vmul.f32 %v4427, 0.70710677
        %v4490 = vmul.f32 %v4432, 0.70710677
        %v4491 = vmul.f32 %v4437, 0.70710677
        %v4492 = vmul.f32 %v4442, 0.70710677
        %v4493 = vmul.f32 %v4447, 0.70710677
        %v4494 = vmul.f32 %v4452, 0.70710677
        %v4495 = vmul.f32 %v4457, 0.70710677
        %v4496 = vmul.f32 %v4462, 0.70710677
        %vm4497 = vcmp.ge.f32.partialorder %v4481, 0.0
        %vm4498 = vcmp.ge.f32.partialorder %v4482, 0.0
        %vm4499 = vcmp.ge.f32.partialorder %v4483, 0.0
        %vm4500 = vcmp.ge.f32.partialorder %v4484, 0.0
        %vm4501 = vcmp.ge.f32.partialorder %v4485, 0.0
        %vm4502 = vcmp.ge.f32.partialorder %v4486, 0.0
        %vm4503 = vcmp.ge.f32.partialorder %v4487, 0.0
        %vm4504 = vcmp.ge.f32.partialorder %v4488, 0.0
        %vm4505 = vcmp.ge.f32.partialorder %v4489, 0.0
        %vm4506 = vcmp.ge.f32.partialorder %v4490, 0.0
        %vm4507 = vcmp.ge.f32.partialorder %v4491, 0.0
        %vm4508 = vcmp.ge.f32.partialorder %v4492, 0.0
        %vm4509 = vcmp.ge.f32.partialorder %v4493, 0.0
        %vm4510 = vcmp.ge.f32.partialorder %v4494, 0.0
        %vm4511 = vcmp.ge.f32.partialorder %v4495, 0.0
        %vm4512 = vcmp.ge.f32.partialorder %v4496, 0.0
        %v4513 = vsel %vm4497, 1.0, -1.0
        %v4514 = vsel %vm4498, 1.0, -1.0
        %v4515 = vsel %vm4499, 1.0, -1.0
        %v4516 = vsel %vm4500, 1.0, -1.0
        %v4517 = vsel %vm4501, 1.0, -1.0
        %v4518 = vsel %vm4502, 1.0, -1.0
        %v4519 = vsel %vm4503, 1.0, -1.0
        %v4520 = vsel %vm4504, 1.0, -1.0
        %v4521 = vsel %vm4505, 1.0, -1.0
        %v4522 = vsel %vm4506, 1.0, -1.0
        %v4523 = vsel %vm4507, 1.0, -1.0
        %v4524 = vsel %vm4508, 1.0, -1.0
        %v4525 = vsel %vm4509, 1.0, -1.0
        %v4526 = vsel %vm4510, 1.0, -1.0
        %v4527 = vsel %vm4511, 1.0, -1.0
        %v4528 = vsel %vm4512, 1.0, -1.0
        %v4529 = vand.u32 2147483647, %v4481
        %v4530 = vand.u32 2147483647, %v4482
        %v4531 = vand.u32 2147483647, %v4483
        %v4532 = vand.u32 2147483647, %v4484
        %v4533 = vand.u32 2147483647, %v4485
        %v4534 = vand.u32 2147483647, %v4486
        %v4535 = vand.u32 2147483647, %v4487
        %v4536 = vand.u32 2147483647, %v4488
        %v4537 = vand.u32 2147483647, %v4489
        %v4538 = vand.u32 2147483647, %v4490
        %v4539 = vand.u32 2147483647, %v4491
        %v4540 = vand.u32 2147483647, %v4492
        %v4541 = vand.u32 2147483647, %v4493
        %v4542 = vand.u32 2147483647, %v4494
        %v4543 = vand.u32 2147483647, %v4495
        %v4544 = vand.u32 2147483647, %v4496
        %v4545 = vmul.f32 %v4529, 0.3275911
        %v4546 = vmul.f32 %v4530, 0.3275911
        %v4547 = vmul.f32 %v4531, 0.3275911
        %v4548 = vmul.f32 %v4532, 0.3275911
        %v4549 = vmul.f32 %v4533, 0.3275911
        %v4550 = vmul.f32 %v4534, 0.3275911
        %v4551 = vmul.f32 %v4535, 0.3275911
        %v4552 = vmul.f32 %v4536, 0.3275911
        %v4553 = vmul.f32 %v4537, 0.3275911
        %v4554 = vmul.f32 %v4538, 0.3275911
        %v4555 = vmul.f32 %v4539, 0.3275911
        %v4556 = vmul.f32 %v4540, 0.3275911
        %v4557 = vmul.f32 %v4541, 0.3275911
        %v4558 = vmul.f32 %v4542, 0.3275911
        %v4559 = vmul.f32 %v4543, 0.3275911
        %v4560 = vmul.f32 %v4544, 0.3275911
        %v4561 = vadd.f32 %v4545, 1.0
        %v4562 = vadd.f32 %v4546, 1.0
        %v4563 = vadd.f32 %v4547, 1.0
        %v4564 = vadd.f32 %v4548, 1.0
        %v4565 = vadd.f32 %v4549, 1.0
        %v4566 = vadd.f32 %v4550, 1.0
        %v4567 = vadd.f32 %v4551, 1.0
        %v4568 = vadd.f32 %v4552, 1.0
        %v4569 = vadd.f32 %v4553, 1.0
        %v4570 = vadd.f32 %v4554, 1.0
        %v4571 = vadd.f32 %v4555, 1.0
        %v4572 = vadd.f32 %v4556, 1.0
        %v4573 = vadd.f32 %v4557, 1.0
        %v4574 = vadd.f32 %v4558, 1.0
        %v4575 = vadd.f32 %v4559, 1.0
        %v4576 = vadd.f32 %v4560, 1.0
        %v4577 = vrcp.pop %v4561
        %v4578 = vrcp.pop %v4562
        %v4579 = vrcp.pop %v4563
        %v4580 = vrcp.pop %v4564
        %v4581 = vrcp.pop %v4565
        %v4582 = vrcp.pop %v4566
        %v4583 = vrcp.pop %v4567
        %v4584 = vrcp.pop %v4568
        %v4585 = vrcp.pop %v4569
        %v4586 = vrcp.pop %v4570
        %v4587 = vrcp.pop %v4571
        %v4588 = vrcp.pop %v4572
        %v4589 = vrcp.pop %v4573
        %v4590 = vrcp.pop %v4574
        %v4591 = vrcp.pop %v4575
        %v4592 = vrcp.pop %v4576
        %v4593 = vmul.f32 %v4577, 1.0614054
        %v4594 = vmul.f32 %v4578, 1.0614054
        %v4595 = vmul.f32 %v4579, 1.0614054
        %v4596 = vmul.f32 %v4580, 1.0614054
        %v4597 = vmul.f32 %v4581, 1.0614054
        %v4598 = vmul.f32 %v4582, 1.0614054
        %v4599 = vmul.f32 %v4583, 1.0614054
        %v4600 = vmul.f32 %v4584, 1.0614054
        %v4601 = vmul.f32 %v4585, 1.0614054
        %v4602 = vmul.f32 %v4586, 1.0614054
        %v4603 = vmul.f32 %v4587, 1.0614054
        %v4604 = vmul.f32 %v4588, 1.0614054
        %v4605 = vmul.f32 %v4589, 1.0614054
        %v4606 = vmul.f32 %v4590, 1.0614054
        %v4607 = vmul.f32 %v4591, 1.0614054
        %v4608 = vmul.f32 %v4592, 1.0614054
        %v4609 = vadd.f32 %v4593, -1.4531521
        %v4610 = vadd.f32 %v4594, -1.4531521
        %v4611 = vadd.f32 %v4595, -1.4531521
        %v4612 = vadd.f32 %v4596, -1.4531521
        %v4613 = vadd.f32 %v4597, -1.4531521
        %v4614 = vadd.f32 %v4598, -1.4531521
        %v4615 = vadd.f32 %v4599, -1.4531521
        %v4616 = vadd.f32 %v4600, -1.4531521
        %v4617 = vadd.f32 %v4601, -1.4531521
        %v4618 = vadd.f32 %v4602, -1.4531521
        %v4619 = vadd.f32 %v4603, -1.4531521
        %v4620 = vadd.f32 %v4604, -1.4531521
        %v4621 = vadd.f32 %v4605, -1.4531521
        %v4622 = vadd.f32 %v4606, -1.4531521
        %v4623 = vadd.f32 %v4607, -1.4531521
        %v4624 = vadd.f32 %v4608, -1.4531521
        %v4625 = vmul.f32 %v4609, %v4577
        %v4626 = vmul.f32 %v4610, %v4578
        %v4627 = vmul.f32 %v4611, %v4579
        %v4628 = vmul.f32 %v4612, %v4580
        %v4629 = vmul.f32 %v4613, %v4581
        %v4630 = vmul.f32 %v4614, %v4582
        %v4631 = vmul.f32 %v4615, %v4583
        %v4632 = vmul.f32 %v4616, %v4584
        %v4633 = vmul.f32 %v4617, %v4585
        %v4634 = vmul.f32 %v4618, %v4586
        %v4635 = vmul.f32 %v4619, %v4587
        %v4636 = vmul.f32 %v4620, %v4588
        %v4637 = vmul.f32 %v4621, %v4589
        %v4638 = vmul.f32 %v4622, %v4590
        %v4639 = vmul.f32 %v4623, %v4591
        %v4640 = vmul.f32 %v4624, %v4592
        %v4641 = vadd.f32 %v4625, 1.4214138
        %v4642 = vadd.f32 %v4626, 1.4214138
        %v4643 = vadd.f32 %v4627, 1.4214138
        %v4644 = vadd.f32 %v4628, 1.4214138
        %v4645 = vadd.f32 %v4629, 1.4214138
        %v4646 = vadd.f32 %v4630, 1.4214138
        %v4647 = vadd.f32 %v4631, 1.4214138
        %v4648 = vadd.f32 %v4632, 1.4214138
        %v4649 = vadd.f32 %v4633, 1.4214138
        %v4650 = vadd.f32 %v4634, 1.4214138
        %v4651 = vadd.f32 %v4635, 1.4214138
        %v4652 = vadd.f32 %v4636, 1.4214138
        %v4653 = vadd.f32 %v4637, 1.4214138
        %v4654 = vadd.f32 %v4638, 1.4214138
        %v4655 = vadd.f32 %v4639, 1.4214138
        %v4656 = vadd.f32 %v4640, 1.4214138
        %v4657 = vmul.f32 %v4641, %v4577
        %v4658 = vmul.f32 %v4642, %v4578
        %v4659 = vmul.f32 %v4643, %v4579
        %v4660 = vmul.f32 %v4644, %v4580
        %v4661 = vmul.f32 %v4645, %v4581
        %v4662 = vmul.f32 %v4646, %v4582
        %v4663 = vmul.f32 %v4647, %v4583
        %v4664 = vmul.f32 %v4648, %v4584
        %v4665 = vmul.f32 %v4649, %v4585
        %v4666 = vmul.f32 %v4650, %v4586
        %v4667 = vmul.f32 %v4651, %v4587
        %v4668 = vmul.f32 %v4652, %v4588
        %v4669 = vmul.f32 %v4653, %v4589
        %v4670 = vmul.f32 %v4654, %v4590
        %v4671 = vmul.f32 %v4655, %v4591
        %v4672 = vmul.f32 %v4656, %v4592
        %v4673 = vadd.f32 %v4657, -0.28449672
        %v4674 = vadd.f32 %v4658, -0.28449672
        %v4675 = vadd.f32 %v4659, -0.28449672
        %v4676 = vadd.f32 %v4660, -0.28449672
        %v4677 = vadd.f32 %v4661, -0.28449672
        %v4678 = vadd.f32 %v4662, -0.28449672
        %v4679 = vadd.f32 %v4663, -0.28449672
        %v4680 = vadd.f32 %v4664, -0.28449672
        %v4681 = vadd.f32 %v4665, -0.28449672
        %v4682 = vadd.f32 %v4666, -0.28449672
        %v4683 = vadd.f32 %v4667, -0.28449672
        %v4684 = vadd.f32 %v4668, -0.28449672
        %v4685 = vadd.f32 %v4669, -0.28449672
        %v4686 = vadd.f32 %v4670, -0.28449672
        %v4687 = vadd.f32 %v4671, -0.28449672
        %v4688 = vadd.f32 %v4672, -0.28449672
        %v4689 = vmul.f32 %v4673, %v4577
        %v4690 = vmul.f32 %v4674, %v4578
        %v4691 = vmul.f32 %v4675, %v4579
        %v4692 = vmul.f32 %v4676, %v4580
        %v4693 = vmul.f32 %v4677, %v4581
        %v4694 = vmul.f32 %v4678, %v4582
        %v4695 = vmul.f32 %v4679, %v4583
        %v4696 = vmul.f32 %v4680, %v4584
        %v4697 = vmul.f32 %v4681, %v4585
        %v4698 = vmul.f32 %v4682, %v4586
        %v4699 = vmul.f32 %v4683, %v4587
        %v4700 = vmul.f32 %v4684, %v4588
        %v4701 = vmul.f32 %v4685, %v4589
        %v4702 = vmul.f32 %v4686, %v4590
        %v4703 = vmul.f32 %v4687, %v4591
        %v4704 = vmul.f32 %v4688, %v4592
        %v4705 = vadd.f32 %v4689, 0.2548296
        %v4706 = vadd.f32 %v4690, 0.2548296
        %v4707 = vadd.f32 %v4691, 0.2548296
        %v4708 = vadd.f32 %v4692, 0.2548296
        %v4709 = vadd.f32 %v4693, 0.2548296
        %v4710 = vadd.f32 %v4694, 0.2548296
        %v4711 = vadd.f32 %v4695, 0.2548296
        %v4712 = vadd.f32 %v4696, 0.2548296
        %v4713 = vadd.f32 %v4697, 0.2548296
        %v4714 = vadd.f32 %v4698, 0.2548296
        %v4715 = vadd.f32 %v4699, 0.2548296
        %v4716 = vadd.f32 %v4700, 0.2548296
        %v4717 = vadd.f32 %v4701, 0.2548296
        %v4718 = vadd.f32 %v4702, 0.2548296
        %v4719 = vadd.f32 %v4703, 0.2548296
        %v4720 = vadd.f32 %v4704, 0.2548296
        %v4721 = vmul.f32 %v4705, %v4577
        %v4722 = vmul.f32 %v4706, %v4578
        %v4723 = vmul.f32 %v4707, %v4579
        %v4724 = vmul.f32 %v4708, %v4580
        %v4725 = vmul.f32 %v4709, %v4581
        %v4726 = vmul.f32 %v4710, %v4582
        %v4727 = vmul.f32 %v4711, %v4583
        %v4728 = vmul.f32 %v4712, %v4584
        %v4729 = vmul.f32 %v4713, %v4585
        %v4730 = vmul.f32 %v4714, %v4586
        %v4731 = vmul.f32 %v4715, %v4587
        %v4732 = vmul.f32 %v4716, %v4588
        %v4733 = vmul.f32 %v4717, %v4589
        %v4734 = vmul.f32 %v4718, %v4590
        %v4735 = vmul.f32 %v4719, %v4591
        %v4736 = vmul.f32 %v4720, %v4592
        %v4737 = vsub.f32 0.0, %v4529
        %v4738 = vsub.f32 0.0, %v4530
        %v4739 = vsub.f32 0.0, %v4531
        %v4740 = vsub.f32 0.0, %v4532
        %v4741 = vsub.f32 0.0, %v4533
        %v4742 = vsub.f32 0.0, %v4534
        %v4743 = vsub.f32 0.0, %v4535
        %v4744 = vsub.f32 0.0, %v4536
        %v4745 = vsub.f32 0.0, %v4537
        %v4746 = vsub.f32 0.0, %v4538
        %v4747 = vsub.f32 0.0, %v4539
        %v4748 = vsub.f32 0.0, %v4540
        %v4749 = vsub.f32 0.0, %v4541
        %v4750 = vsub.f32 0.0, %v4542
        %v4751 = vsub.f32 0.0, %v4543
        %v4752 = vsub.f32 0.0, %v4544
        %v4753 = vmul.f32 %v4737, %v4529
        %v4754 = vmul.f32 %v4738, %v4530
        %v4755 = vmul.f32 %v4739, %v4531
        %v4756 = vmul.f32 %v4740, %v4532
        %v4757 = vmul.f32 %v4741, %v4533
        %v4758 = vmul.f32 %v4742, %v4534
        %v4759 = vmul.f32 %v4743, %v4535
        %v4760 = vmul.f32 %v4744, %v4536
        %v4761 = vmul.f32 %v4745, %v4537
        %v4762 = vmul.f32 %v4746, %v4538
        %v4763 = vmul.f32 %v4747, %v4539
        %v4764 = vmul.f32 %v4748, %v4540
        %v4765 = vmul.f32 %v4749, %v4541
        %v4766 = vmul.f32 %v4750, %v4542
        %v4767 = vmul.f32 %v4751, %v4543
        %v4768 = vmul.f32 %v4752, %v4544
        %v4769 = vmul.f32 %v4753, 1.442695
        %v4770 = vpow.pop %v4769
        %v4771 = vmul.f32 %v4754, 1.442695
        %v4772 = vpow.pop %v4771
        %v4773 = vmul.f32 %v4755, 1.442695
        %v4774 = vpow.pop %v4773
        %v4775 = vmul.f32 %v4756, 1.442695
        %v4776 = vpow.pop %v4775
        %v4777 = vmul.f32 %v4757, 1.442695
        %v4778 = vpow.pop %v4777
        %v4779 = vmul.f32 %v4758, 1.442695
        %v4780 = vpow.pop %v4779
        %v4781 = vmul.f32 %v4759, 1.442695
        %v4782 = vpow.pop %v4781
        %v4783 = vmul.f32 %v4760, 1.442695
        %v4784 = vpow.pop %v4783
        %v4785 = vmul.f32 %v4761, 1.442695
        %v4786 = vpow.pop %v4785
        %v4787 = vmul.f32 %v4762, 1.442695
        %v4788 = vpow.pop %v4787
        %v4789 = vmul.f32 %v4763, 1.442695
        %v4790 = vpow.pop %v4789
        %v4791 = vmul.f32 %v4764, 1.442695
        %v4792 = vpow.pop %v4791
        %v4793 = vmul.f32 %v4765, 1.442695
        %v4794 = vpow.pop %v4793
        %v4795 = vmul.f32 %v4766, 1.442695
        %v4796 = vpow.pop %v4795
        %v4797 = vmul.f32 %v4767, 1.442695
        %v4798 = vpow.pop %v4797
        %v4799 = vmul.f32 %v4768, 1.442695
        %v4800 = vpow.pop %v4799
        %v4801 = vmul.f32 %v4721, %v4770
        %v4802 = vmul.f32 %v4722, %v4772
        %v4803 = vmul.f32 %v4723, %v4774
        %v4804 = vmul.f32 %v4724, %v4776
        %v4805 = vmul.f32 %v4725, %v4778
        %v4806 = vmul.f32 %v4726, %v4780
        %v4807 = vmul.f32 %v4727, %v4782
        %v4808 = vmul.f32 %v4728, %v4784
        %v4809 = vmul.f32 %v4729, %v4786
        %v4810 = vmul.f32 %v4730, %v4788
        %v4811 = vmul.f32 %v4731, %v4790
        %v4812 = vmul.f32 %v4732, %v4792
        %v4813 = vmul.f32 %v4733, %v4794
        %v4814 = vmul.f32 %v4734, %v4796
        %v4815 = vmul.f32 %v4735, %v4798
        %v4816 = vmul.f32 %v4736, %v4800
        %v4817 = vsub.f32 1.0, %v4801
        %v4818 = vsub.f32 1.0, %v4802
        %v4819 = vsub.f32 1.0, %v4803
        %v4820 = vsub.f32 1.0, %v4804
        %v4821 = vsub.f32 1.0, %v4805
        %v4822 = vsub.f32 1.0, %v4806
        %v4823 = vsub.f32 1.0, %v4807
        %v4824 = vsub.f32 1.0, %v4808
        %v4825 = vsub.f32 1.0, %v4809
        %v4826 = vsub.f32 1.0, %v4810
        %v4827 = vsub.f32 1.0, %v4811
        %v4828 = vsub.f32 1.0, %v4812
        %v4829 = vsub.f32 1.0, %v4813
        %v4830 = vsub.f32 1.0, %v4814
        %v4831 = vsub.f32 1.0, %v4815
        %v4832 = vsub.f32 1.0, %v4816
        %v4833 = vmul.f32 %v4513, %v4817
        %v4834 = vmul.f32 %v4514, %v4818
        %v4835 = vmul.f32 %v4515, %v4819
        %v4836 = vmul.f32 %v4516, %v4820
        %v4837 = vmul.f32 %v4517, %v4821
        %v4838 = vmul.f32 %v4518, %v4822
        %v4839 = vmul.f32 %v4519, %v4823
        %v4840 = vmul.f32 %v4520, %v4824
        %v4841 = vmul.f32 %v4521, %v4825
        %v4842 = vmul.f32 %v4522, %v4826
        %v4843 = vmul.f32 %v4523, %v4827
        %v4844 = vmul.f32 %v4524, %v4828
        %v4845 = vmul.f32 %v4525, %v4829
        %v4846 = vmul.f32 %v4526, %v4830
        %v4847 = vmul.f32 %v4527, %v4831
        %v4848 = vmul.f32 %v4528, %v4832
        %v4849 = vadd.f32 %v4833, 1.0
        %v4850 = vadd.f32 %v4834, 1.0
        %v4851 = vadd.f32 %v4835, 1.0
        %v4852 = vadd.f32 %v4836, 1.0
        %v4853 = vadd.f32 %v4837, 1.0
        %v4854 = vadd.f32 %v4838, 1.0
        %v4855 = vadd.f32 %v4839, 1.0
        %v4856 = vadd.f32 %v4840, 1.0
        %v4857 = vadd.f32 %v4841, 1.0
        %v4858 = vadd.f32 %v4842, 1.0
        %v4859 = vadd.f32 %v4843, 1.0
        %v4860 = vadd.f32 %v4844, 1.0
        %v4861 = vadd.f32 %v4845, 1.0
        %v4862 = vadd.f32 %v4846, 1.0
        %v4863 = vadd.f32 %v4847, 1.0
        %v4864 = vadd.f32 %v4848, 1.0
        %v4865 = vmul.f32 %v4465, %v4849
        %v4866 = vmul.f32 %v4466, %v4850
        %v4867 = vmul.f32 %v4467, %v4851
        %v4868 = vmul.f32 %v4468, %v4852
        %v4869 = vmul.f32 %v4469, %v4853
        %v4870 = vmul.f32 %v4470, %v4854
        %v4871 = vmul.f32 %v4471, %v4855
        %v4872 = vmul.f32 %v4472, %v4856
        %v4873 = vmul.f32 %v4473, %v4857
        %v4874 = vmul.f32 %v4474, %v4858
        %v4875 = vmul.f32 %v4475, %v4859
        %v4876 = vmul.f32 %v4476, %v4860
        %v4877 = vmul.f32 %v4477, %v4861
        %v4878 = vmul.f32 %v4478, %v4862
        %v4879 = vmul.f32 %v4479, %v4863
        %v4880 = vmul.f32 %v4480, %v4864
        %v4881 = vld [vmem:[%s12] sm:$0xff]
        %v4882 = vld [vmem:[%s12 + $0x8] sm:$0xff]
        %v4883 = vld [vmem:[%s12 + $0x10] sm:$0xff]
        %v4884 = vld [vmem:[%s12 + $0x18] sm:$0xff]
        %v4885 = vld [vmem:[%s12 + $0x20] sm:$0xff]
        %v4886 = vld [vmem:[%s12 + $0x28] sm:$0xff]
        %v4887 = vld [vmem:[%s12 + $0x30] sm:$0xff]
        %v4888 = vld [vmem:[%s12 + $0x38] sm:$0xff]
        %v4889 = vld [vmem:[%s12 + $0x40] sm:$0xff]
        %v4890 = vld [vmem:[%s12 + $0x48] sm:$0xff]
        %v4891 = vld [vmem:[%s12 + $0x50] sm:$0xff]
        %v4892 = vld [vmem:[%s12 + $0x58] sm:$0xff]
        %v4893 = vld [vmem:[%s12 + $0x60] sm:$0xff]
        %v4894 = vld [vmem:[%s12 + $0x68] sm:$0xff]
        %v4895 = vld [vmem:[%s12 + $0x70] sm:$0xff]
        %v4896 = vld [vmem:[%s12 + $0x78] sm:$0xff]
        %v4897 = vld [vmem:[%s13] sm:$0x1]
        %v4899 = vlaneseq
        %v4900 = vshrl.u32 %v4899, 7
        %v4901 = vsub.s32 0, %v4900
        %v4902 = vrot.slane %v4897, %v4901
        %4904 = vmatprep.subr.mxu0 0.0
        %4905 = vmatpush1.msra.mxu0 %v4881
        %4906 = vmatprep.subr.mxu0 0.0
        %4907 = vmatpush1.msra.mxu0 %v4882
        %4908 = vmatprep.subr.mxu0 0.0
        %4909 = vmatpush1.msra.mxu0 %v4883
        %4910 = vmatprep.subr.mxu0 0.0
        %4911 = vmatpush1.msra.mxu0 %v4884
        %4912 = vmatprep.subr.mxu0 0.0
        %4913 = vmatpush1.msra.mxu0 %v4885
        %4914 = vmatprep.subr.mxu0 0.0
        %4915 = vmatpush1.msra.mxu0 %v4886
        %4916 = vmatprep.subr.mxu0 0.0
        %4917 = vmatpush1.msra.mxu0 %v4887
        %4918 = vmatprep.subr.mxu0 0.0
        %4919 = vmatpush1.msra.mxu0 %v4888
        %4920 = vmatprep.subr.mxu0 0.0
        %4921 = vmatpush1.msra.mxu0 %v4889
        %4922 = vmatprep.subr.mxu0 0.0
        %4923 = vmatpush1.msra.mxu0 %v4890
        %4924 = vmatprep.subr.mxu0 0.0
        %4925 = vmatpush1.msra.mxu0 %v4891
        %4926 = vmatprep.subr.mxu0 0.0
        %4927 = vmatpush1.msra.mxu0 %v4892
        %4928 = vmatprep.subr.mxu0 0.0
        %4929 = vmatpush1.msra.mxu0 %v4893
        %4930 = vmatprep.subr.mxu0 0.0
        %4931 = vmatpush1.msra.mxu0 %v4894
        %4932 = vmatprep.subr.mxu0 0.0
        %4933 = vmatpush1.msra.mxu0 %v4895
        %4934 = vmatprep.subr.mxu0 0.0
        %4935 = vmatpush1.msra.mxu0 %v4896
        %4936 = vmatprep.subr.mxu0 0.0
        %4937 = vmatpush1.msra.mxu0 0.0
        %4938 = vmatprep.subr.mxu0 0.0
        %4939 = vmatpush1.msra.mxu0 0.0
        %4940 = vmatprep.subr.mxu0 0.0
        %4941 = vmatpush1.msra.mxu0 0.0
        %4942 = vmatprep.subr.mxu0 0.0
        %4943 = vmatpush1.msra.mxu0 0.0
        %4944 = vmatprep.subr.mxu0 0.0
        %4945 = vmatpush1.msra.mxu0 0.0
        %4946 = vmatprep.subr.mxu0 0.0
        %4947 = vmatpush1.msra.mxu0 0.0
        %4948 = vmatprep.subr.mxu0 0.0
        %4949 = vmatpush1.msra.mxu0 0.0
        %4950 = vmatprep.subr.mxu0 0.0
        %4951 = vmatpush1.msra.mxu0 0.0
        %4952 = vmatprep.subr.mxu0 0.0
        %4953 = vmatpush1.msra.mxu0 0.0
        %4954 = vmatprep.subr.mxu0 0.0
        %4955 = vmatpush1.msra.mxu0 0.0
        %4956 = vmatprep.subr.mxu0 0.0
        %4957 = vmatpush1.msra.mxu0 0.0
        %4958 = vmatprep.subr.mxu0 0.0
        %4959 = vmatpush1.msra.mxu0 0.0
        %4960 = vmatprep.subr.mxu0 0.0
        %4961 = vmatpush1.msra.mxu0 0.0
        %4962 = vmatprep.subr.mxu0 0.0
        %4963 = vmatpush1.msra.mxu0 0.0
        %4964 = vmatprep.subr.mxu0 0.0
        %4965 = vmatpush1.msra.mxu0 0.0
        %4966 = vmatprep.subr.mxu0 0.0
        %4967 = vmatpush1.msra.mxu0 0.0
        %4968 = vmatprep.mubr.f32.mxu0 0.0
        %4969 = vmatmul.mubr.f32.gmra.mrb[0].mxu0 %v4865
        %v4970 = vpop.f32.mrb[0].mxu0
        %v4971 = vadd.f32 %v4902, %v4970
        %v4972 = vpop.f32.mrb[0].mxu0
        %4973 = vmatprep.mubr.f32.mxu0 0.0
        %4974 = vmatmul.mubr.f32.gmra.mrb[0].mxu0 %v4866
        %v4975 = vpop.f32.mrb[0].mxu0
        %v4976 = vadd.f32 %v4902, %v4975
        %v4977 = vpop.f32.mrb[0].mxu0
        %4978 = vmatprep.mubr.f32.mxu0 0.0
        %4979 = vmatmul.mubr.f32.gmra.mrb[0].mxu0 %v4867
        %v4980 = vpop.f32.mrb[0].mxu0
        %v4981 = vadd.f32 %v4902, %v4980
        %v4982 = vpop.f32.mrb[0].mxu0
        %4983 = vmatprep.mubr.f32.mxu0 0.0
        %4984 = vmatmul.mubr.f32.gmra.mrb[0].mxu0 %v4868
        %v4985 = vpop.f32.mrb[0].mxu0
        %v4986 = vadd.f32 %v4902, %v4985
        %v4987 = vpop.f32.mrb[0].mxu0
        %4988 = vmatprep.mubr.f32.mxu0 0.0
        %4989 = vmatmul.mubr.f32.gmra.mrb[0].mxu0 %v4869
        %v4990 = vpop.f32.mrb[0].mxu0
        %v4991 = vadd.f32 %v4902, %v4990
        %v4992 = vpop.f32.mrb[0].mxu0
        %4993 = vmatprep.mubr.f32.mxu0 0.0
        %4994 = vmatmul.mubr.f32.gmra.mrb[0].mxu0 %v4870
        %v4995 = vpop.f32.mrb[0].mxu0
        %v4996 = vadd.f32 %v4902, %v4995
        %v4997 = vpop.f32.mrb[0].mxu0
        %4998 = vmatprep.mubr.f32.mxu0 0.0
        %4999 = vmatmul.mubr.f32.gmra.mrb[0].mxu0 %v4871
        %v5000 = vpop.f32.mrb[0].mxu0
        %v5001 = vadd.f32 %v4902, %v5000
        %v5002 = vpop.f32.mrb[0].mxu0
        %5003 = vmatprep.mubr.f32.mxu0 0.0
        %5004 = vmatmul.mubr.f32.gmra.mrb[0].mxu0 %v4872
        %v5005 = vpop.f32.mrb[0].mxu0
        %v5006 = vadd.f32 %v4902, %v5005
        %v5007 = vpop.f32.mrb[0].mxu0
        %5008 = vmatprep.mubr.f32.mxu0 0.0
        %5009 = vmatmul.mubr.f32.gmra.mrb[0].mxu0 %v4873
        %v5010 = vpop.f32.mrb[0].mxu0
        %v5011 = vadd.f32 %v4902, %v5010
        %v5012 = vpop.f32.mrb[0].mxu0
        %5013 = vmatprep.mubr.f32.mxu0 0.0
        %5014 = vmatmul.mubr.f32.gmra.mrb[0].mxu0 %v4874
        %v5015 = vpop.f32.mrb[0].mxu0
        %v5016 = vadd.f32 %v4902, %v5015
        %v5017 = vpop.f32.mrb[0].mxu0
        %5018 = vmatprep.mubr.f32.mxu0 0.0
        %5019 = vmatmul.mubr.f32.gmra.mrb[0].mxu0 %v4875
        %v5020 = vpop.f32.mrb[0].mxu0
        %v5021 = vadd.f32 %v4902, %v5020
        %v5022 = vpop.f32.mrb[0].mxu0
        %5023 = vmatprep.mubr.f32.mxu0 0.0
        %5024 = vmatmul.mubr.f32.gmra.mrb[0].mxu0 %v4876
        %v5025 = vpop.f32.mrb[0].mxu0
        %v5026 = vadd.f32 %v4902, %v5025
        %v5027 = vpop.f32.mrb[0].mxu0
        %5028 = vmatprep.mubr.f32.mxu0 0.0
        %5029 = vmatmul.mubr.f32.gmra.mrb[0].mxu0 %v4877
        %v5030 = vpop.f32.mrb[0].mxu0
        %v5031 = vadd.f32 %v4902, %v5030
        %v5032 = vpop.f32.mrb[0].mxu0
        %5033 = vmatprep.mubr.f32.mxu0 0.0
        %5034 = vmatmul.mubr.f32.gmra.mrb[0].mxu0 %v4878
        %v5035 = vpop.f32.mrb[0].mxu0
        %v5036 = vadd.f32 %v4902, %v5035
        %v5037 = vpop.f32.mrb[0].mxu0
        %5038 = vmatprep.mubr.f32.mxu0 0.0
        %5039 = vmatmul.mubr.f32.gmra.mrb[0].mxu0 %v4879
        %v5040 = vpop.f32.mrb[0].mxu0
        %v5041 = vadd.f32 %v4902, %v5040
        %v5042 = vpop.f32.mrb[0].mxu0
        %5043 = vmatprep.mubr.f32.mxu0 0.0
        %5044 = vmatmul.mubr.f32.gmra.mrb[0].mxu0 %v4880
        %v5045 = vpop.f32.mrb[0].mxu0
        %v5046 = vadd.f32 %v4902, %v5045
        %v5047 = vpop.f32.mrb[0].mxu0
        %5048 = vdwg.mxu0
        %v5049 = vmul.f32 %v4971, 0.5
        %v5050 = vmul.f32 %v4976, 0.5
        %v5051 = vmul.f32 %v4981, 0.5
        %v5052 = vmul.f32 %v4986, 0.5
        %v5053 = vmul.f32 %v4991, 0.5
        %v5054 = vmul.f32 %v4996, 0.5
        %v5055 = vmul.f32 %v5001, 0.5
        %v5056 = vmul.f32 %v5006, 0.5
        %v5057 = vmul.f32 %v5011, 0.5
        %v5058 = vmul.f32 %v5016, 0.5
        %v5059 = vmul.f32 %v5021, 0.5
        %v5060 = vmul.f32 %v5026, 0.5
        %v5061 = vmul.f32 %v5031, 0.5
        %v5062 = vmul.f32 %v5036, 0.5
        %v5063 = vmul.f32 %v5041, 0.5
        %v5064 = vmul.f32 %v5046, 0.5
        %v5065 = vmul.f32 %v4971, 0.70710677
        %v5066 = vmul.f32 %v4976, 0.70710677
        %v5067 = vmul.f32 %v4981, 0.70710677
        %v5068 = vmul.f32 %v4986, 0.70710677
        %v5069 = vmul.f32 %v4991, 0.70710677
        %v5070 = vmul.f32 %v4996, 0.70710677
        %v5071 = vmul.f32 %v5001, 0.70710677
        %v5072 = vmul.f32 %v5006, 0.70710677
        %v5073 = vmul.f32 %v5011, 0.70710677
        %v5074 = vmul.f32 %v5016, 0.70710677
        %v5075 = vmul.f32 %v5021, 0.70710677
        %v5076 = vmul.f32 %v5026, 0.70710677
        %v5077 = vmul.f32 %v5031, 0.70710677
        %v5078 = vmul.f32 %v5036, 0.70710677
        %v5079 = vmul.f32 %v5041, 0.70710677
        %v5080 = vmul.f32 %v5046, 0.70710677
        %vm5081 = vcmp.ge.f32.partialorder %v5065, 0.0
        %vm5082 = vcmp.ge.f32.partialorder %v5066, 0.0
        %vm5083 = vcmp.ge.f32.partialorder %v5067, 0.0
        %vm5084 = vcmp.ge.f32.partialorder %v5068, 0.0
        %vm5085 = vcmp.ge.f32.partialorder %v5069, 0.0
        %vm5086 = vcmp.ge.f32.partialorder %v5070, 0.0
        %vm5087 = vcmp.ge.f32.partialorder %v5071, 0.0
        %vm5088 = vcmp.ge.f32.partialorder %v5072, 0.0
        %vm5089 = vcmp.ge.f32.partialorder %v5073, 0.0
        %vm5090 = vcmp.ge.f32.partialorder %v5074, 0.0
        %vm5091 = vcmp.ge.f32.partialorder %v5075, 0.0
        %vm5092 = vcmp.ge.f32.partialorder %v5076, 0.0
        %vm5093 = vcmp.ge.f32.partialorder %v5077, 0.0
        %vm5094 = vcmp.ge.f32.partialorder %v5078, 0.0
        %vm5095 = vcmp.ge.f32.partialorder %v5079, 0.0
        %vm5096 = vcmp.ge.f32.partialorder %v5080, 0.0
        %v5097 = vsel %vm5081, 1.0, -1.0
        %v5098 = vsel %vm5082, 1.0, -1.0
        %v5099 = vsel %vm5083, 1.0, -1.0
        %v5100 = vsel %vm5084, 1.0, -1.0
        %v5101 = vsel %vm5085, 1.0, -1.0
        %v5102 = vsel %vm5086, 1.0, -1.0
        %v5103 = vsel %vm5087, 1.0, -1.0
        %v5104 = vsel %vm5088, 1.0, -1.0
        %v5105 = vsel %vm5089, 1.0, -1.0
        %v5106 = vsel %vm5090, 1.0, -1.0
        %v5107 = vsel %vm5091, 1.0, -1.0
        %v5108 = vsel %vm5092, 1.0, -1.0
        %v5109 = vsel %vm5093, 1.0, -1.0
        %v5110 = vsel %vm5094, 1.0, -1.0
        %v5111 = vsel %vm5095, 1.0, -1.0
        %v5112 = vsel %vm5096, 1.0, -1.0
        %v5113 = vand.u32 2147483647, %v5065
        %v5114 = vand.u32 2147483647, %v5066
        %v5115 = vand.u32 2147483647, %v5067
        %v5116 = vand.u32 2147483647, %v5068
        %v5117 = vand.u32 2147483647, %v5069
        %v5118 = vand.u32 2147483647, %v5070
        %v5119 = vand.u32 2147483647, %v5071
        %v5120 = vand.u32 2147483647, %v5072
        %v5121 = vand.u32 2147483647, %v5073
        %v5122 = vand.u32 2147483647, %v5074
        %v5123 = vand.u32 2147483647, %v5075
        %v5124 = vand.u32 2147483647, %v5076
        %v5125 = vand.u32 2147483647, %v5077
        %v5126 = vand.u32 2147483647, %v5078
        %v5127 = vand.u32 2147483647, %v5079
        %v5128 = vand.u32 2147483647, %v5080
        %v5129 = vmul.f32 %v5113, 0.3275911
        %v5130 = vmul.f32 %v5114, 0.3275911
        %v5131 = vmul.f32 %v5115, 0.3275911
        %v5132 = vmul.f32 %v5116, 0.3275911
        %v5133 = vmul.f32 %v5117, 0.3275911
        %v5134 = vmul.f32 %v5118, 0.3275911
        %v5135 = vmul.f32 %v5119, 0.3275911
        %v5136 = vmul.f32 %v5120, 0.3275911
        %v5137 = vmul.f32 %v5121, 0.3275911
        %v5138 = vmul.f32 %v5122, 0.3275911
        %v5139 = vmul.f32 %v5123, 0.3275911
        %v5140 = vmul.f32 %v5124, 0.3275911
        %v5141 = vmul.f32 %v5125, 0.3275911
        %v5142 = vmul.f32 %v5126, 0.3275911
        %v5143 = vmul.f32 %v5127, 0.3275911
        %v5144 = vmul.f32 %v5128, 0.3275911
        %v5145 = vadd.f32 %v5129, 1.0
        %v5146 = vadd.f32 %v5130, 1.0
        %v5147 = vadd.f32 %v5131, 1.0
        %v5148 = vadd.f32 %v5132, 1.0
        %v5149 = vadd.f32 %v5133, 1.0
        %v5150 = vadd.f32 %v5134, 1.0
        %v5151 = vadd.f32 %v5135, 1.0
        %v5152 = vadd.f32 %v5136, 1.0
        %v5153 = vadd.f32 %v5137, 1.0
        %v5154 = vadd.f32 %v5138, 1.0
        %v5155 = vadd.f32 %v5139, 1.0
        %v5156 = vadd.f32 %v5140, 1.0
        %v5157 = vadd.f32 %v5141, 1.0
        %v5158 = vadd.f32 %v5142, 1.0
        %v5159 = vadd.f32 %v5143, 1.0
        %v5160 = vadd.f32 %v5144, 1.0
        %v5161 = vrcp.pop %v5145
        %v5162 = vrcp.pop %v5146
        %v5163 = vrcp.pop %v5147
        %v5164 = vrcp.pop %v5148
        %v5165 = vrcp.pop %v5149
        %v5166 = vrcp.pop %v5150
        %v5167 = vrcp.pop %v5151
        %v5168 = vrcp.pop %v5152
        %v5169 = vrcp.pop %v5153
        %v5170 = vrcp.pop %v5154
        %v5171 = vrcp.pop %v5155
        %v5172 = vrcp.pop %v5156
        %v5173 = vrcp.pop %v5157
        %v5174 = vrcp.pop %v5158
        %v5175 = vrcp.pop %v5159
        %v5176 = vrcp.pop %v5160
        %v5177 = vmul.f32 %v5161, 1.0614054
        %v5178 = vmul.f32 %v5162, 1.0614054
        %v5179 = vmul.f32 %v5163, 1.0614054
        %v5180 = vmul.f32 %v5164, 1.0614054
        %v5181 = vmul.f32 %v5165, 1.0614054
        %v5182 = vmul.f32 %v5166, 1.0614054
        %v5183 = vmul.f32 %v5167, 1.0614054
        %v5184 = vmul.f32 %v5168, 1.0614054
        %v5185 = vmul.f32 %v5169, 1.0614054
        %v5186 = vmul.f32 %v5170, 1.0614054
        %v5187 = vmul.f32 %v5171, 1.0614054
        %v5188 = vmul.f32 %v5172, 1.0614054
        %v5189 = vmul.f32 %v5173, 1.0614054
        %v5190 = vmul.f32 %v5174, 1.0614054
        %v5191 = vmul.f32 %v5175, 1.0614054
        %v5192 = vmul.f32 %v5176, 1.0614054
        %v5193 = vadd.f32 %v5177, -1.4531521
        %v5194 = vadd.f32 %v5178, -1.4531521
        %v5195 = vadd.f32 %v5179, -1.4531521
        %v5196 = vadd.f32 %v5180, -1.4531521
        %v5197 = vadd.f32 %v5181, -1.4531521
        %v5198 = vadd.f32 %v5182, -1.4531521
        %v5199 = vadd.f32 %v5183, -1.4531521
        %v5200 = vadd.f32 %v5184, -1.4531521
        %v5201 = vadd.f32 %v5185, -1.4531521
        %v5202 = vadd.f32 %v5186, -1.4531521
        %v5203 = vadd.f32 %v5187, -1.4531521
        %v5204 = vadd.f32 %v5188, -1.4531521
        %v5205 = vadd.f32 %v5189, -1.4531521
        %v5206 = vadd.f32 %v5190, -1.4531521
        %v5207 = vadd.f32 %v5191, -1.4531521
        %v5208 = vadd.f32 %v5192, -1.4531521
        %v5209 = vmul.f32 %v5193, %v5161
        %v5210 = vmul.f32 %v5194, %v5162
        %v5211 = vmul.f32 %v5195, %v5163
        %v5212 = vmul.f32 %v5196, %v5164
        %v5213 = vmul.f32 %v5197, %v5165
        %v5214 = vmul.f32 %v5198, %v5166
        %v5215 = vmul.f32 %v5199, %v5167
        %v5216 = vmul.f32 %v5200, %v5168
        %v5217 = vmul.f32 %v5201, %v5169
        %v5218 = vmul.f32 %v5202, %v5170
        %v5219 = vmul.f32 %v5203, %v5171
        %v5220 = vmul.f32 %v5204, %v5172
        %v5221 = vmul.f32 %v5205, %v5173
        %v5222 = vmul.f32 %v5206, %v5174
        %v5223 = vmul.f32 %v5207, %v5175
        %v5224 = vmul.f32 %v5208, %v5176
        %v5225 = vadd.f32 %v5209, 1.4214138
        %v5226 = vadd.f32 %v5210, 1.4214138
        %v5227 = vadd.f32 %v5211, 1.4214138
        %v5228 = vadd.f32 %v5212, 1.4214138
        %v5229 = vadd.f32 %v5213, 1.4214138
        %v5230 = vadd.f32 %v5214, 1.4214138
        %v5231 = vadd.f32 %v5215, 1.4214138
        %v5232 = vadd.f32 %v5216, 1.4214138
        %v5233 = vadd.f32 %v5217, 1.4214138
        %v5234 = vadd.f32 %v5218, 1.4214138
        %v5235 = vadd.f32 %v5219, 1.4214138
        %v5236 = vadd.f32 %v5220, 1.4214138
        %v5237 = vadd.f32 %v5221, 1.4214138
        %v5238 = vadd.f32 %v5222, 1.4214138
        %v5239 = vadd.f32 %v5223, 1.4214138
        %v5240 = vadd.f32 %v5224, 1.4214138
        %v5241 = vmul.f32 %v5225, %v5161
        %v5242 = vmul.f32 %v5226, %v5162
        %v5243 = vmul.f32 %v5227, %v5163
        %v5244 = vmul.f32 %v5228, %v5164
        %v5245 = vmul.f32 %v5229, %v5165
        %v5246 = vmul.f32 %v5230, %v5166
        %v5247 = vmul.f32 %v5231, %v5167
        %v5248 = vmul.f32 %v5232, %v5168
        %v5249 = vmul.f32 %v5233, %v5169
        %v5250 = vmul.f32 %v5234, %v5170
        %v5251 = vmul.f32 %v5235, %v5171
        %v5252 = vmul.f32 %v5236, %v5172
        %v5253 = vmul.f32 %v5237, %v5173
        %v5254 = vmul.f32 %v5238, %v5174
        %v5255 = vmul.f32 %v5239, %v5175
        %v5256 = vmul.f32 %v5240, %v5176
        %v5257 = vadd.f32 %v5241, -0.28449672
        %v5258 = vadd.f32 %v5242, -0.28449672
        %v5259 = vadd.f32 %v5243, -0.28449672
        %v5260 = vadd.f32 %v5244, -0.28449672
        %v5261 = vadd.f32 %v5245, -0.28449672
        %v5262 = vadd.f32 %v5246, -0.28449672
        %v5263 = vadd.f32 %v5247, -0.28449672
        %v5264 = vadd.f32 %v5248, -0.28449672
        %v5265 = vadd.f32 %v5249, -0.28449672
        %v5266 = vadd.f32 %v5250, -0.28449672
        %v5267 = vadd.f32 %v5251, -0.28449672
        %v5268 = vadd.f32 %v5252, -0.28449672
        %v5269 = vadd.f32 %v5253, -0.28449672
        %v5270 = vadd.f32 %v5254, -0.28449672
        %v5271 = vadd.f32 %v5255, -0.28449672
        %v5272 = vadd.f32 %v5256, -0.28449672
        %v5273 = vmul.f32 %v5257, %v5161
        %v5274 = vmul.f32 %v5258, %v5162
        %v5275 = vmul.f32 %v5259, %v5163
        %v5276 = vmul.f32 %v5260, %v5164
        %v5277 = vmul.f32 %v5261, %v5165
        %v5278 = vmul.f32 %v5262, %v5166
        %v5279 = vmul.f32 %v5263, %v5167
        %v5280 = vmul.f32 %v5264, %v5168
        %v5281 = vmul.f32 %v5265, %v5169
        %v5282 = vmul.f32 %v5266, %v5170
        %v5283 = vmul.f32 %v5267, %v5171
        %v5284 = vmul.f32 %v5268, %v5172
        %v5285 = vmul.f32 %v5269, %v5173
        %v5286 = vmul.f32 %v5270, %v5174
        %v5287 = vmul.f32 %v5271, %v5175
        %v5288 = vmul.f32 %v5272, %v5176
        %v5289 = vadd.f32 %v5273, 0.2548296
        %v5290 = vadd.f32 %v5274, 0.2548296
        %v5291 = vadd.f32 %v5275, 0.2548296
        %v5292 = vadd.f32 %v5276, 0.2548296
        %v5293 = vadd.f32 %v5277, 0.2548296
        %v5294 = vadd.f32 %v5278, 0.2548296
        %v5295 = vadd.f32 %v5279, 0.2548296
        %v5296 = vadd.f32 %v5280, 0.2548296
        %v5297 = vadd.f32 %v5281, 0.2548296
        %v5298 = vadd.f32 %v5282, 0.2548296
        %v5299 = vadd.f32 %v5283, 0.2548296
        %v5300 = vadd.f32 %v5284, 0.2548296
        %v5301 = vadd.f32 %v5285, 0.2548296
        %v5302 = vadd.f32 %v5286, 0.2548296
        %v5303 = vadd.f32 %v5287, 0.2548296
        %v5304 = vadd.f32 %v5288, 0.2548296
        %v5305 = vmul.f32 %v5289, %v5161
        %v5306 = vmul.f32 %v5290, %v5162
        %v5307 = vmul.f32 %v5291, %v5163
        %v5308 = vmul.f32 %v5292, %v5164
        %v5309 = vmul.f32 %v5293, %v5165
        %v5310 = vmul.f32 %v5294, %v5166
        %v5311 = vmul.f32 %v5295, %v5167
        %v5312 = vmul.f32 %v5296, %v5168
        %v5313 = vmul.f32 %v5297, %v5169
        %v5314 = vmul.f32 %v5298, %v5170
        %v5315 = vmul.f32 %v5299, %v5171
        %v5316 = vmul.f32 %v5300, %v5172
        %v5317 = vmul.f32 %v5301, %v5173
        %v5318 = vmul.f32 %v5302, %v5174
        %v5319 = vmul.f32 %v5303, %v5175
        %v5320 = vmul.f32 %v5304, %v5176
        %v5321 = vsub.f32 0.0, %v5113
        %v5322 = vsub.f32 0.0, %v5114
        %v5323 = vsub.f32 0.0, %v5115
        %v5324 = vsub.f32 0.0, %v5116
        %v5325 = vsub.f32 0.0, %v5117
        %v5326 = vsub.f32 0.0, %v5118
        %v5327 = vsub.f32 0.0, %v5119
        %v5328 = vsub.f32 0.0, %v5120
        %v5329 = vsub.f32 0.0, %v5121
        %v5330 = vsub.f32 0.0, %v5122
        %v5331 = vsub.f32 0.0, %v5123
        %v5332 = vsub.f32 0.0, %v5124
        %v5333 = vsub.f32 0.0, %v5125
        %v5334 = vsub.f32 0.0, %v5126
        %v5335 = vsub.f32 0.0, %v5127
        %v5336 = vsub.f32 0.0, %v5128
        %v5337 = vmul.f32 %v5321, %v5113
        %v5338 = vmul.f32 %v5322, %v5114
        %v5339 = vmul.f32 %v5323, %v5115
        %v5340 = vmul.f32 %v5324, %v5116
        %v5341 = vmul.f32 %v5325, %v5117
        %v5342 = vmul.f32 %v5326, %v5118
        %v5343 = vmul.f32 %v5327, %v5119
        %v5344 = vmul.f32 %v5328, %v5120
        %v5345 = vmul.f32 %v5329, %v5121
        %v5346 = vmul.f32 %v5330, %v5122
        %v5347 = vmul.f32 %v5331, %v5123
        %v5348 = vmul.f32 %v5332, %v5124
        %v5349 = vmul.f32 %v5333, %v5125
        %v5350 = vmul.f32 %v5334, %v5126
        %v5351 = vmul.f32 %v5335, %v5127
        %v5352 = vmul.f32 %v5336, %v5128
        %v5353 = vmul.f32 %v5337, 1.442695
        %v5354 = vpow.pop %v5353
        %v5355 = vmul.f32 %v5338, 1.442695
        %v5356 = vpow.pop %v5355
        %v5357 = vmul.f32 %v5339, 1.442695
        %v5358 = vpow.pop %v5357
        %v5359 = vmul.f32 %v5340, 1.442695
        %v5360 = vpow.pop %v5359
        %v5361 = vmul.f32 %v5341, 1.442695
        %v5362 = vpow.pop %v5361
        %v5363 = vmul.f32 %v5342, 1.442695
        %v5364 = vpow.pop %v5363
        %v5365 = vmul.f32 %v5343, 1.442695
        %v5366 = vpow.pop %v5365
        %v5367 = vmul.f32 %v5344, 1.442695
        %v5368 = vpow.pop %v5367
        %v5369 = vmul.f32 %v5345, 1.442695
        %v5370 = vpow.pop %v5369
        %v5371 = vmul.f32 %v5346, 1.442695
        %v5372 = vpow.pop %v5371
        %v5373 = vmul.f32 %v5347, 1.442695
        %v5374 = vpow.pop %v5373
        %v5375 = vmul.f32 %v5348, 1.442695
        %v5376 = vpow.pop %v5375
        %v5377 = vmul.f32 %v5349, 1.442695
        %v5378 = vpow.pop %v5377
        %v5379 = vmul.f32 %v5350, 1.442695
        %v5380 = vpow.pop %v5379
        %v5381 = vmul.f32 %v5351, 1.442695
        %v5382 = vpow.pop %v5381
        %v5383 = vmul.f32 %v5352, 1.442695
        %v5384 = vpow.pop %v5383
        %v5385 = vmul.f32 %v5305, %v5354
        %v5386 = vmul.f32 %v5306, %v5356
        %v5387 = vmul.f32 %v5307, %v5358
        %v5388 = vmul.f32 %v5308, %v5360
        %v5389 = vmul.f32 %v5309, %v5362
        %v5390 = vmul.f32 %v5310, %v5364
        %v5391 = vmul.f32 %v5311, %v5366
        %v5392 = vmul.f32 %v5312, %v5368
        %v5393 = vmul.f32 %v5313, %v5370
        %v5394 = vmul.f32 %v5314, %v5372
        %v5395 = vmul.f32 %v5315, %v5374
        %v5396 = vmul.f32 %v5316, %v5376
        %v5397 = vmul.f32 %v5317, %v5378
        %v5398 = vmul.f32 %v5318, %v5380
        %v5399 = vmul.f32 %v5319, %v5382
        %v5400 = vmul.f32 %v5320, %v5384
        %v5401 = vsub.f32 1.0, %v5385
        %v5402 = vsub.f32 1.0, %v5386
        %v5403 = vsub.f32 1.0, %v5387
        %v5404 = vsub.f32 1.0, %v5388
        %v5405 = vsub.f32 1.0, %v5389
        %v5406 = vsub.f32 1.0, %v5390
        %v5407 = vsub.f32 1.0, %v5391
        %v5408 = vsub.f32 1.0, %v5392
        %v5409 = vsub.f32 1.0, %v5393
        %v5410 = vsub.f32 1.0, %v5394
        %v5411 = vsub.f32 1.0, %v5395
        %v5412 = vsub.f32 1.0, %v5396
        %v5413 = vsub.f32 1.0, %v5397
        %v5414 = vsub.f32 1.0, %v5398
        %v5415 = vsub.f32 1.0, %v5399
        %v5416 = vsub.f32 1.0, %v5400
        %v5417 = vmul.f32 %v5097, %v5401
        %v5418 = vmul.f32 %v5098, %v5402
        %v5419 = vmul.f32 %v5099, %v5403
        %v5420 = vmul.f32 %v5100, %v5404
        %v5421 = vmul.f32 %v5101, %v5405
        %v5422 = vmul.f32 %v5102, %v5406
        %v5423 = vmul.f32 %v5103, %v5407
        %v5424 = vmul.f32 %v5104, %v5408
        %v5425 = vmul.f32 %v5105, %v5409
        %v5426 = vmul.f32 %v5106, %v5410
        %v5427 = vmul.f32 %v5107, %v5411
        %v5428 = vmul.f32 %v5108, %v5412
        %v5429 = vmul.f32 %v5109, %v5413
        %v5430 = vmul.f32 %v5110, %v5414
        %v5431 = vmul.f32 %v5111, %v5415
        %v5432 = vmul.f32 %v5112, %v5416
        %v5433 = vadd.f32 %v5417, 1.0
        %v5434 = vadd.f32 %v5418, 1.0
        %v5435 = vadd.f32 %v5419, 1.0
        %v5436 = vadd.f32 %v5420, 1.0
        %v5437 = vadd.f32 %v5421, 1.0
        %v5438 = vadd.f32 %v5422, 1.0
        %v5439 = vadd.f32 %v5423, 1.0
        %v5440 = vadd.f32 %v5424, 1.0
        %v5441 = vadd.f32 %v5425, 1.0
        %v5442 = vadd.f32 %v5426, 1.0
        %v5443 = vadd.f32 %v5427, 1.0
        %v5444 = vadd.f32 %v5428, 1.0
        %v5445 = vadd.f32 %v5429, 1.0
        %v5446 = vadd.f32 %v5430, 1.0
        %v5447 = vadd.f32 %v5431, 1.0
        %v5448 = vadd.f32 %v5432, 1.0
        %v5449 = vmul.f32 %v5049, %v5433
        %v5450 = vmul.f32 %v5050, %v5434
        %v5451 = vmul.f32 %v5051, %v5435
        %v5452 = vmul.f32 %v5052, %v5436
        %v5453 = vmul.f32 %v5053, %v5437
        %v5454 = vmul.f32 %v5054, %v5438
        %v5455 = vmul.f32 %v5055, %v5439
        %v5456 = vmul.f32 %v5056, %v5440
        %v5457 = vmul.f32 %v5057, %v5441
        %v5458 = vmul.f32 %v5058, %v5442
        %v5459 = vmul.f32 %v5059, %v5443
        %v5460 = vmul.f32 %v5060, %v5444
        %v5461 = vmul.f32 %v5061, %v5445
        %v5462 = vmul.f32 %v5062, %v5446
        %v5463 = vmul.f32 %v5063, %v5447
        %v5464 = vmul.f32 %v5064, %v5448
        %v5465 = vld [vmem:[%s14] sm:$0xff]
        %v5466 = vld [vmem:[%s14 + $0x8] sm:$0xff]
        %v5467 = vld [vmem:[%s14 + $0x10] sm:$0xff]
        %v5468 = vld [vmem:[%s14 + $0x18] sm:$0xff]
        %v5469 = vld [vmem:[%s14 + $0x20] sm:$0xff]
        %v5470 = vld [vmem:[%s14 + $0x28] sm:$0xff]
        %v5471 = vld [vmem:[%s14 + $0x30] sm:$0xff]
        %v5472 = vld [vmem:[%s14 + $0x38] sm:$0xff]
        %v5473 = vld [vmem:[%s14 + $0x40] sm:$0xff]
        %v5474 = vld [vmem:[%s14 + $0x48] sm:$0xff]
        %v5475 = vld [vmem:[%s14 + $0x50] sm:$0xff]
        %v5476 = vld [vmem:[%s14 + $0x58] sm:$0xff]
        %v5477 = vld [vmem:[%s14 + $0x60] sm:$0xff]
        %v5478 = vld [vmem:[%s14 + $0x68] sm:$0xff]
        %v5479 = vld [vmem:[%s14 + $0x70] sm:$0xff]
        %v5480 = vld [vmem:[%s14 + $0x78] sm:$0xff]
        %v5481 = vld [vmem:[%s15] sm:$0x1]
        %v5483 = vlaneseq
        %v5484 = vshrl.u32 %v5483, 7
        %v5485 = vsub.s32 0, %v5484
        %v5486 = vrot.slane %v5481, %v5485
        %5488 = vmatprep.subr.mxu0 0.0
        %5489 = vmatpush1.msra.mxu0 %v5465
        %5490 = vmatprep.subr.mxu0 0.0
        %5491 = vmatpush1.msra.mxu0 %v5466
        %5492 = vmatprep.subr.mxu0 0.0
        %5493 = vmatpush1.msra.mxu0 %v5467
        %5494 = vmatprep.subr.mxu0 0.0
        %5495 = vmatpush1.msra.mxu0 %v5468
        %5496 = vmatprep.subr.mxu0 0.0
        %5497 = vmatpush1.msra.mxu0 %v5469
        %5498 = vmatprep.subr.mxu0 0.0
        %5499 = vmatpush1.msra.mxu0 %v5470
        %5500 = vmatprep.subr.mxu0 0.0
        %5501 = vmatpush1.msra.mxu0 %v5471
        %5502 = vmatprep.subr.mxu0 0.0
        %5503 = vmatpush1.msra.mxu0 %v5472
        %5504 = vmatprep.subr.mxu0 0.0
        %5505 = vmatpush1.msra.mxu0 %v5473
        %5506 = vmatprep.subr.mxu0 0.0
        %5507 = vmatpush1.msra.mxu0 %v5474
        %5508 = vmatprep.subr.mxu0 0.0
        %5509 = vmatpush1.msra.mxu0 %v5475
        %5510 = vmatprep.subr.mxu0 0.0
        %5511 = vmatpush1.msra.mxu0 %v5476
        %5512 = vmatprep.subr.mxu0 0.0
        %5513 = vmatpush1.msra.mxu0 %v5477
        %5514 = vmatprep.subr.mxu0 0.0
        %5515 = vmatpush1.msra.mxu0 %v5478
        %5516 = vmatprep.subr.mxu0 0.0
        %5517 = vmatpush1.msra.mxu0 %v5479
        %5518 = vmatprep.subr.mxu0 0.0
        %5519 = vmatpush1.msra.mxu0 %v5480
        %5520 = vmatprep.subr.mxu0 0.0
        %5521 = vmatpush1.msra.mxu0 0.0
        %5522 = vmatprep.subr.mxu0 0.0
        %5523 = vmatpush1.msra.mxu0 0.0
        %5524 = vmatprep.subr.mxu0 0.0
        %5525 = vmatpush1.msra.mxu0 0.0
        %5526 = vmatprep.subr.mxu0 0.0
        %5527 = vmatpush1.msra.mxu0 0.0
        %5528 = vmatprep.subr.mxu0 0.0
        %5529 = vmatpush1.msra.mxu0 0.0
        %5530 = vmatprep.subr.mxu0 0.0
        %5531 = vmatpush1.msra.mxu0 0.0
        %5532 = vmatprep.subr.mxu0 0.0
        %5533 = vmatpush1.msra.mxu0 0.0
        %5534 = vmatprep.subr.mxu0 0.0
        %5535 = vmatpush1.msra.mxu0 0.0
        %5536 = vmatprep.subr.mxu0 0.0
        %5537 = vmatpush1.msra.mxu0 0.0
        %5538 = vmatprep.subr.mxu0 0.0
        %5539 = vmatpush1.msra.mxu0 0.0
        %5540 = vmatprep.subr.mxu0 0.0
        %5541 = vmatpush1.msra.mxu0 0.0
        %5542 = vmatprep.subr.mxu0 0.0
        %5543 = vmatpush1.msra.mxu0 0.0
        %5544 = vmatprep.subr.mxu0 0.0
        %5545 = vmatpush1.msra.mxu0 0.0
        %5546 = vmatprep.subr.mxu0 0.0
        %5547 = vmatpush1.msra.mxu0 0.0
        %5548 = vmatprep.subr.mxu0 0.0
        %5549 = vmatpush1.msra.mxu0 0.0
        %5550 = vmatprep.subr.mxu0 0.0
        %5551 = vmatpush1.msra.mxu0 0.0
        %5552 = vmatprep.mubr.f32.mxu0 0.0
        %5553 = vmatmul.mubr.f32.gmra.mrb[0].mxu0 %v5449
        %v5554 = vpop.f32.mrb[0].mxu0
        %v5555 = vadd.f32 %v5486, %v5554
        %v5556 = vpop.f32.mrb[0].mxu0
        %5557 = vmatprep.mubr.f32.mxu0 0.0
        %5558 = vmatmul.mubr.f32.gmra.mrb[0].mxu0 %v5450
        %v5559 = vpop.f32.mrb[0].mxu0
        %v5560 = vadd.f32 %v5486, %v5559
        %v5561 = vpop.f32.mrb[0].mxu0
        %5562 = vmatprep.mubr.f32.mxu0 0.0
        %5563 = vmatmul.mubr.f32.gmra.mrb[0].mxu0 %v5451
        %v5564 = vpop.f32.mrb[0].mxu0
        %v5565 = vadd.f32 %v5486, %v5564
        %v5566 = vpop.f32.mrb[0].mxu0
        %5567 = vmatprep.mubr.f32.mxu0 0.0
        %5568 = vmatmul.mubr.f32.gmra.mrb[0].mxu0 %v5452
        %v5569 = vpop.f32.mrb[0].mxu0
        %v5570 = vadd.f32 %v5486, %v5569
        %v5571 = vpop.f32.mrb[0].mxu0
        %5572 = vmatprep.mubr.f32.mxu0 0.0
        %5573 = vmatmul.mubr.f32.gmra.mrb[0].mxu0 %v5453
        %v5574 = vpop.f32.mrb[0].mxu0
        %v5575 = vadd.f32 %v5486, %v5574
        %v5576 = vpop.f32.mrb[0].mxu0
        %5577 = vmatprep.mubr.f32.mxu0 0.0
        %5578 = vmatmul.mubr.f32.gmra.mrb[0].mxu0 %v5454
        %v5579 = vpop.f32.mrb[0].mxu0
        %v5580 = vadd.f32 %v5486, %v5579
        %v5581 = vpop.f32.mrb[0].mxu0
        %5582 = vmatprep.mubr.f32.mxu0 0.0
        %5583 = vmatmul.mubr.f32.gmra.mrb[0].mxu0 %v5455
        %v5584 = vpop.f32.mrb[0].mxu0
        %v5585 = vadd.f32 %v5486, %v5584
        %v5586 = vpop.f32.mrb[0].mxu0
        %5587 = vmatprep.mubr.f32.mxu0 0.0
        %5588 = vmatmul.mubr.f32.gmra.mrb[0].mxu0 %v5456
        %v5589 = vpop.f32.mrb[0].mxu0
        %v5590 = vadd.f32 %v5486, %v5589
        %v5591 = vpop.f32.mrb[0].mxu0
        %5592 = vmatprep.mubr.f32.mxu0 0.0
        %5593 = vmatmul.mubr.f32.gmra.mrb[0].mxu0 %v5457
        %v5594 = vpop.f32.mrb[0].mxu0
        %v5595 = vadd.f32 %v5486, %v5594
        %v5596 = vpop.f32.mrb[0].mxu0
        %5597 = vmatprep.mubr.f32.mxu0 0.0
        %5598 = vmatmul.mubr.f32.gmra.mrb[0].mxu0 %v5458
        %v5599 = vpop.f32.mrb[0].mxu0
        %v5600 = vadd.f32 %v5486, %v5599
        %v5601 = vpop.f32.mrb[0].mxu0
        %5602 = vmatprep.mubr.f32.mxu0 0.0
        %5603 = vmatmul.mubr.f32.gmra.mrb[0].mxu0 %v5459
        %v5604 = vpop.f32.mrb[0].mxu0
        %v5605 = vadd.f32 %v5486, %v5604
        %v5606 = vpop.f32.mrb[0].mxu0
        %5607 = vmatprep.mubr.f32.mxu0 0.0
        %5608 = vmatmul.mubr.f32.gmra.mrb[0].mxu0 %v5460
        %v5609 = vpop.f32.mrb[0].mxu0
        %v5610 = vadd.f32 %v5486, %v5609
        %v5611 = vpop.f32.mrb[0].mxu0
        %5612 = vmatprep.mubr.f32.mxu0 0.0
        %5613 = vmatmul.mubr.f32.gmra.mrb[0].mxu0 %v5461
        %v5614 = vpop.f32.mrb[0].mxu0
        %v5615 = vadd.f32 %v5486, %v5614
        %v5616 = vpop.f32.mrb[0].mxu0
        %5617 = vmatprep.mubr.f32.mxu0 0.0
        %5618 = vmatmul.mubr.f32.gmra.mrb[0].mxu0 %v5462
        %v5619 = vpop.f32.mrb[0].mxu0
        %v5620 = vadd.f32 %v5486, %v5619
        %v5621 = vpop.f32.mrb[0].mxu0
        %5622 = vmatprep.mubr.f32.mxu0 0.0
        %5623 = vmatmul.mubr.f32.gmra.mrb[0].mxu0 %v5463
        %v5624 = vpop.f32.mrb[0].mxu0
        %v5625 = vadd.f32 %v5486, %v5624
        %v5626 = vpop.f32.mrb[0].mxu0
        %5627 = vmatprep.mubr.f32.mxu0 0.0
        %5628 = vmatmul.mubr.f32.gmra.mrb[0].mxu0 %v5464
        %v5629 = vpop.f32.mrb[0].mxu0
        %v5630 = vadd.f32 %v5486, %v5629
        %v5631 = vpop.f32.mrb[0].mxu0
        %5632 = vdwg.mxu0
        %v5633 = vadd.f32 %v3990, %v5555
        %v5634 = vadd.f32 %v3991, %v5560
        %v5635 = vadd.f32 %v3992, %v5565
        %v5636 = vadd.f32 %v3993, %v5570
        %v5637 = vadd.f32 %v3994, %v5575
        %v5638 = vadd.f32 %v3995, %v5580
        %v5639 = vadd.f32 %v3996, %v5585
        %v5640 = vadd.f32 %v3997, %v5590
        %v5641 = vadd.f32 %v3998, %v5595
        %v5642 = vadd.f32 %v3999, %v5600
        %v5643 = vadd.f32 %v4000, %v5605
        %v5644 = vadd.f32 %v4001, %v5610
        %v5645 = vadd.f32 %v4002, %v5615
        %v5646 = vadd.f32 %v4003, %v5620
        %v5647 = vadd.f32 %v4004, %v5625
        %v5648 = vadd.f32 %v4005, %v5630
        %5649 = vst.msk [vmem:[%s612] sm:$0xff] %vm907, %v5633
        %5650 = vst.msk [vmem:[%s612 + $0x8] sm:$0xff] %vm907, %v5634
        %5651 = vst.msk [vmem:[%s612 + $0x10] sm:$0xff] %vm907, %v5635
        %5652 = vst.msk [vmem:[%s612 + $0x18] sm:$0xff] %vm907, %v5636
        %5653 = vst.msk [vmem:[%s612 + $0x20] sm:$0xff] %vm907, %v5637
        %5654 = vst.msk [vmem:[%s612 + $0x28] sm:$0xff] %vm907, %v5638
        %5655 = vst.msk [vmem:[%s612 + $0x30] sm:$0xff] %vm907, %v5639
        %5656 = vst.msk [vmem:[%s612 + $0x38] sm:$0xff] %vm907, %v5640
        %5657 = vst.msk [vmem:[%s612 + $0x40] sm:$0xff] %vm907, %v5641
        %5658 = vst.msk [vmem:[%s612 + $0x48] sm:$0xff] %vm907, %v5642
        %5659 = vst.msk [vmem:[%s612 + $0x50] sm:$0xff] %vm907, %v5643
        %5660 = vst.msk [vmem:[%s612 + $0x58] sm:$0xff] %vm907, %v5644
        %5661 = vst.msk [vmem:[%s612 + $0x60] sm:$0xff] %vm907, %v5645
        %5662 = vst.msk [vmem:[%s612 + $0x68] sm:$0xff] %vm907, %v5646
        %5663 = vst.msk [vmem:[%s612 + $0x70] sm:$0xff] %vm907, %v5647
        %5664 = vst.msk [vmem:[%s612 + $0x78] sm:$0xff] %vm907, %v5648
        %s5665 = smul.u32 16, %s30
        %p5666 = scmp.lt.s32.totalorder %s5665, 31
        %s5667 = scalar_select %p5666, %s5665, 31
        %s5668 = smul.addr %s5667, 8
        %s5669 = scalar_lea.vmem %s16, %s5668
        // Predicated region
        $region89: #{tpu_custom_call.1} parent=83 // pred_check
          %p5670 = pneg %p399
        $region90: #{tpu_custom_call.1} parent=83 // pred_check_branch
          %5672 = sbr.rel (%p5670) target = $region92
        $region91: #{tpu_custom_call.1} parent=83 // pred_region
          %s5673 = smul.u32 16, %s30
        $region92: #{tpu_custom_call.1} parent=83 // pred_fallthru
          _
      $region84: #{tpu_custom_call.1} parent=5 // pred_fallthru
        _
      %p5674 = scmp.le.s32.totalorder 2, %s25
      // Predicated region
      $region93: #{tpu_custom_call.1} parent=5 // pred_check
        %p5675 = pneg %p5674
      $region94: #{tpu_custom_call.1} parent=5 // pred_check_branch
        %5677 = sbr.rel (%p5675) target = $region96
      $region95: #{tpu_custom_call.1} parent=5 // pred_region
        %s5678 = ssub.s32 %s25, 2
        // Predicated region
        $region97: #{tpu_custom_call.1} parent=95 // pred_check
          %p5679 = pneg %p405
        $region98: #{tpu_custom_call.1} parent=95 // pred_check_branch
          %5681 = sbr.rel (%p5679) target = $region100
        $region99: #{tpu_custom_call.1} parent=95 // pred_region
          %s5682 = smul.u32 16, %s31
          %p5683 = scmp.lt.s32.totalorder %s5682, 31
          %s5684 = scalar_select %p5683, %s5682, 31
          %s5685 = smul.addr %s5684, 8
          %s5686 = scalar_lea.vmem %s16, %s5685
        $region100: #{tpu_custom_call.1} parent=95 // pred_fallthru
          _
      $region96: #{tpu_custom_call.1} parent=5 // pred_fallthru
        _
    $region6: #{tpu_custom_call.1} parent=1 // loop_footer
      %s29 = sadd.s32 1, %s25
    $region7: #{tpu_custom_call.1} parent=1 // loop_footer_branch
      %24 = sbr.rel target = $region3
    $region8: #{tpu_custom_call.1} parent=1 // loop_exit
      _
    %5687 = vsyncpa [#allocation3], 1
    %s5688 = scalar_lea.sflag [#allocation3], 1
    %5689 = vsyncpa %s5688, 1

</llo_original>
